<compile_context>
chip_gen: v7x
topology: tpu7x:2x2x1
jax: 0.10.0
libtpu: 0.0.40
codegen_flags: <defaults>
</compile_context>

<pallas_src>
import math

import jax
import jax.numpy as jnp
from jax.experimental import pallas as pl
from jax.experimental.pallas import tpu as pltpu

# ---------------- small synthetic BERT config (stands in for args.model_config) ----
VOCAB = 128
MAX_POS = 64
TYPE_VOCAB = 2
HIDDEN = 32          # dim_model (logical width)
HEADS = 2
HEAD_DIM = HIDDEN // HEADS
FFN = 64
LAYERS = 2
EPS = 1e-12
NUM_LABELS = 2       # self.dense = Linear(dim_model, 2)

# lane-dense padded widths (every tile's last dim is a multiple of 128)
HP = 128             # padded hidden width
FP = 128             # padded FFN width
NP = 128             # padded classifier width (sliced to NUM_LABELS outside)
QKV_W = 3 * HP       # fused QKV width: q | k | v slabs, heads at HEAD_DIM offsets
OUT_ROWS = 8         # sublane-padded rows of the per-batch CLS-logits output slab


# ---------------- fused whole-model kernel --------------------------------------------
def _masked_layernorm(x, g, b, valid, inv_n):
    """LayerNorm over the first HIDDEN lanes of a zero-padded (M, HP) slab.

    Padded lanes of x are exactly zero and padded lanes of g/b are zero, so the
    output keeps zeros in the padded lanes and the statistics are exact."""
    mean = jnp.sum(x, axis=-1, keepdims=True) * inv_n
    xc = (x - mean) * valid
    var = jnp.sum(xc * xc, axis=-1, keepdims=True) * inv_n
    return xc * jax.lax.rsqrt(var + EPS) * g + b


def _bert_kernel(x0_ref, keyb_ref,
                 wqkv_ref, bqkv_ref, wo_ref, bo_ref, ln1g_ref, ln1b_ref,
                 w1_ref, b1_ref, w2_ref, b2_ref, ln2g_ref, ln2b_ref,
                 poolw_ref, poolb_ref, clsw_ref, clsb_ref,
                 out_ref):
    lane = jax.lax.broadcasted_iota(jnp.int32, (1, HP), 1)
    valid = (lane < HIDDEN).astype(jnp.float32)             # (1, HP) lane mask
    inv_h = 1.0 / HIDDEN
    # per-head lane masks, hoisted out of all loops (JAX does not CSE broadcasts)
    head_masks = [((lane >= h * HEAD_DIM) & (lane < (h + 1) * HEAD_DIM))
                  .astype(jnp.float32) for h in range(HEADS)]

    x = x0_ref[0]                     # (S, HP) f32: embedding-LayerNormed, zero-padded
    keyb = keyb_ref[0]                # (1, S) additive key-padding bias (0 / -1e9)

    # Statically unrolled layer loop; all stacked layer weights are VMEM-resident.
    # TODO(synk): for real BERT sizes move layers back onto a pipelined
    # ("arbitrary") grid axis so layer l+1 weights stream while layer l computes.
    for l in range(LAYERS):
        # ---- fused QKV projection: one bf16 MXU pass, bias fused, 1/sqrt(d) pre-folded
        qkv = (jnp.dot(x.astype(jnp.bfloat16), wqkv_ref[l],
                       preferred_element_type=jnp.float32) + bqkv_ref[l])
        q = qkv[:, 0 * HP:1 * HP]                            # (S, HP) f32
        k16 = qkv[:, 1 * HP:2 * HP].astype(jnp.bfloat16)     # (S, HP) bf16
        v16 = qkv[:, 2 * HP:3 * HP].astype(jnp.bfloat16)     # (S, HP) bf16

        # ---- block-diagonal multi-head attention: S x S scores per batch row
        ctx = jnp.zeros_like(x)
        for h in range(HEADS):        # TODO(synk): fori_loop + key-blocked online softmax
            qh = (q * head_masks[h]).astype(jnp.bfloat16)    # lane-mask selects head h
            s = jax.lax.dot_general(qh, k16, (((1,), (1,)), ((), ())),
                                    preferred_element_type=jnp.float32)   # (S, S)
            s = s + keyb
            s = s - jnp.max(s, axis=-1, keepdims=True)
            p = jnp.exp(s)
            p = p * pl.reciprocal(jnp.sum(p, axis=-1, keepdims=True), approx=True)
            ctx = ctx + head_masks[h] * jnp.dot(p.astype(jnp.bfloat16), v16,
                                                preferred_element_type=jnp.float32)
        attn = (jnp.dot(ctx.astype(jnp.bfloat16), wo_ref[l],
                        preferred_element_type=jnp.float32) + bo_ref[l])

        # ---- residual + LayerNorm (fused epilogue)
        x = _masked_layernorm(x + attn, ln1g_ref[l], ln1b_ref[l], valid, inv_h)

        # ---- FFN: matmul + bias + GELU + matmul + bias + residual + LayerNorm
        # TODO(synk): HF BertModel uses exact erf-GELU; tanh approximation used here.
        ffn = (jnp.dot(x.astype(jnp.bfloat16), w1_ref[l],
                       preferred_element_type=jnp.float32) + b1_ref[l])
        ffn = jax.nn.gelu(ffn, approximate=True)
        ffn = (jnp.dot(ffn.astype(jnp.bfloat16), w2_ref[l],
                       preferred_element_type=jnp.float32) + b2_ref[l])
        x = _masked_layernorm(x + ffn, ln2g_ref[l], ln2b_ref[l], valid, inv_h)

    # ---- pooler (tanh) + classifier on the CLS row only
    cls = x[0:1, :]                                          # (1, HP)
    pooled = jnp.tanh(jnp.dot(cls.astype(jnp.bfloat16), poolw_ref[...],
                              preferred_element_type=jnp.float32) + poolb_ref[...])
    logits = (jnp.dot(pooled.astype(jnp.bfloat16), clsw_ref[...],
                      preferred_element_type=jnp.float32) + clsb_ref[...])   # (1, NP)
    out_ref[0] = jnp.broadcast_to(logits, (OUT_ROWS, NP)).astype(out_ref.dtype)


# ---------------- parameter packing (pad to lane-dense, bf16, stack per layer) --------
def _pad(a, shape):
    out = jnp.zeros(shape, jnp.float32)
    return out.at[tuple(slice(0, d) for d in a.shape)].set(a.astype(jnp.float32))


def _pack_params(params):
    scale = 1.0 / math.sqrt(HEAD_DIM)
    wqkv, bqkv, wo, bo = [], [], [], []
    ln1g, ln1b, ln2g, ln2b = [], [], [], []
    w1, b1, w2, b2 = [], [], [], []
    for lyr in params["layers"]:
        wl = jnp.zeros((HP, QKV_W), jnp.float32)
        bl = jnp.zeros((1, QKV_W), jnp.float32)
        # q | k | v slabs of 128 lanes each (heads live at their natural HEAD_DIM
        # offsets inside the first HIDDEN lanes); 1/sqrt(HEAD_DIM) folded into Q.
        for kind, (wn, bn, sc) in enumerate((("wq", "bq", scale),
                                             ("wk", "bk", 1.0),
                                             ("wv", "bv", 1.0))):
            wl = wl.at[:HIDDEN, kind * HP:kind * HP + HIDDEN].set(lyr[wn] * sc)
            bl = bl.at[0, kind * HP:kind * HP + HIDDEN].set(lyr[bn] * sc)
        wqkv.append(wl)
        bqkv.append(bl)
        wo.append(_pad(lyr["wo"], (HP, HP)))
        bo.append(_pad(lyr["bo"].reshape(1, HIDDEN), (1, HP)))
        ln1g.append(_pad(lyr["ln1_g"].reshape(1, HIDDEN), (1, HP)))
        ln1b.append(_pad(lyr["ln1_b"].reshape(1, HIDDEN), (1, HP)))
        w1.append(_pad(lyr["w1"], (HP, FP)))
        b1.append(_pad(lyr["b1"].reshape(1, FFN), (1, FP)))
        w2.append(_pad(lyr["w2"], (FP, HP)))
        b2.append(_pad(lyr["b2"].reshape(1, HIDDEN), (1, HP)))
        ln2g.append(_pad(lyr["ln2_g"].reshape(1, HIDDEN), (1, HP)))
        ln2b.append(_pad(lyr["ln2_b"].reshape(1, HIDDEN), (1, HP)))

    bf = jnp.bfloat16  # matmul weights in bf16; biases / LN params stay f32
    return {
        "wqkv": jnp.stack(wqkv).astype(bf), "bqkv": jnp.stack(bqkv),
        "wo": jnp.stack(wo).astype(bf), "bo": jnp.stack(bo),
        "ln1_g": jnp.stack(ln1g), "ln1_b": jnp.stack(ln1b),
        "w1": jnp.stack(w1).astype(bf), "b1": jnp.stack(b1),
        "w2": jnp.stack(w2).astype(bf), "b2": jnp.stack(b2),
        "ln2_g": jnp.stack(ln2g), "ln2_b": jnp.stack(ln2b),
        "pool_w": _pad(params["pool_w"], (HP, HP)).astype(bf),
        "pool_b": _pad(params["pool_b"].reshape(1, HIDDEN), (1, HP)),
        "cls_w": _pad(params["cls_w"], (HP, NP)).astype(bf),
        "cls_b": _pad(params["cls_b"].reshape(1, NUM_LABELS), (1, NP)),
    }


# ---------------- deterministic parameter init ---------------------------------------
def init_params(key):
    keys = iter(jax.random.split(key, 256))

    def nrm(shape, scale=0.02):
        return jax.random.normal(next(keys), shape, jnp.float32) * scale

    params = {
        "tok_emb": nrm((VOCAB, HIDDEN)),
        "pos_emb": nrm((MAX_POS, HIDDEN)),
        "typ_emb": nrm((TYPE_VOCAB, HIDDEN)),
        "emb_ln_g": jnp.ones((HIDDEN,), jnp.float32),
        "emb_ln_b": jnp.zeros((HIDDEN,), jnp.float32),
        "layers": [],
        "pool_w": nrm((HIDDEN, HIDDEN)),
        "pool_b": jnp.zeros((HIDDEN,), jnp.float32),
        "cls_w": nrm((HIDDEN, NUM_LABELS)),
        "cls_b": jnp.zeros((NUM_LABELS,), jnp.float32),
    }
    for _ in range(LAYERS):
        params["layers"].append({
            "wq": nrm((HIDDEN, HIDDEN)), "bq": jnp.zeros((HIDDEN,), jnp.float32),
            "wk": nrm((HIDDEN, HIDDEN)), "bk": jnp.zeros((HIDDEN,), jnp.float32),
            "wv": nrm((HIDDEN, HIDDEN)), "bv": jnp.zeros((HIDDEN,), jnp.float32),
            "wo": nrm((HIDDEN, HIDDEN)), "bo": jnp.zeros((HIDDEN,), jnp.float32),
            "ln1_g": jnp.ones((HIDDEN,), jnp.float32), "ln1_b": jnp.zeros((HIDDEN,), jnp.float32),
            "w1": nrm((HIDDEN, FFN)), "b1": jnp.zeros((FFN,), jnp.float32),
            "w2": nrm((FFN, HIDDEN)), "b2": jnp.zeros((HIDDEN,), jnp.float32),
            "ln2_g": jnp.ones((HIDDEN,), jnp.float32), "ln2_b": jnp.zeros((HIDDEN,), jnp.float32),
        })
    return params


# ---------------- forward pass (BertModel.forward equivalent) -------------------------
def bert_model_forward(params, input_ids, attention_mask):
    B, S = input_ids.shape
    pk = _pack_params(params)

    # Embedding lookup (gather) + embedding LayerNorm kept in plain JAX glue so the
    # embeddings / LN params are never held resident in kernel VMEM.
    emb = (jnp.take(params["tok_emb"], input_ids, axis=0)
           + params["pos_emb"][None, :S, :]
           + params["typ_emb"][0][None, None, :])            # token_type_ids == 0
    mean = jnp.mean(emb, axis=-1, keepdims=True)
    var = jnp.mean(jnp.square(emb - mean), axis=-1, keepdims=True)
    emb = ((emb - mean) * jax.lax.rsqrt(var + EPS)
           * params["emb_ln_g"] + params["emb_ln_b"])
    x0 = jnp.zeros((B, S, HP), jnp.float32).at[:, :, :HIDDEN].set(
        emb.astype(jnp.float32))

    # Additive key-padding bias per batch row: 0 where attended, -1e9 where masked.
    keyb = jnp.where(attention_mask[:, None, :] > 0, 0.0, -1e9).astype(jnp.float32)

    def batch_spec(shape):
        return pl.BlockSpec(shape, lambda b: (b, 0, 0))

    def whole(shape):
        return pl.BlockSpec(shape, lambda b: (0,) * len(shape))

    grid_spec = pltpu.PrefetchScalarGridSpec(
        num_scalar_prefetch=0,
        grid=(B,),                                   # one batch row per grid step
        in_specs=[
            batch_spec((1, S, HP)),                  # x0 (padded, LayerNormed embeds)
            batch_spec((1, 1, S)),                   # key-padding bias
            whole((LAYERS, HP, QKV_W)),              # fused QKV weight (bf16)
            whole((LAYERS, 1, QKV_W)),               # fused QKV bias
            whole((LAYERS, HP, HP)),                 # attention output weight (bf16)
            whole((LAYERS, 1, HP)),                  # attention output bias
            whole((LAYERS, 1, HP)),                  # LN1 gamma
            whole((LAYERS, 1, HP)),                  # LN1 beta
            whole((LAYERS, HP, FP)),                 # FFN W1 (bf16)
            whole((LAYERS, 1, FP)),                  # FFN b1
            whole((LAYERS, FP, HP)),                 # FFN W2 (bf16)
            whole((LAYERS, 1, HP)),                  # FFN b2
            whole((LAYERS, 1, HP)),                  # LN2 gamma
            whole((LAYERS, 1, HP)),                  # LN2 beta
            whole((HP, HP)),                         # pooler weight (bf16)
            whole((1, HP)),                          # pooler bias
            whole((HP, NP)),                         # classifier weight (bf16)
            whole((1, NP)),                          # classifier bias
        ],
        out_specs=pl.BlockSpec((1, OUT_ROWS, NP), lambda b: (b, 0, 0)),
    )

    logits_full = pl.pallas_call(
        _bert_kernel,
        out_shape=jax.ShapeDtypeStruct((B, OUT_ROWS, NP), jnp.float32),
        grid_spec=grid_spec,
        compiler_params=pltpu.CompilerParams(
            dimension_semantics=("parallel",),        # batch rows -> both v7x TCs
            vmem_limit_bytes=32 * 1024 * 1024),
    )(x0, keyb,
      pk["wqkv"], pk["bqkv"], pk["wo"], pk["bo"], pk["ln1_g"], pk["ln1_b"],
      pk["w1"], pk["b1"], pk["w2"], pk["b2"], pk["ln2_g"], pk["ln2_b"],
      pk["pool_w"], pk["pool_b"], pk["cls_w"], pk["cls_b"])

    # CLS-row logits, valid classifier columns.
    return logits_full[:, 0, :NUM_LABELS]


# TODO(synk): bmt.init_parameters / Bert.from_pretrained checkpoint loading is replaced
# by deterministic random init (no distributed BMTrain semantics in a single kernel).

if __name__ == "__main__":
    B, S = 2, 8
    root = jax.random.PRNGKey(0)
    k_param, k_ids = jax.random.split(root)

    params = init_params(k_param)
    input_ids = jax.random.randint(k_ids, (B, S), 0, VOCAB, dtype=jnp.int32)
    attention_mask = jnp.array(
        [[1, 1, 1, 1, 1, 1, 1, 1],
         [1, 1, 1, 1, 1, 0, 0, 0]], dtype=jnp.int32)

    fwd = jax.jit(bert_model_forward)
    logits = fwd(params, input_ids, attention_mask)
    jax.block_until_ready(logits)
    assert logits.shape == (B, NUM_LABELS)
    assert bool(jnp.all(jnp.isfinite(logits)))
    print("KERNEL_OK")
</pallas_src>

<mosaic_0001>
module attributes {stable_mosaic.version = 11 : i64} {
  func.func @_bert_kernel(%arg0: i32, %arg1: memref<1x8x128xf32, #tpu.memory_space<vmem>>, %arg2: memref<1x1x8xf32, #tpu.memory_space<vmem>>, %arg3: memref<2x128x384xbf16, #tpu.memory_space<vmem>>, %arg4: memref<2x1x384xf32, #tpu.memory_space<vmem>>, %arg5: memref<2x128x128xbf16, #tpu.memory_space<vmem>>, %arg6: memref<2x1x128xf32, #tpu.memory_space<vmem>>, %arg7: memref<2x1x128xf32, #tpu.memory_space<vmem>>, %arg8: memref<2x1x128xf32, #tpu.memory_space<vmem>>, %arg9: memref<2x128x128xbf16, #tpu.memory_space<vmem>>, %arg10: memref<2x1x128xf32, #tpu.memory_space<vmem>>, %arg11: memref<2x128x128xbf16, #tpu.memory_space<vmem>>, %arg12: memref<2x1x128xf32, #tpu.memory_space<vmem>>, %arg13: memref<2x1x128xf32, #tpu.memory_space<vmem>>, %arg14: memref<2x1x128xf32, #tpu.memory_space<vmem>>, %arg15: memref<128x128xbf16, #tpu.memory_space<vmem>>, %arg16: memref<1x128xf32, #tpu.memory_space<vmem>>, %arg17: memref<128x128xbf16, #tpu.memory_space<vmem>>, %arg18: memref<1x128xf32, #tpu.memory_space<vmem>>, %arg19: memref<1x8x128xf32, #tpu.memory_space<vmem>>) attributes {dimension_semantics = [#tpu.dimension_semantics<parallel>], iteration_bounds = array<i64: 2>, scalar_prefetch = 0 : i64, scratch_operands = 0 : i64, tpu.core_type = #tpu.core_type<tc>, window_params = [{transform_indices = @transform_0, window_bounds = array<i64: 1, 8, 128>}, {transform_indices = @transform_1, window_bounds = array<i64: 1, 1, 8>}, {pipeline_mode = #tpu.pipeline_mode<synchronous>, transform_indices = @transform_2, window_bounds = array<i64: 2, 128, 384>}, {pipeline_mode = #tpu.pipeline_mode<synchronous>, transform_indices = @transform_3, window_bounds = array<i64: 2, 1, 384>}, {pipeline_mode = #tpu.pipeline_mode<synchronous>, transform_indices = @transform_4, window_bounds = array<i64: 2, 128, 128>}, {pipeline_mode = #tpu.pipeline_mode<synchronous>, transform_indices = @transform_5, window_bounds = array<i64: 2, 1, 128>}, {pipeline_mode = #tpu.pipeline_mode<synchronous>, transform_indices = @transform_6, window_bounds = array<i64: 2, 1, 128>}, {pipeline_mode = #tpu.pipeline_mode<synchronous>, transform_indices = @transform_7, window_bounds = array<i64: 2, 1, 128>}, {pipeline_mode = #tpu.pipeline_mode<synchronous>, transform_indices = @transform_8, window_bounds = array<i64: 2, 128, 128>}, {pipeline_mode = #tpu.pipeline_mode<synchronous>, transform_indices = @transform_9, window_bounds = array<i64: 2, 1, 128>}, {pipeline_mode = #tpu.pipeline_mode<synchronous>, transform_indices = @transform_10, window_bounds = array<i64: 2, 128, 128>}, {pipeline_mode = #tpu.pipeline_mode<synchronous>, transform_indices = @transform_11, window_bounds = array<i64: 2, 1, 128>}, {pipeline_mode = #tpu.pipeline_mode<synchronous>, transform_indices = @transform_12, window_bounds = array<i64: 2, 1, 128>}, {pipeline_mode = #tpu.pipeline_mode<synchronous>, transform_indices = @transform_13, window_bounds = array<i64: 2, 1, 128>}, {pipeline_mode = #tpu.pipeline_mode<synchronous>, transform_indices = @transform_14, window_bounds = array<i64: 128, 128>}, {pipeline_mode = #tpu.pipeline_mode<synchronous>, transform_indices = @transform_15, window_bounds = array<i64: 1, 128>}, {pipeline_mode = #tpu.pipeline_mode<synchronous>, transform_indices = @transform_16, window_bounds = array<i64: 128, 128>}, {pipeline_mode = #tpu.pipeline_mode<synchronous>, transform_indices = @transform_17, window_bounds = array<i64: 1, 128>}, {transform_indices = @transform_18, window_bounds = array<i64: 1, 8, 128>}]} {
    %0 = tpu.iota {dimensions = array<i32: 1>} : vector<1x128xi32>
    %c32_i32 = arith.constant 32 : i32
    %1 = vector.broadcast %c32_i32 : i32 to vector<1x128xi32>
    %2 = arith.cmpi slt, %0, %1 : vector<1x128xi32>
    %3 = arith.extui %2 : vector<1x128xi1> to vector<1x128xi32>
    %4 = arith.sitofp %3 : vector<1x128xi32> to vector<1x128xf32>
    %c0_i32 = arith.constant 0 : i32
    %5 = vector.broadcast %c0_i32 : i32 to vector<1x128xi32>
    %6 = arith.cmpi sge, %0, %5 : vector<1x128xi32>
    %c16_i32 = arith.constant 16 : i32
    %7 = vector.broadcast %c16_i32 : i32 to vector<1x128xi32>
    %8 = arith.cmpi slt, %0, %7 : vector<1x128xi32>
    %9 = arith.andi %6, %8 : vector<1x128xi1>
    %10 = arith.extui %9 : vector<1x128xi1> to vector<1x128xi32>
    %11 = arith.sitofp %10 : vector<1x128xi32> to vector<1x128xf32>
    %c16_i32_0 = arith.constant 16 : i32
    %12 = vector.broadcast %c16_i32_0 : i32 to vector<1x128xi32>
    %13 = arith.cmpi sge, %0, %12 : vector<1x128xi32>
    %c32_i32_1 = arith.constant 32 : i32
    %14 = vector.broadcast %c32_i32_1 : i32 to vector<1x128xi32>
    %15 = arith.cmpi slt, %0, %14 : vector<1x128xi32>
    %16 = arith.andi %13, %15 : vector<1x128xi1>
    %17 = arith.extui %16 : vector<1x128xi1> to vector<1x128xi32>
    %18 = arith.sitofp %17 : vector<1x128xi32> to vector<1x128xf32>
    %c0 = arith.constant 0 : index
    %c0_2 = arith.constant 0 : index
    %c0_3 = arith.constant 0 : index
    %19 = vector.load %arg1[%c0, %c0_2, %c0_3] : memref<1x8x128xf32, #tpu.memory_space<vmem>>, vector<1x8x128xf32>
    %20 = vector.shape_cast %19 : vector<1x8x128xf32> to vector<8x128xf32>
    %c0_4 = arith.constant 0 : index
    %c0_5 = arith.constant 0 : index
    %c0_6 = arith.constant 0 : index
    %21 = vector.load %arg2[%c0_4, %c0_5, %c0_6] : memref<1x1x8xf32, #tpu.memory_space<vmem>>, vector<1x1x8xf32>
    %22 = vector.shape_cast %21 : vector<1x1x8xf32> to vector<1x8xf32>
    %23 = arith.truncf %20 : vector<8x128xf32> to vector<8x128xbf16>
    %c0_7 = arith.constant 0 : index
    %c0_8 = arith.constant 0 : index
    %c0_9 = arith.constant 0 : index
    %24 = vector.load %arg3[%c0_7, %c0_8, %c0_9] : memref<2x128x384xbf16, #tpu.memory_space<vmem>>, vector<1x128x384xbf16>
    %25 = vector.shape_cast %24 : vector<1x128x384xbf16> to vector<128x384xbf16>
    %cst = arith.constant dense<0.000000e+00> : vector<8x384xf32>
    %26 = tpu.matmul %23, %25, %cst {dimension_numbers = #tpu.dot_dimension_numbers<[1], [0], [0], [1], [0, 0, 1, 1], [], []>} : vector<8x128xbf16>, vector<128x384xbf16>, vector<8x384xf32> -> vector<8x384xf32>
    %c0_10 = arith.constant 0 : index
    %c0_11 = arith.constant 0 : index
    %c0_12 = arith.constant 0 : index
    %27 = vector.load %arg4[%c0_10, %c0_11, %c0_12] : memref<2x1x384xf32, #tpu.memory_space<vmem>>, vector<1x1x384xf32>
    %28 = vector.shape_cast %27 : vector<1x1x384xf32> to vector<1x384xf32>
    %29 = vector.broadcast %28 : vector<1x384xf32> to vector<8x384xf32>
    %30 = arith.addf %26, %29 : vector<8x384xf32>
    %31 = vector.extract_strided_slice %30 {offsets = [0, 0], sizes = [8, 128], strides = [1, 1]} : vector<8x384xf32> to vector<8x128xf32>
    %32 = vector.extract_strided_slice %30 {offsets = [0, 128], sizes = [8, 128], strides = [1, 1]} : vector<8x384xf32> to vector<8x128xf32>
    %33 = arith.truncf %32 : vector<8x128xf32> to vector<8x128xbf16>
    %34 = vector.extract_strided_slice %30 {offsets = [0, 256], sizes = [8, 128], strides = [1, 1]} : vector<8x384xf32> to vector<8x128xf32>
    %35 = arith.truncf %34 : vector<8x128xf32> to vector<8x128xbf16>
    %cst_13 = arith.constant 0.000000e+00 : f32
    %36 = vector.broadcast %cst_13 : f32 to vector<8x128xf32>
    %37 = vector.broadcast %11 : vector<1x128xf32> to vector<8x128xf32>
    %38 = arith.mulf %31, %37 : vector<8x128xf32>
    %39 = arith.truncf %38 : vector<8x128xf32> to vector<8x128xbf16>
    %cst_14 = arith.constant dense<0.000000e+00> : vector<8x8xf32>
    %40 = tpu.matmul %39, %33, %cst_14 {dimension_numbers = #tpu.dot_dimension_numbers<[1], [1], [0], [0], [0, 0, 1, 0], [], []>} : vector<8x128xbf16>, vector<8x128xbf16>, vector<8x8xf32> -> vector<8x8xf32>
    %41 = vector.broadcast %22 : vector<1x8xf32> to vector<8x8xf32>
    %42 = arith.addf %40, %41 : vector<8x8xf32>
    %cst_15 = arith.constant dense<0xFF800000> : vector<8xf32>
    %43 = vector.multi_reduction <maximumf>, %42, %cst_15 [1] : vector<8x8xf32> to vector<8xf32>
    %44 = vector.shape_cast %43 : vector<8xf32> to vector<8x1xf32>
    %45 = vector.broadcast %44 : vector<8x1xf32> to vector<8x8xf32>
    %46 = arith.subf %42, %45 : vector<8x8xf32>
    %47 = math.exp %46 : vector<8x8xf32>
    %cst_16 = arith.constant dense<0.000000e+00> : vector<8xf32>
    %48 = vector.multi_reduction <add>, %47, %cst_16 [1] : vector<8x8xf32> to vector<8xf32>
    %49 = vector.shape_cast %48 : vector<8xf32> to vector<8x1xf32>
    %50 = tpu.reciprocal %49 {approx = true} : vector<8x1xf32> -> vector<8x1xf32>
    %51 = vector.broadcast %50 : vector<8x1xf32> to vector<8x8xf32>
    %52 = arith.mulf %47, %51 : vector<8x8xf32>
    %53 = arith.truncf %52 : vector<8x8xf32> to vector<8x8xbf16>
    %cst_17 = arith.constant dense<0.000000e+00> : vector<8x128xf32>
    %54 = tpu.matmul %53, %35, %cst_17 {dimension_numbers = #tpu.dot_dimension_numbers<[1], [0], [0], [1], [0, 0, 1, 1], [], []>} : vector<8x8xbf16>, vector<8x128xbf16>, vector<8x128xf32> -> vector<8x128xf32>
    %55 = vector.broadcast %11 : vector<1x128xf32> to vector<8x128xf32>
    %56 = arith.mulf %55, %54 : vector<8x128xf32>
    %57 = arith.addf %36, %56 : vector<8x128xf32>
    %58 = vector.broadcast %18 : vector<1x128xf32> to vector<8x128xf32>
    %59 = arith.mulf %31, %58 : vector<8x128xf32>
    %60 = arith.truncf %59 : vector<8x128xf32> to vector<8x128xbf16>
    %cst_18 = arith.constant dense<0.000000e+00> : vector<8x8xf32>
    %61 = tpu.matmul %60, %33, %cst_18 {dimension_numbers = #tpu.dot_dimension_numbers<[1], [1], [0], [0], [0, 0, 1, 0], [], []>} : vector<8x128xbf16>, vector<8x128xbf16>, vector<8x8xf32> -> vector<8x8xf32>
    %62 = vector.broadcast %22 : vector<1x8xf32> to vector<8x8xf32>
    %63 = arith.addf %61, %62 : vector<8x8xf32>
    %cst_19 = arith.constant dense<0xFF800000> : vector<8xf32>
    %64 = vector.multi_reduction <maximumf>, %63, %cst_19 [1] : vector<8x8xf32> to vector<8xf32>
    %65 = vector.shape_cast %64 : vector<8xf32> to vector<8x1xf32>
    %66 = vector.broadcast %65 : vector<8x1xf32> to vector<8x8xf32>
    %67 = arith.subf %63, %66 : vector<8x8xf32>
    %68 = math.exp %67 : vector<8x8xf32>
    %cst_20 = arith.constant dense<0.000000e+00> : vector<8xf32>
    %69 = vector.multi_reduction <add>, %68, %cst_20 [1] : vector<8x8xf32> to vector<8xf32>
    %70 = vector.shape_cast %69 : vector<8xf32> to vector<8x1xf32>
    %71 = tpu.reciprocal %70 {approx = true} : vector<8x1xf32> -> vector<8x1xf32>
    %72 = vector.broadcast %71 : vector<8x1xf32> to vector<8x8xf32>
    %73 = arith.mulf %68, %72 : vector<8x8xf32>
    %74 = arith.truncf %73 : vector<8x8xf32> to vector<8x8xbf16>
    %cst_21 = arith.constant dense<0.000000e+00> : vector<8x128xf32>
    %75 = tpu.matmul %74, %35, %cst_21 {dimension_numbers = #tpu.dot_dimension_numbers<[1], [0], [0], [1], [0, 0, 1, 1], [], []>} : vector<8x8xbf16>, vector<8x128xbf16>, vector<8x128xf32> -> vector<8x128xf32>
    %76 = vector.broadcast %18 : vector<1x128xf32> to vector<8x128xf32>
    %77 = arith.mulf %76, %75 : vector<8x128xf32>
    %78 = arith.addf %57, %77 : vector<8x128xf32>
    %79 = arith.truncf %78 : vector<8x128xf32> to vector<8x128xbf16>
    %c0_22 = arith.constant 0 : index
    %c0_23 = arith.constant 0 : index
    %c0_24 = arith.constant 0 : index
    %80 = vector.load %arg5[%c0_22, %c0_23, %c0_24] : memref<2x128x128xbf16, #tpu.memory_space<vmem>>, vector<1x128x128xbf16>
    %81 = vector.shape_cast %80 : vector<1x128x128xbf16> to vector<128x128xbf16>
    %cst_25 = arith.constant dense<0.000000e+00> : vector<8x128xf32>
    %82 = tpu.matmul %79, %81, %cst_25 {dimension_numbers = #tpu.dot_dimension_numbers<[1], [0], [0], [1], [0, 0, 1, 1], [], []>} : vector<8x128xbf16>, vector<128x128xbf16>, vector<8x128xf32> -> vector<8x128xf32>
    %c0_26 = arith.constant 0 : index
    %c0_27 = arith.constant 0 : index
    %c0_28 = arith.constant 0 : index
    %83 = vector.load %arg6[%c0_26, %c0_27, %c0_28] : memref<2x1x128xf32, #tpu.memory_space<vmem>>, vector<1x1x128xf32>
    %84 = vector.shape_cast %83 : vector<1x1x128xf32> to vector<1x128xf32>
    %85 = vector.broadcast %84 : vector<1x128xf32> to vector<8x128xf32>
    %86 = arith.addf %82, %85 : vector<8x128xf32>
    %87 = arith.addf %20, %86 : vector<8x128xf32>
    %c0_29 = arith.constant 0 : index
    %c0_30 = arith.constant 0 : index
    %c0_31 = arith.constant 0 : index
    %88 = vector.load %arg7[%c0_29, %c0_30, %c0_31] : memref<2x1x128xf32, #tpu.memory_space<vmem>>, vector<1x1x128xf32>
    %89 = vector.shape_cast %88 : vector<1x1x128xf32> to vector<1x128xf32>
    %c0_32 = arith.constant 0 : index
    %c0_33 = arith.constant 0 : index
    %c0_34 = arith.constant 0 : index
    %90 = vector.load %arg8[%c0_32, %c0_33, %c0_34] : memref<2x1x128xf32, #tpu.memory_space<vmem>>, vector<1x1x128xf32>
    %91 = vector.shape_cast %90 : vector<1x1x128xf32> to vector<1x128xf32>
    %cst_35 = arith.constant dense<0.000000e+00> : vector<8xf32>
    %92 = vector.multi_reduction <add>, %87, %cst_35 [1] : vector<8x128xf32> to vector<8xf32>
    %93 = vector.shape_cast %92 : vector<8xf32> to vector<8x1xf32>
    %cst_36 = arith.constant 3.125000e-02 : f32
    %94 = vector.broadcast %cst_36 : f32 to vector<8x1xf32>
    %95 = arith.mulf %93, %94 : vector<8x1xf32>
    %96 = vector.broadcast %95 : vector<8x1xf32> to vector<8x128xf32>
    %97 = arith.subf %87, %96 : vector<8x128xf32>
    %98 = vector.broadcast %4 : vector<1x128xf32> to vector<8x128xf32>
    %99 = arith.mulf %97, %98 : vector<8x128xf32>
    %100 = arith.mulf %99, %99 : vector<8x128xf32>
    %cst_37 = arith.constant dense<0.000000e+00> : vector<8xf32>
    %101 = vector.multi_reduction <add>, %100, %cst_37 [1] : vector<8x128xf32> to vector<8xf32>
    %102 = vector.shape_cast %101 : vector<8xf32> to vector<8x1xf32>
    %cst_38 = arith.constant 3.125000e-02 : f32
    %103 = vector.broadcast %cst_38 : f32 to vector<8x1xf32>
    %104 = arith.mulf %102, %103 : vector<8x1xf32>
    %cst_39 = arith.constant 9.99999996E-13 : f32
    %105 = vector.broadcast %cst_39 : f32 to vector<8x1xf32>
    %106 = arith.addf %104, %105 : vector<8x1xf32>
    %107 = math.rsqrt %106 : vector<8x1xf32>
    %108 = vector.broadcast %107 : vector<8x1xf32> to vector<8x128xf32>
    %109 = arith.mulf %99, %108 : vector<8x128xf32>
    %110 = vector.broadcast %89 : vector<1x128xf32> to vector<8x128xf32>
    %111 = arith.mulf %109, %110 : vector<8x128xf32>
    %112 = vector.broadcast %91 : vector<1x128xf32> to vector<8x128xf32>
    %113 = arith.addf %111, %112 : vector<8x128xf32>
    %114 = arith.truncf %113 : vector<8x128xf32> to vector<8x128xbf16>
    %c0_40 = arith.constant 0 : index
    %c0_41 = arith.constant 0 : index
    %c0_42 = arith.constant 0 : index
    %115 = vector.load %arg9[%c0_40, %c0_41, %c0_42] : memref<2x128x128xbf16, #tpu.memory_space<vmem>>, vector<1x128x128xbf16>
    %116 = vector.shape_cast %115 : vector<1x128x128xbf16> to vector<128x128xbf16>
    %cst_43 = arith.constant dense<0.000000e+00> : vector<8x128xf32>
    %117 = tpu.matmul %114, %116, %cst_43 {dimension_numbers = #tpu.dot_dimension_numbers<[1], [0], [0], [1], [0, 0, 1, 1], [], []>} : vector<8x128xbf16>, vector<128x128xbf16>, vector<8x128xf32> -> vector<8x128xf32>
    %c0_44 = arith.constant 0 : index
    %c0_45 = arith.constant 0 : index
    %c0_46 = arith.constant 0 : index
    %118 = vector.load %arg10[%c0_44, %c0_45, %c0_46] : memref<2x1x128xf32, #tpu.memory_space<vmem>>, vector<1x1x128xf32>
    %119 = vector.shape_cast %118 : vector<1x1x128xf32> to vector<1x128xf32>
    %120 = vector.broadcast %119 : vector<1x128xf32> to vector<8x128xf32>
    %121 = arith.addf %117, %120 : vector<8x128xf32>
    %122 = arith.mulf %121, %121 : vector<8x128xf32>
    %123 = arith.mulf %121, %122 : vector<8x128xf32>
    %cst_47 = arith.constant 4.471500e-02 : f32
    %124 = vector.broadcast %cst_47 : f32 to vector<8x128xf32>
    %125 = arith.mulf %124, %123 : vector<8x128xf32>
    %126 = arith.addf %121, %125 : vector<8x128xf32>
    %cst_48 = arith.constant 0.797884583 : f32
    %127 = vector.broadcast %cst_48 : f32 to vector<8x128xf32>
    %128 = arith.mulf %127, %126 : vector<8x128xf32>
    %129 = math.tanh %128 : vector<8x128xf32>
    %cst_49 = arith.constant 1.000000e+00 : f32
    %130 = vector.broadcast %cst_49 : f32 to vector<8x128xf32>
    %131 = arith.addf %130, %129 : vector<8x128xf32>
    %cst_50 = arith.constant 5.000000e-01 : f32
    %132 = vector.broadcast %cst_50 : f32 to vector<8x128xf32>
    %133 = arith.mulf %132, %131 : vector<8x128xf32>
    %134 = arith.mulf %121, %133 : vector<8x128xf32>
    %135 = arith.truncf %134 : vector<8x128xf32> to vector<8x128xbf16>
    %c0_51 = arith.constant 0 : index
    %c0_52 = arith.constant 0 : index
    %c0_53 = arith.constant 0 : index
    %136 = vector.load %arg11[%c0_51, %c0_52, %c0_53] : memref<2x128x128xbf16, #tpu.memory_space<vmem>>, vector<1x128x128xbf16>
    %137 = vector.shape_cast %136 : vector<1x128x128xbf16> to vector<128x128xbf16>
    %cst_54 = arith.constant dense<0.000000e+00> : vector<8x128xf32>
    %138 = tpu.matmul %135, %137, %cst_54 {dimension_numbers = #tpu.dot_dimension_numbers<[1], [0], [0], [1], [0, 0, 1, 1], [], []>} : vector<8x128xbf16>, vector<128x128xbf16>, vector<8x128xf32> -> vector<8x128xf32>
    %c0_55 = arith.constant 0 : index
    %c0_56 = arith.constant 0 : index
    %c0_57 = arith.constant 0 : index
    %139 = vector.load %arg12[%c0_55, %c0_56, %c0_57] : memref<2x1x128xf32, #tpu.memory_space<vmem>>, vector<1x1x128xf32>
    %140 = vector.shape_cast %139 : vector<1x1x128xf32> to vector<1x128xf32>
    %141 = vector.broadcast %140 : vector<1x128xf32> to vector<8x128xf32>
    %142 = arith.addf %138, %141 : vector<8x128xf32>
    %143 = arith.addf %113, %142 : vector<8x128xf32>
    %c0_58 = arith.constant 0 : index
    %c0_59 = arith.constant 0 : index
    %c0_60 = arith.constant 0 : index
    %144 = vector.load %arg13[%c0_58, %c0_59, %c0_60] : memref<2x1x128xf32, #tpu.memory_space<vmem>>, vector<1x1x128xf32>
    %145 = vector.shape_cast %144 : vector<1x1x128xf32> to vector<1x128xf32>
    %c0_61 = arith.constant 0 : index
    %c0_62 = arith.constant 0 : index
    %c0_63 = arith.constant 0 : index
    %146 = vector.load %arg14[%c0_61, %c0_62, %c0_63] : memref<2x1x128xf32, #tpu.memory_space<vmem>>, vector<1x1x128xf32>
    %147 = vector.shape_cast %146 : vector<1x1x128xf32> to vector<1x128xf32>
    %cst_64 = arith.constant dense<0.000000e+00> : vector<8xf32>
    %148 = vector.multi_reduction <add>, %143, %cst_64 [1] : vector<8x128xf32> to vector<8xf32>
    %149 = vector.shape_cast %148 : vector<8xf32> to vector<8x1xf32>
    %cst_65 = arith.constant 3.125000e-02 : f32
    %150 = vector.broadcast %cst_65 : f32 to vector<8x1xf32>
    %151 = arith.mulf %149, %150 : vector<8x1xf32>
    %152 = vector.broadcast %151 : vector<8x1xf32> to vector<8x128xf32>
    %153 = arith.subf %143, %152 : vector<8x128xf32>
    %154 = vector.broadcast %4 : vector<1x128xf32> to vector<8x128xf32>
    %155 = arith.mulf %153, %154 : vector<8x128xf32>
    %156 = arith.mulf %155, %155 : vector<8x128xf32>
    %cst_66 = arith.constant dense<0.000000e+00> : vector<8xf32>
    %157 = vector.multi_reduction <add>, %156, %cst_66 [1] : vector<8x128xf32> to vector<8xf32>
    %158 = vector.shape_cast %157 : vector<8xf32> to vector<8x1xf32>
    %cst_67 = arith.constant 3.125000e-02 : f32
    %159 = vector.broadcast %cst_67 : f32 to vector<8x1xf32>
    %160 = arith.mulf %158, %159 : vector<8x1xf32>
    %cst_68 = arith.constant 9.99999996E-13 : f32
    %161 = vector.broadcast %cst_68 : f32 to vector<8x1xf32>
    %162 = arith.addf %160, %161 : vector<8x1xf32>
    %163 = math.rsqrt %162 : vector<8x1xf32>
    %164 = vector.broadcast %163 : vector<8x1xf32> to vector<8x128xf32>
    %165 = arith.mulf %155, %164 : vector<8x128xf32>
    %166 = vector.broadcast %145 : vector<1x128xf32> to vector<8x128xf32>
    %167 = arith.mulf %165, %166 : vector<8x128xf32>
    %168 = vector.broadcast %147 : vector<1x128xf32> to vector<8x128xf32>
    %169 = arith.addf %167, %168 : vector<8x128xf32>
    %170 = arith.truncf %169 : vector<8x128xf32> to vector<8x128xbf16>
    %c1 = arith.constant 1 : index
    %c0_69 = arith.constant 0 : index
    %c0_70 = arith.constant 0 : index
    %171 = vector.load %arg3[%c1, %c0_69, %c0_70] : memref<2x128x384xbf16, #tpu.memory_space<vmem>>, vector<1x128x384xbf16>
    %172 = vector.shape_cast %171 : vector<1x128x384xbf16> to vector<128x384xbf16>
    %cst_71 = arith.constant dense<0.000000e+00> : vector<8x384xf32>
    %173 = tpu.matmul %170, %172, %cst_71 {dimension_numbers = #tpu.dot_dimension_numbers<[1], [0], [0], [1], [0, 0, 1, 1], [], []>} : vector<8x128xbf16>, vector<128x384xbf16>, vector<8x384xf32> -> vector<8x384xf32>
    %c1_72 = arith.constant 1 : index
    %c0_73 = arith.constant 0 : index
    %c0_74 = arith.constant 0 : index
    %174 = vector.load %arg4[%c1_72, %c0_73, %c0_74] : memref<2x1x384xf32, #tpu.memory_space<vmem>>, vector<1x1x384xf32>
    %175 = vector.shape_cast %174 : vector<1x1x384xf32> to vector<1x384xf32>
    %176 = vector.broadcast %175 : vector<1x384xf32> to vector<8x384xf32>
    %177 = arith.addf %173, %176 : vector<8x384xf32>
    %178 = vector.extract_strided_slice %177 {offsets = [0, 0], sizes = [8, 128], strides = [1, 1]} : vector<8x384xf32> to vector<8x128xf32>
    %179 = vector.extract_strided_slice %177 {offsets = [0, 128], sizes = [8, 128], strides = [1, 1]} : vector<8x384xf32> to vector<8x128xf32>
    %180 = arith.truncf %179 : vector<8x128xf32> to vector<8x128xbf16>
    %181 = vector.extract_strided_slice %177 {offsets = [0, 256], sizes = [8, 128], strides = [1, 1]} : vector<8x384xf32> to vector<8x128xf32>
    %182 = arith.truncf %181 : vector<8x128xf32> to vector<8x128xbf16>
    %cst_75 = arith.constant 0.000000e+00 : f32
    %183 = vector.broadcast %cst_75 : f32 to vector<8x128xf32>
    %184 = vector.broadcast %11 : vector<1x128xf32> to vector<8x128xf32>
    %185 = arith.mulf %178, %184 : vector<8x128xf32>
    %186 = arith.truncf %185 : vector<8x128xf32> to vector<8x128xbf16>
    %cst_76 = arith.constant dense<0.000000e+00> : vector<8x8xf32>
    %187 = tpu.matmul %186, %180, %cst_76 {dimension_numbers = #tpu.dot_dimension_numbers<[1], [1], [0], [0], [0, 0, 1, 0], [], []>} : vector<8x128xbf16>, vector<8x128xbf16>, vector<8x8xf32> -> vector<8x8xf32>
    %188 = vector.broadcast %22 : vector<1x8xf32> to vector<8x8xf32>
    %189 = arith.addf %187, %188 : vector<8x8xf32>
    %cst_77 = arith.constant dense<0xFF800000> : vector<8xf32>
    %190 = vector.multi_reduction <maximumf>, %189, %cst_77 [1] : vector<8x8xf32> to vector<8xf32>
    %191 = vector.shape_cast %190 : vector<8xf32> to vector<8x1xf32>
    %192 = vector.broadcast %191 : vector<8x1xf32> to vector<8x8xf32>
    %193 = arith.subf %189, %192 : vector<8x8xf32>
    %194 = math.exp %193 : vector<8x8xf32>
    %cst_78 = arith.constant dense<0.000000e+00> : vector<8xf32>
    %195 = vector.multi_reduction <add>, %194, %cst_78 [1] : vector<8x8xf32> to vector<8xf32>
    %196 = vector.shape_cast %195 : vector<8xf32> to vector<8x1xf32>
    %197 = tpu.reciprocal %196 {approx = true} : vector<8x1xf32> -> vector<8x1xf32>
    %198 = vector.broadcast %197 : vector<8x1xf32> to vector<8x8xf32>
    %199 = arith.mulf %194, %198 : vector<8x8xf32>
    %200 = arith.truncf %199 : vector<8x8xf32> to vector<8x8xbf16>
    %cst_79 = arith.constant dense<0.000000e+00> : vector<8x128xf32>
    %201 = tpu.matmul %200, %182, %cst_79 {dimension_numbers = #tpu.dot_dimension_numbers<[1], [0], [0], [1], [0, 0, 1, 1], [], []>} : vector<8x8xbf16>, vector<8x128xbf16>, vector<8x128xf32> -> vector<8x128xf32>
    %202 = vector.broadcast %11 : vector<1x128xf32> to vector<8x128xf32>
    %203 = arith.mulf %202, %201 : vector<8x128xf32>
    %204 = arith.addf %183, %203 : vector<8x128xf32>
    %205 = vector.broadcast %18 : vector<1x128xf32> to vector<8x128xf32>
    %206 = arith.mulf %178, %205 : vector<8x128xf32>
    %207 = arith.truncf %206 : vector<8x128xf32> to vector<8x128xbf16>
    %cst_80 = arith.constant dense<0.000000e+00> : vector<8x8xf32>
    %208 = tpu.matmul %207, %180, %cst_80 {dimension_numbers = #tpu.dot_dimension_numbers<[1], [1], [0], [0], [0, 0, 1, 0], [], []>} : vector<8x128xbf16>, vector<8x128xbf16>, vector<8x8xf32> -> vector<8x8xf32>
    %209 = vector.broadcast %22 : vector<1x8xf32> to vector<8x8xf32>
    %210 = arith.addf %208, %209 : vector<8x8xf32>
    %cst_81 = arith.constant dense<0xFF800000> : vector<8xf32>
    %211 = vector.multi_reduction <maximumf>, %210, %cst_81 [1] : vector<8x8xf32> to vector<8xf32>
    %212 = vector.shape_cast %211 : vector<8xf32> to vector<8x1xf32>
    %213 = vector.broadcast %212 : vector<8x1xf32> to vector<8x8xf32>
    %214 = arith.subf %210, %213 : vector<8x8xf32>
    %215 = math.exp %214 : vector<8x8xf32>
    %cst_82 = arith.constant dense<0.000000e+00> : vector<8xf32>
    %216 = vector.multi_reduction <add>, %215, %cst_82 [1] : vector<8x8xf32> to vector<8xf32>
    %217 = vector.shape_cast %216 : vector<8xf32> to vector<8x1xf32>
    %218 = tpu.reciprocal %217 {approx = true} : vector<8x1xf32> -> vector<8x1xf32>
    %219 = vector.broadcast %218 : vector<8x1xf32> to vector<8x8xf32>
    %220 = arith.mulf %215, %219 : vector<8x8xf32>
    %221 = arith.truncf %220 : vector<8x8xf32> to vector<8x8xbf16>
    %cst_83 = arith.constant dense<0.000000e+00> : vector<8x128xf32>
    %222 = tpu.matmul %221, %182, %cst_83 {dimension_numbers = #tpu.dot_dimension_numbers<[1], [0], [0], [1], [0, 0, 1, 1], [], []>} : vector<8x8xbf16>, vector<8x128xbf16>, vector<8x128xf32> -> vector<8x128xf32>
    %223 = vector.broadcast %18 : vector<1x128xf32> to vector<8x128xf32>
    %224 = arith.mulf %223, %222 : vector<8x128xf32>
    %225 = arith.addf %204, %224 : vector<8x128xf32>
    %226 = arith.truncf %225 : vector<8x128xf32> to vector<8x128xbf16>
    %c1_84 = arith.constant 1 : index
    %c0_85 = arith.constant 0 : index
    %c0_86 = arith.constant 0 : index
    %227 = vector.load %arg5[%c1_84, %c0_85, %c0_86] : memref<2x128x128xbf16, #tpu.memory_space<vmem>>, vector<1x128x128xbf16>
    %228 = vector.shape_cast %227 : vector<1x128x128xbf16> to vector<128x128xbf16>
    %cst_87 = arith.constant dense<0.000000e+00> : vector<8x128xf32>
    %229 = tpu.matmul %226, %228, %cst_87 {dimension_numbers = #tpu.dot_dimension_numbers<[1], [0], [0], [1], [0, 0, 1, 1], [], []>} : vector<8x128xbf16>, vector<128x128xbf16>, vector<8x128xf32> -> vector<8x128xf32>
    %c1_88 = arith.constant 1 : index
    %c0_89 = arith.constant 0 : index
    %c0_90 = arith.constant 0 : index
    %230 = vector.load %arg6[%c1_88, %c0_89, %c0_90] : memref<2x1x128xf32, #tpu.memory_space<vmem>>, vector<1x1x128xf32>
    %231 = vector.shape_cast %230 : vector<1x1x128xf32> to vector<1x128xf32>
    %232 = vector.broadcast %231 : vector<1x128xf32> to vector<8x128xf32>
    %233 = arith.addf %229, %232 : vector<8x128xf32>
    %234 = arith.addf %169, %233 : vector<8x128xf32>
    %c1_91 = arith.constant 1 : index
    %c0_92 = arith.constant 0 : index
    %c0_93 = arith.constant 0 : index
    %235 = vector.load %arg7[%c1_91, %c0_92, %c0_93] : memref<2x1x128xf32, #tpu.memory_space<vmem>>, vector<1x1x128xf32>
    %236 = vector.shape_cast %235 : vector<1x1x128xf32> to vector<1x128xf32>
    %c1_94 = arith.constant 1 : index
    %c0_95 = arith.constant 0 : index
    %c0_96 = arith.constant 0 : index
    %237 = vector.load %arg8[%c1_94, %c0_95, %c0_96] : memref<2x1x128xf32, #tpu.memory_space<vmem>>, vector<1x1x128xf32>
    %238 = vector.shape_cast %237 : vector<1x1x128xf32> to vector<1x128xf32>
    %cst_97 = arith.constant dense<0.000000e+00> : vector<8xf32>
    %239 = vector.multi_reduction <add>, %234, %cst_97 [1] : vector<8x128xf32> to vector<8xf32>
    %240 = vector.shape_cast %239 : vector<8xf32> to vector<8x1xf32>
    %cst_98 = arith.constant 3.125000e-02 : f32
    %241 = vector.broadcast %cst_98 : f32 to vector<8x1xf32>
    %242 = arith.mulf %240, %241 : vector<8x1xf32>
    %243 = vector.broadcast %242 : vector<8x1xf32> to vector<8x128xf32>
    %244 = arith.subf %234, %243 : vector<8x128xf32>
    %245 = vector.broadcast %4 : vector<1x128xf32> to vector<8x128xf32>
    %246 = arith.mulf %244, %245 : vector<8x128xf32>
    %247 = arith.mulf %246, %246 : vector<8x128xf32>
    %cst_99 = arith.constant dense<0.000000e+00> : vector<8xf32>
    %248 = vector.multi_reduction <add>, %247, %cst_99 [1] : vector<8x128xf32> to vector<8xf32>
    %249 = vector.shape_cast %248 : vector<8xf32> to vector<8x1xf32>
    %cst_100 = arith.constant 3.125000e-02 : f32
    %250 = vector.broadcast %cst_100 : f32 to vector<8x1xf32>
    %251 = arith.mulf %249, %250 : vector<8x1xf32>
    %cst_101 = arith.constant 9.99999996E-13 : f32
    %252 = vector.broadcast %cst_101 : f32 to vector<8x1xf32>
    %253 = arith.addf %251, %252 : vector<8x1xf32>
    %254 = math.rsqrt %253 : vector<8x1xf32>
    %255 = vector.broadcast %254 : vector<8x1xf32> to vector<8x128xf32>
    %256 = arith.mulf %246, %255 : vector<8x128xf32>
    %257 = vector.broadcast %236 : vector<1x128xf32> to vector<8x128xf32>
    %258 = arith.mulf %256, %257 : vector<8x128xf32>
    %259 = vector.broadcast %238 : vector<1x128xf32> to vector<8x128xf32>
    %260 = arith.addf %258, %259 : vector<8x128xf32>
    %261 = arith.truncf %260 : vector<8x128xf32> to vector<8x128xbf16>
    %c1_102 = arith.constant 1 : index
    %c0_103 = arith.constant 0 : index
    %c0_104 = arith.constant 0 : index
    %262 = vector.load %arg9[%c1_102, %c0_103, %c0_104] : memref<2x128x128xbf16, #tpu.memory_space<vmem>>, vector<1x128x128xbf16>
    %263 = vector.shape_cast %262 : vector<1x128x128xbf16> to vector<128x128xbf16>
    %cst_105 = arith.constant dense<0.000000e+00> : vector<8x128xf32>
    %264 = tpu.matmul %261, %263, %cst_105 {dimension_numbers = #tpu.dot_dimension_numbers<[1], [0], [0], [1], [0, 0, 1, 1], [], []>} : vector<8x128xbf16>, vector<128x128xbf16>, vector<8x128xf32> -> vector<8x128xf32>
    %c1_106 = arith.constant 1 : index
    %c0_107 = arith.constant 0 : index
    %c0_108 = arith.constant 0 : index
    %265 = vector.load %arg10[%c1_106, %c0_107, %c0_108] : memref<2x1x128xf32, #tpu.memory_space<vmem>>, vector<1x1x128xf32>
    %266 = vector.shape_cast %265 : vector<1x1x128xf32> to vector<1x128xf32>
    %267 = vector.broadcast %266 : vector<1x128xf32> to vector<8x128xf32>
    %268 = arith.addf %264, %267 : vector<8x128xf32>
    %269 = arith.mulf %268, %268 : vector<8x128xf32>
    %270 = arith.mulf %268, %269 : vector<8x128xf32>
    %cst_109 = arith.constant 4.471500e-02 : f32
    %271 = vector.broadcast %cst_109 : f32 to vector<8x128xf32>
    %272 = arith.mulf %271, %270 : vector<8x128xf32>
    %273 = arith.addf %268, %272 : vector<8x128xf32>
    %cst_110 = arith.constant 0.797884583 : f32
    %274 = vector.broadcast %cst_110 : f32 to vector<8x128xf32>
    %275 = arith.mulf %274, %273 : vector<8x128xf32>
    %276 = math.tanh %275 : vector<8x128xf32>
    %cst_111 = arith.constant 1.000000e+00 : f32
    %277 = vector.broadcast %cst_111 : f32 to vector<8x128xf32>
    %278 = arith.addf %277, %276 : vector<8x128xf32>
    %cst_112 = arith.constant 5.000000e-01 : f32
    %279 = vector.broadcast %cst_112 : f32 to vector<8x128xf32>
    %280 = arith.mulf %279, %278 : vector<8x128xf32>
    %281 = arith.mulf %268, %280 : vector<8x128xf32>
    %282 = arith.truncf %281 : vector<8x128xf32> to vector<8x128xbf16>
    %c1_113 = arith.constant 1 : index
    %c0_114 = arith.constant 0 : index
    %c0_115 = arith.constant 0 : index
    %283 = vector.load %arg11[%c1_113, %c0_114, %c0_115] : memref<2x128x128xbf16, #tpu.memory_space<vmem>>, vector<1x128x128xbf16>
    %284 = vector.shape_cast %283 : vector<1x128x128xbf16> to vector<128x128xbf16>
    %cst_116 = arith.constant dense<0.000000e+00> : vector<8x128xf32>
    %285 = tpu.matmul %282, %284, %cst_116 {dimension_numbers = #tpu.dot_dimension_numbers<[1], [0], [0], [1], [0, 0, 1, 1], [], []>} : vector<8x128xbf16>, vector<128x128xbf16>, vector<8x128xf32> -> vector<8x128xf32>
    %c1_117 = arith.constant 1 : index
    %c0_118 = arith.constant 0 : index
    %c0_119 = arith.constant 0 : index
    %286 = vector.load %arg12[%c1_117, %c0_118, %c0_119] : memref<2x1x128xf32, #tpu.memory_space<vmem>>, vector<1x1x128xf32>
    %287 = vector.shape_cast %286 : vector<1x1x128xf32> to vector<1x128xf32>
    %288 = vector.broadcast %287 : vector<1x128xf32> to vector<8x128xf32>
    %289 = arith.addf %285, %288 : vector<8x128xf32>
    %290 = arith.addf %260, %289 : vector<8x128xf32>
    %c1_120 = arith.constant 1 : index
    %c0_121 = arith.constant 0 : index
    %c0_122 = arith.constant 0 : index
    %291 = vector.load %arg13[%c1_120, %c0_121, %c0_122] : memref<2x1x128xf32, #tpu.memory_space<vmem>>, vector<1x1x128xf32>
    %292 = vector.shape_cast %291 : vector<1x1x128xf32> to vector<1x128xf32>
    %c1_123 = arith.constant 1 : index
    %c0_124 = arith.constant 0 : index
    %c0_125 = arith.constant 0 : index
    %293 = vector.load %arg14[%c1_123, %c0_124, %c0_125] : memref<2x1x128xf32, #tpu.memory_space<vmem>>, vector<1x1x128xf32>
    %294 = vector.shape_cast %293 : vector<1x1x128xf32> to vector<1x128xf32>
    %cst_126 = arith.constant dense<0.000000e+00> : vector<8xf32>
    %295 = vector.multi_reduction <add>, %290, %cst_126 [1] : vector<8x128xf32> to vector<8xf32>
    %296 = vector.shape_cast %295 : vector<8xf32> to vector<8x1xf32>
    %cst_127 = arith.constant 3.125000e-02 : f32
    %297 = vector.broadcast %cst_127 : f32 to vector<8x1xf32>
    %298 = arith.mulf %296, %297 : vector<8x1xf32>
    %299 = vector.broadcast %298 : vector<8x1xf32> to vector<8x128xf32>
    %300 = arith.subf %290, %299 : vector<8x128xf32>
    %301 = vector.broadcast %4 : vector<1x128xf32> to vector<8x128xf32>
    %302 = arith.mulf %300, %301 : vector<8x128xf32>
    %303 = arith.mulf %302, %302 : vector<8x128xf32>
    %cst_128 = arith.constant dense<0.000000e+00> : vector<8xf32>
    %304 = vector.multi_reduction <add>, %303, %cst_128 [1] : vector<8x128xf32> to vector<8xf32>
    %305 = vector.shape_cast %304 : vector<8xf32> to vector<8x1xf32>
    %cst_129 = arith.constant 3.125000e-02 : f32
    %306 = vector.broadcast %cst_129 : f32 to vector<8x1xf32>
    %307 = arith.mulf %305, %306 : vector<8x1xf32>
    %cst_130 = arith.constant 9.99999996E-13 : f32
    %308 = vector.broadcast %cst_130 : f32 to vector<8x1xf32>
    %309 = arith.addf %307, %308 : vector<8x1xf32>
    %310 = math.rsqrt %309 : vector<8x1xf32>
    %311 = vector.broadcast %310 : vector<8x1xf32> to vector<8x128xf32>
    %312 = arith.mulf %302, %311 : vector<8x128xf32>
    %313 = vector.broadcast %292 : vector<1x128xf32> to vector<8x128xf32>
    %314 = arith.mulf %312, %313 : vector<8x128xf32>
    %315 = vector.broadcast %294 : vector<1x128xf32> to vector<8x128xf32>
    %316 = arith.addf %314, %315 : vector<8x128xf32>
    %317 = vector.extract_strided_slice %316 {offsets = [0, 0], sizes = [1, 128], strides = [1, 1]} : vector<8x128xf32> to vector<1x128xf32>
    %318 = arith.truncf %317 : vector<1x128xf32> to vector<1x128xbf16>
    %c0_131 = arith.constant 0 : index
    %c0_132 = arith.constant 0 : index
    %319 = vector.load %arg15[%c0_131, %c0_132] : memref<128x128xbf16, #tpu.memory_space<vmem>>, vector<128x128xbf16>
    %cst_133 = arith.constant dense<0.000000e+00> : vector<1x128xf32>
    %320 = tpu.matmul %318, %319, %cst_133 {dimension_numbers = #tpu.dot_dimension_numbers<[1], [0], [0], [1], [0, 0, 1, 1], [], []>} : vector<1x128xbf16>, vector<128x128xbf16>, vector<1x128xf32> -> vector<1x128xf32>
    %c0_134 = arith.constant 0 : index
    %c0_135 = arith.constant 0 : index
    %321 = vector.load %arg16[%c0_134, %c0_135] : memref<1x128xf32, #tpu.memory_space<vmem>>, vector<1x128xf32>
    %322 = arith.addf %320, %321 : vector<1x128xf32>
    %323 = math.tanh %322 : vector<1x128xf32>
    %324 = arith.truncf %323 : vector<1x128xf32> to vector<1x128xbf16>
    %c0_136 = arith.constant 0 : index
    %c0_137 = arith.constant 0 : index
    %325 = vector.load %arg17[%c0_136, %c0_137] : memref<128x128xbf16, #tpu.memory_space<vmem>>, vector<128x128xbf16>
    %cst_138 = arith.constant dense<0.000000e+00> : vector<1x128xf32>
    %326 = tpu.matmul %324, %325, %cst_138 {dimension_numbers = #tpu.dot_dimension_numbers<[1], [0], [0], [1], [0, 0, 1, 1], [], []>} : vector<1x128xbf16>, vector<128x128xbf16>, vector<1x128xf32> -> vector<1x128xf32>
    %c0_139 = arith.constant 0 : index
    %c0_140 = arith.constant 0 : index
    %327 = vector.load %arg18[%c0_139, %c0_140] : memref<1x128xf32, #tpu.memory_space<vmem>>, vector<1x128xf32>
    %328 = arith.addf %326, %327 : vector<1x128xf32>
    %329 = vector.shape_cast %328 : vector<1x128xf32> to vector<1x128xf32>
    %330 = vector.broadcast %329 : vector<1x128xf32> to vector<8x128xf32>
    %c0_141 = arith.constant 0 : index
    %c0_142 = arith.constant 0 : index
    %c0_143 = arith.constant 0 : index
    %331 = vector.load %arg19[%c0_141, %c0_142, %c0_143] : memref<1x8x128xf32, #tpu.memory_space<vmem>>, vector<1x8x128xf32>
    %332 = vector.shape_cast %331 : vector<1x8x128xf32> to vector<8x128xf32>
    %333 = vector.shape_cast %330 : vector<8x128xf32> to vector<1x8x128xf32>
    tpu.vector_store %arg19[%c0_141, %c0_142, %c0_143], %333 {strides = array<i32>} : memref<1x8x128xf32, #tpu.memory_space<vmem>>, vector<1x8x128xf32>,
    return
  }
  func.func @transform_0(%arg0: i32) -> (i32, i32, i32) {
    %c0_i32 = arith.constant 0 : i32
    %c0_i32_0 = arith.constant 0 : i32
    %c0_i32_1 = arith.constant 0 : i32
    return %arg0, %c0_i32, %c0_i32_0 : i32, i32, i32
  }
  func.func @transform_1(%arg0: i32) -> (i32, i32, i32) {
    %c0_i32 = arith.constant 0 : i32
    %c0_i32_0 = arith.constant 0 : i32
    %c0_i32_1 = arith.constant 0 : i32
    return %arg0, %c0_i32, %c0_i32_0 : i32, i32, i32
  }
  func.func @transform_2(%arg0: i32) -> (i32, i32, i32) {
    %c0_i32 = arith.constant 0 : i32
    %c0_i32_0 = arith.constant 0 : i32
    %c0_i32_1 = arith.constant 0 : i32
    %c0_i32_2 = arith.constant 0 : i32
    return %c0_i32, %c0_i32_0, %c0_i32_1 : i32, i32, i32
  }
  func.func @transform_3(%arg0: i32) -> (i32, i32, i32) {
    %c0_i32 = arith.constant 0 : i32
    %c0_i32_0 = arith.constant 0 : i32
    %c0_i32_1 = arith.constant 0 : i32
    %c0_i32_2 = arith.constant 0 : i32
    return %c0_i32, %c0_i32_0, %c0_i32_1 : i32, i32, i32
  }
  func.func @transform_4(%arg0: i32) -> (i32, i32, i32) {
    %c0_i32 = arith.constant 0 : i32
    %c0_i32_0 = arith.constant 0 : i32
    %c0_i32_1 = arith.constant 0 : i32
    %c0_i32_2 = arith.constant 0 : i32
    return %c0_i32, %c0_i32_0, %c0_i32_1 : i32, i32, i32
  }
  func.func @transform_5(%arg0: i32) -> (i32, i32, i32) {
    %c0_i32 = arith.constant 0 : i32
    %c0_i32_0 = arith.constant 0 : i32
    %c0_i32_1 = arith.constant 0 : i32
    %c0_i32_2 = arith.constant 0 : i32
    return %c0_i32, %c0_i32_0, %c0_i32_1 : i32, i32, i32
  }
  func.func @transform_6(%arg0: i32) -> (i32, i32, i32) {
    %c0_i32 = arith.constant 0 : i32
    %c0_i32_0 = arith.constant 0 : i32
    %c0_i32_1 = arith.constant 0 : i32
    %c0_i32_2 = arith.constant 0 : i32
    return %c0_i32, %c0_i32_0, %c0_i32_1 : i32, i32, i32
  }
  func.func @transform_7(%arg0: i32) -> (i32, i32, i32) {
    %c0_i32 = arith.constant 0 : i32
    %c0_i32_0 = arith.constant 0 : i32
    %c0_i32_1 = arith.constant 0 : i32
    %c0_i32_2 = arith.constant 0 : i32
    return %c0_i32, %c0_i32_0, %c0_i32_1 : i32, i32, i32
  }
  func.func @transform_8(%arg0: i32) -> (i32, i32, i32) {
    %c0_i32 = arith.constant 0 : i32
    %c0_i32_0 = arith.constant 0 : i32
    %c0_i32_1 = arith.constant 0 : i32
    %c0_i32_2 = arith.constant 0 : i32
    return %c0_i32, %c0_i32_0, %c0_i32_1 : i32, i32, i32
  }
  func.func @transform_9(%arg0: i32) -> (i32, i32, i32) {
    %c0_i32 = arith.constant 0 : i32
    %c0_i32_0 = arith.constant 0 : i32
    %c0_i32_1 = arith.constant 0 : i32
    %c0_i32_2 = arith.constant 0 : i32
    return %c0_i32, %c0_i32_0, %c0_i32_1 : i32, i32, i32
  }
  func.func @transform_10(%arg0: i32) -> (i32, i32, i32) {
    %c0_i32 = arith.constant 0 : i32
    %c0_i32_0 = arith.constant 0 : i32
    %c0_i32_1 = arith.constant 0 : i32
    %c0_i32_2 = arith.constant 0 : i32
    return %c0_i32, %c0_i32_0, %c0_i32_1 : i32, i32, i32
  }
  func.func @transform_11(%arg0: i32) -> (i32, i32, i32) {
    %c0_i32 = arith.constant 0 : i32
    %c0_i32_0 = arith.constant 0 : i32
    %c0_i32_1 = arith.constant 0 : i32
    %c0_i32_2 = arith.constant 0 : i32
    return %c0_i32, %c0_i32_0, %c0_i32_1 : i32, i32, i32
  }
  func.func @transform_12(%arg0: i32) -> (i32, i32, i32) {
    %c0_i32 = arith.constant 0 : i32
    %c0_i32_0 = arith.constant 0 : i32
    %c0_i32_1 = arith.constant 0 : i32
    %c0_i32_2 = arith.constant 0 : i32
    return %c0_i32, %c0_i32_0, %c0_i32_1 : i32, i32, i32
  }
  func.func @transform_13(%arg0: i32) -> (i32, i32, i32) {
    %c0_i32 = arith.constant 0 : i32
    %c0_i32_0 = arith.constant 0 : i32
    %c0_i32_1 = arith.constant 0 : i32
    %c0_i32_2 = arith.constant 0 : i32
    return %c0_i32, %c0_i32_0, %c0_i32_1 : i32, i32, i32
  }
  func.func @transform_14(%arg0: i32) -> (i32, i32) {
    %c0_i32 = arith.constant 0 : i32
    %c0_i32_0 = arith.constant 0 : i32
    %c0_i32_1 = arith.constant 0 : i32
    return %c0_i32, %c0_i32_0 : i32, i32
  }
  func.func @transform_15(%arg0: i32) -> (i32, i32) {
    %c0_i32 = arith.constant 0 : i32
    %c0_i32_0 = arith.constant 0 : i32
    %c0_i32_1 = arith.constant 0 : i32
    return %c0_i32, %c0_i32_0 : i32, i32
  }
  func.func @transform_16(%arg0: i32) -> (i32, i32) {
    %c0_i32 = arith.constant 0 : i32
    %c0_i32_0 = arith.constant 0 : i32
    %c0_i32_1 = arith.constant 0 : i32
    return %c0_i32, %c0_i32_0 : i32, i32
  }
  func.func @transform_17(%arg0: i32) -> (i32, i32) {
    %c0_i32 = arith.constant 0 : i32
    %c0_i32_0 = arith.constant 0 : i32
    %c0_i32_1 = arith.constant 0 : i32
    return %c0_i32, %c0_i32_0 : i32, i32
  }
  func.func @transform_18(%arg0: i32) -> (i32, i32, i32) {
    %c0_i32 = arith.constant 0 : i32
    %c0_i32_0 = arith.constant 0 : i32
    %c0_i32_1 = arith.constant 0 : i32
    return %arg0, %c0_i32, %c0_i32_0 : i32, i32, i32
  }
}

</mosaic_0001>

<llo_original>
// kernel: bert_model_forward.1
$region0: #{bert_model_forward.1}
  #allocation0 [shape = 'u32[]', space=smem, size = 0x4, offset = 0x4, fixed_abs, tag = 'smem constant byte address 0x4 - core index']
  #allocation1 [shape = 'u32[144,128]{1,0:T(1,128)}', space=vmem, size = 0x12000, scoped, tag = 'internal scratch']
  %s0 = inlined_call_operand.vmem [shape: f32[2,8,128], index: 0, kind: input, shape index: {}]
  %s1 = inlined_call_operand.vmem [shape: f32[2,1,8], index: 1, kind: input, shape index: {}]
  %s2 = inlined_call_operand.vmem [shape: bf16[2,128,384], index: 2, kind: input, shape index: {}]
  %s3 = inlined_call_operand.vmem [shape: f32[2,1,384], index: 3, kind: input, shape index: {}]
  %s4 = inlined_call_operand.vmem [shape: bf16[2,128,128], index: 4, kind: input, shape index: {}]
  %s5 = inlined_call_operand.vmem [shape: f32[2,1,128], index: 5, kind: input, shape index: {}]
  %s6 = inlined_call_operand.vmem [shape: f32[2,1,128], index: 6, kind: input, shape index: {}]
  %s7 = inlined_call_operand.vmem [shape: f32[2,1,128], index: 7, kind: input, shape index: {}]
  %s8 = inlined_call_operand.vmem [shape: bf16[2,128,128], index: 8, kind: input, shape index: {}]
  %s9 = inlined_call_operand.vmem [shape: f32[2,1,128], index: 9, kind: input, shape index: {}]
  %s10 = inlined_call_operand.vmem [shape: bf16[2,128,128], index: 10, kind: input, shape index: {}]
  %s11 = inlined_call_operand.vmem [shape: f32[2,1,128], index: 11, kind: input, shape index: {}]
  %s12 = inlined_call_operand.vmem [shape: f32[2,1,128], index: 12, kind: input, shape index: {}]
  %s13 = inlined_call_operand.vmem [shape: f32[2,1,128], index: 13, kind: input, shape index: {}]
  %s14 = inlined_call_operand.vmem [shape: bf16[128,128], index: 14, kind: input, shape index: {}]
  %s15 = inlined_call_operand.vmem [shape: f32[1,128], index: 15, kind: input, shape index: {}]
  %s16 = inlined_call_operand.vmem [shape: bf16[128,128], index: 16, kind: input, shape index: {}]
  %s17 = inlined_call_operand.vmem [shape: f32[1,128], index: 17, kind: input, shape index: {}]
  %s18 = inlined_call_operand.vmem [shape: f32[2,8,128], index: 18, kind: output, shape index: {}]
  %s19 = sld [smem:[#allocation0]]
  $region105: #{bert_model_forward.1} parent=0
    _
  %s21 = ssub.s32 1, %s19
  %s22 = scalar_select 0, %s21, %s19
  loop: start=0, step=1, limit=4
  $region2: #{bert_model_forward.1} parent=0 // loop_pre_header
    _
  $region3: #{bert_model_forward.1} parent=0 // loop_header
    %s24 = sphi 0, %s28
    %p25 = scmp.ge.s32.totalorder %s24, 4
    %s34 = sphi 0, %s36
    %s37 = sphi 0, %s34
    %s38 = sphi 0, %s37
    %s54 = sphi 0, %s38
    %s60 = sphi 0, %s62
    %s63 = sphi 0, %s60
    %s64 = sphi 0, %s63
    %s80 = sphi 0, %s64
    %s84 = sphi 0, %s84
    %s86 = sphi 0, %s84
    %s87 = sphi 0, %s86
    %s101 = sphi 0, %s87
    %s105 = sphi 0, %s105
    %s107 = sphi 0, %s105
    %s108 = sphi 0, %s107
    %s122 = sphi 0, %s108
    %s126 = sphi 0, %s126
    %s128 = sphi 0, %s126
    %s129 = sphi 0, %s128
    %s143 = sphi 0, %s129
    %s147 = sphi 0, %s147
    %s149 = sphi 0, %s147
    %s150 = sphi 0, %s149
    %s164 = sphi 0, %s150
    %s168 = sphi 0, %s168
    %s170 = sphi 0, %s168
    %s171 = sphi 0, %s170
    %s185 = sphi 0, %s171
    %s189 = sphi 0, %s189
    %s191 = sphi 0, %s189
    %s192 = sphi 0, %s191
    %s206 = sphi 0, %s192
    %s210 = sphi 0, %s210
    %s212 = sphi 0, %s210
    %s213 = sphi 0, %s212
    %s227 = sphi 0, %s213
    %s231 = sphi 0, %s231
    %s233 = sphi 0, %s231
    %s234 = sphi 0, %s233
    %s248 = sphi 0, %s234
    %s252 = sphi 0, %s252
    %s254 = sphi 0, %s252
    %s255 = sphi 0, %s254
    %s269 = sphi 0, %s255
    %s273 = sphi 0, %s273
    %s275 = sphi 0, %s273
    %s276 = sphi 0, %s275
    %s290 = sphi 0, %s276
    %s294 = sphi 0, %s294
    %s296 = sphi 0, %s294
    %s297 = sphi 0, %s296
    %s311 = sphi 0, %s297
    %s315 = sphi 0, %s315
    %s317 = sphi 0, %s315
    %s318 = sphi 0, %s317
    %s332 = sphi 0, %s318
    %s336 = sphi 0, %s336
    %s338 = sphi 0, %s336
    %s339 = sphi 0, %s338
    %s353 = sphi 0, %s339
    %s357 = sphi 0, %s357
    %s359 = sphi 0, %s357
    %s360 = sphi 0, %s359
    %s374 = sphi 0, %s360
    %s378 = sphi 0, %s378
    %s380 = sphi 0, %s378
    %s381 = sphi 0, %s380
    %s395 = sphi 0, %s381
    %s399 = sphi 0, %s399
    %s401 = sphi 0, %s399
    %s402 = sphi 0, %s401
    %s416 = sphi 0, %s402
    %s422 = sphi 0, %s424
    %s425 = sphi 0, %s422
    %s426 = sphi 0, %s425
    %s442 = sphi 0, %s426
  $region4: #{bert_model_forward.1} parent=0 // loop_header_branch
    %27 = sbr.rel (%p25) target = $region8
  $region5: #{bert_model_forward.1} parent=0 // loop_body
    %s29 = ssub.s32 %s24, 1
    %s30 = ssub.s32 %s24, 2
    %s31 = sadd.s32 %s24, 1
    %s32 = ssub.s32 %s24, %s31
    %p33 = scmp.eq.s32.totalorder %s32, 0
    %s35 = sadd.s32 %s34, 1
    %s36 = scalar_select %p33, %s34, %s35
    %p39 = pneg %p33
    %p40 = scmp.eq.s32.totalorder %s24, 1
    %p41 = por %p39, %p40
    %p42 = scmp.ne.s32.totalorder %s34, %s37
    %p43 = scmp.eq.s32.totalorder %s24, 0
    %p44 = por %p42, %p43
    %p45 = scmp.ne.s32.totalorder %s34, %s37
    %p46 = scmp.eq.s32.totalorder %s29, 1
    %p47 = por %p45, %p46
    %p48 = scmp.ne.s32.totalorder %s37, %s38
    %p49 = scmp.eq.s32.totalorder %s29, 0
    %p50 = por %p48, %p49
    %p51 = scmp.ne.s32.totalorder %s37, %s38
    %p52 = scmp.eq.s32.totalorder %s30, 1
    %p53 = por %p51, %p52
    %p55 = scmp.ne.s32.totalorder %s38, %s54
    %p56 = scmp.eq.s32.totalorder %s30, 0
    %p57 = por %p55, %p56
    %s58 = ssub.s32 %s24, %s31
    %p59 = scmp.eq.s32.totalorder %s58, 0
    %s61 = sadd.s32 %s60, 1
    %s62 = scalar_select %p59, %s60, %s61
    %p65 = pneg %p59
    %p66 = scmp.eq.s32.totalorder %s24, 1
    %p67 = por %p65, %p66
    %p68 = scmp.ne.s32.totalorder %s60, %s63
    %p69 = scmp.eq.s32.totalorder %s24, 0
    %p70 = por %p68, %p69
    %p71 = scmp.ne.s32.totalorder %s60, %s63
    %p72 = scmp.eq.s32.totalorder %s29, 1
    %p73 = por %p71, %p72
    %p74 = scmp.ne.s32.totalorder %s63, %s64
    %p75 = scmp.eq.s32.totalorder %s29, 0
    %p76 = por %p74, %p75
    %p77 = scmp.ne.s32.totalorder %s63, %s64
    %p78 = scmp.eq.s32.totalorder %s30, 1
    %p79 = por %p77, %p78
    %p81 = scmp.ne.s32.totalorder %s64, %s80
    %p82 = scmp.eq.s32.totalorder %s30, 0
    %p83 = por %p81, %p82
    %s85 = sadd.s32 %s84, 1
    %p88 = scmp.eq.s32.totalorder %s24, 1
    %p89 = scmp.ne.s32.totalorder %s84, %s86
    %p90 = scmp.eq.s32.totalorder %s24, 0
    %p91 = por %p89, %p90
    %p92 = scmp.ne.s32.totalorder %s84, %s86
    %p93 = scmp.eq.s32.totalorder %s29, 1
    %p94 = por %p92, %p93
    %p95 = scmp.ne.s32.totalorder %s86, %s87
    %p96 = scmp.eq.s32.totalorder %s29, 0
    %p97 = por %p95, %p96
    %p98 = scmp.ne.s32.totalorder %s86, %s87
    %p99 = scmp.eq.s32.totalorder %s30, 1
    %p100 = por %p98, %p99
    %p102 = scmp.ne.s32.totalorder %s87, %s101
    %p103 = scmp.eq.s32.totalorder %s30, 0
    %p104 = por %p102, %p103
    %s106 = sadd.s32 %s105, 1
    %p109 = scmp.eq.s32.totalorder %s24, 1
    %p110 = scmp.ne.s32.totalorder %s105, %s107
    %p111 = scmp.eq.s32.totalorder %s24, 0
    %p112 = por %p110, %p111
    %p113 = scmp.ne.s32.totalorder %s105, %s107
    %p114 = scmp.eq.s32.totalorder %s29, 1
    %p115 = por %p113, %p114
    %p116 = scmp.ne.s32.totalorder %s107, %s108
    %p117 = scmp.eq.s32.totalorder %s29, 0
    %p118 = por %p116, %p117
    %p119 = scmp.ne.s32.totalorder %s107, %s108
    %p120 = scmp.eq.s32.totalorder %s30, 1
    %p121 = por %p119, %p120
    %p123 = scmp.ne.s32.totalorder %s108, %s122
    %p124 = scmp.eq.s32.totalorder %s30, 0
    %p125 = por %p123, %p124
    %s127 = sadd.s32 %s126, 1
    %p130 = scmp.eq.s32.totalorder %s24, 1
    %p131 = scmp.ne.s32.totalorder %s126, %s128
    %p132 = scmp.eq.s32.totalorder %s24, 0
    %p133 = por %p131, %p132
    %p134 = scmp.ne.s32.totalorder %s126, %s128
    %p135 = scmp.eq.s32.totalorder %s29, 1
    %p136 = por %p134, %p135
    %p137 = scmp.ne.s32.totalorder %s128, %s129
    %p138 = scmp.eq.s32.totalorder %s29, 0
    %p139 = por %p137, %p138
    %p140 = scmp.ne.s32.totalorder %s128, %s129
    %p141 = scmp.eq.s32.totalorder %s30, 1
    %p142 = por %p140, %p141
    %p144 = scmp.ne.s32.totalorder %s129, %s143
    %p145 = scmp.eq.s32.totalorder %s30, 0
    %p146 = por %p144, %p145
    %s148 = sadd.s32 %s147, 1
    %p151 = scmp.eq.s32.totalorder %s24, 1
    %p152 = scmp.ne.s32.totalorder %s147, %s149
    %p153 = scmp.eq.s32.totalorder %s24, 0
    %p154 = por %p152, %p153
    %p155 = scmp.ne.s32.totalorder %s147, %s149
    %p156 = scmp.eq.s32.totalorder %s29, 1
    %p157 = por %p155, %p156
    %p158 = scmp.ne.s32.totalorder %s149, %s150
    %p159 = scmp.eq.s32.totalorder %s29, 0
    %p160 = por %p158, %p159
    %p161 = scmp.ne.s32.totalorder %s149, %s150
    %p162 = scmp.eq.s32.totalorder %s30, 1
    %p163 = por %p161, %p162
    %p165 = scmp.ne.s32.totalorder %s150, %s164
    %p166 = scmp.eq.s32.totalorder %s30, 0
    %p167 = por %p165, %p166
    %s169 = sadd.s32 %s168, 1
    %p172 = scmp.eq.s32.totalorder %s24, 1
    %p173 = scmp.ne.s32.totalorder %s168, %s170
    %p174 = scmp.eq.s32.totalorder %s24, 0
    %p175 = por %p173, %p174
    %p176 = scmp.ne.s32.totalorder %s168, %s170
    %p177 = scmp.eq.s32.totalorder %s29, 1
    %p178 = por %p176, %p177
    %p179 = scmp.ne.s32.totalorder %s170, %s171
    %p180 = scmp.eq.s32.totalorder %s29, 0
    %p181 = por %p179, %p180
    %p182 = scmp.ne.s32.totalorder %s170, %s171
    %p183 = scmp.eq.s32.totalorder %s30, 1
    %p184 = por %p182, %p183
    %p186 = scmp.ne.s32.totalorder %s171, %s185
    %p187 = scmp.eq.s32.totalorder %s30, 0
    %p188 = por %p186, %p187
    %s190 = sadd.s32 %s189, 1
    %p193 = scmp.eq.s32.totalorder %s24, 1
    %p194 = scmp.ne.s32.totalorder %s189, %s191
    %p195 = scmp.eq.s32.totalorder %s24, 0
    %p196 = por %p194, %p195
    %p197 = scmp.ne.s32.totalorder %s189, %s191
    %p198 = scmp.eq.s32.totalorder %s29, 1
    %p199 = por %p197, %p198
    %p200 = scmp.ne.s32.totalorder %s191, %s192
    %p201 = scmp.eq.s32.totalorder %s29, 0
    %p202 = por %p200, %p201
    %p203 = scmp.ne.s32.totalorder %s191, %s192
    %p204 = scmp.eq.s32.totalorder %s30, 1
    %p205 = por %p203, %p204
    %p207 = scmp.ne.s32.totalorder %s192, %s206
    %p208 = scmp.eq.s32.totalorder %s30, 0
    %p209 = por %p207, %p208
    %s211 = sadd.s32 %s210, 1
    %p214 = scmp.eq.s32.totalorder %s24, 1
    %p215 = scmp.ne.s32.totalorder %s210, %s212
    %p216 = scmp.eq.s32.totalorder %s24, 0
    %p217 = por %p215, %p216
    %p218 = scmp.ne.s32.totalorder %s210, %s212
    %p219 = scmp.eq.s32.totalorder %s29, 1
    %p220 = por %p218, %p219
    %p221 = scmp.ne.s32.totalorder %s212, %s213
    %p222 = scmp.eq.s32.totalorder %s29, 0
    %p223 = por %p221, %p222
    %p224 = scmp.ne.s32.totalorder %s212, %s213
    %p225 = scmp.eq.s32.totalorder %s30, 1
    %p226 = por %p224, %p225
    %p228 = scmp.ne.s32.totalorder %s213, %s227
    %p229 = scmp.eq.s32.totalorder %s30, 0
    %p230 = por %p228, %p229
    %s232 = sadd.s32 %s231, 1
    %p235 = scmp.eq.s32.totalorder %s24, 1
    %p236 = scmp.ne.s32.totalorder %s231, %s233
    %p237 = scmp.eq.s32.totalorder %s24, 0
    %p238 = por %p236, %p237
    %p239 = scmp.ne.s32.totalorder %s231, %s233
    %p240 = scmp.eq.s32.totalorder %s29, 1
    %p241 = por %p239, %p240
    %p242 = scmp.ne.s32.totalorder %s233, %s234
    %p243 = scmp.eq.s32.totalorder %s29, 0
    %p244 = por %p242, %p243
    %p245 = scmp.ne.s32.totalorder %s233, %s234
    %p246 = scmp.eq.s32.totalorder %s30, 1
    %p247 = por %p245, %p246
    %p249 = scmp.ne.s32.totalorder %s234, %s248
    %p250 = scmp.eq.s32.totalorder %s30, 0
    %p251 = por %p249, %p250
    %s253 = sadd.s32 %s252, 1
    %p256 = scmp.eq.s32.totalorder %s24, 1
    %p257 = scmp.ne.s32.totalorder %s252, %s254
    %p258 = scmp.eq.s32.totalorder %s24, 0
    %p259 = por %p257, %p258
    %p260 = scmp.ne.s32.totalorder %s252, %s254
    %p261 = scmp.eq.s32.totalorder %s29, 1
    %p262 = por %p260, %p261
    %p263 = scmp.ne.s32.totalorder %s254, %s255
    %p264 = scmp.eq.s32.totalorder %s29, 0
    %p265 = por %p263, %p264
    %p266 = scmp.ne.s32.totalorder %s254, %s255
    %p267 = scmp.eq.s32.totalorder %s30, 1
    %p268 = por %p266, %p267
    %p270 = scmp.ne.s32.totalorder %s255, %s269
    %p271 = scmp.eq.s32.totalorder %s30, 0
    %p272 = por %p270, %p271
    %s274 = sadd.s32 %s273, 1
    %p277 = scmp.eq.s32.totalorder %s24, 1
    %p278 = scmp.ne.s32.totalorder %s273, %s275
    %p279 = scmp.eq.s32.totalorder %s24, 0
    %p280 = por %p278, %p279
    %p281 = scmp.ne.s32.totalorder %s273, %s275
    %p282 = scmp.eq.s32.totalorder %s29, 1
    %p283 = por %p281, %p282
    %p284 = scmp.ne.s32.totalorder %s275, %s276
    %p285 = scmp.eq.s32.totalorder %s29, 0
    %p286 = por %p284, %p285
    %p287 = scmp.ne.s32.totalorder %s275, %s276
    %p288 = scmp.eq.s32.totalorder %s30, 1
    %p289 = por %p287, %p288
    %p291 = scmp.ne.s32.totalorder %s276, %s290
    %p292 = scmp.eq.s32.totalorder %s30, 0
    %p293 = por %p291, %p292
    %s295 = sadd.s32 %s294, 1
    %p298 = scmp.eq.s32.totalorder %s24, 1
    %p299 = scmp.ne.s32.totalorder %s294, %s296
    %p300 = scmp.eq.s32.totalorder %s24, 0
    %p301 = por %p299, %p300
    %p302 = scmp.ne.s32.totalorder %s294, %s296
    %p303 = scmp.eq.s32.totalorder %s29, 1
    %p304 = por %p302, %p303
    %p305 = scmp.ne.s32.totalorder %s296, %s297
    %p306 = scmp.eq.s32.totalorder %s29, 0
    %p307 = por %p305, %p306
    %p308 = scmp.ne.s32.totalorder %s296, %s297
    %p309 = scmp.eq.s32.totalorder %s30, 1
    %p310 = por %p308, %p309
    %p312 = scmp.ne.s32.totalorder %s297, %s311
    %p313 = scmp.eq.s32.totalorder %s30, 0
    %p314 = por %p312, %p313
    %s316 = sadd.s32 %s315, 1
    %p319 = scmp.eq.s32.totalorder %s24, 1
    %p320 = scmp.ne.s32.totalorder %s315, %s317
    %p321 = scmp.eq.s32.totalorder %s24, 0
    %p322 = por %p320, %p321
    %p323 = scmp.ne.s32.totalorder %s315, %s317
    %p324 = scmp.eq.s32.totalorder %s29, 1
    %p325 = por %p323, %p324
    %p326 = scmp.ne.s32.totalorder %s317, %s318
    %p327 = scmp.eq.s32.totalorder %s29, 0
    %p328 = por %p326, %p327
    %p329 = scmp.ne.s32.totalorder %s317, %s318
    %p330 = scmp.eq.s32.totalorder %s30, 1
    %p331 = por %p329, %p330
    %p333 = scmp.ne.s32.totalorder %s318, %s332
    %p334 = scmp.eq.s32.totalorder %s30, 0
    %p335 = por %p333, %p334
    %s337 = sadd.s32 %s336, 1
    %p340 = scmp.eq.s32.totalorder %s24, 1
    %p341 = scmp.ne.s32.totalorder %s336, %s338
    %p342 = scmp.eq.s32.totalorder %s24, 0
    %p343 = por %p341, %p342
    %p344 = scmp.ne.s32.totalorder %s336, %s338
    %p345 = scmp.eq.s32.totalorder %s29, 1
    %p346 = por %p344, %p345
    %p347 = scmp.ne.s32.totalorder %s338, %s339
    %p348 = scmp.eq.s32.totalorder %s29, 0
    %p349 = por %p347, %p348
    %p350 = scmp.ne.s32.totalorder %s338, %s339
    %p351 = scmp.eq.s32.totalorder %s30, 1
    %p352 = por %p350, %p351
    %p354 = scmp.ne.s32.totalorder %s339, %s353
    %p355 = scmp.eq.s32.totalorder %s30, 0
    %p356 = por %p354, %p355
    %s358 = sadd.s32 %s357, 1
    %p361 = scmp.eq.s32.totalorder %s24, 1
    %p362 = scmp.ne.s32.totalorder %s357, %s359
    %p363 = scmp.eq.s32.totalorder %s24, 0
    %p364 = por %p362, %p363
    %p365 = scmp.ne.s32.totalorder %s357, %s359
    %p366 = scmp.eq.s32.totalorder %s29, 1
    %p367 = por %p365, %p366
    %p368 = scmp.ne.s32.totalorder %s359, %s360
    %p369 = scmp.eq.s32.totalorder %s29, 0
    %p370 = por %p368, %p369
    %p371 = scmp.ne.s32.totalorder %s359, %s360
    %p372 = scmp.eq.s32.totalorder %s30, 1
    %p373 = por %p371, %p372
    %p375 = scmp.ne.s32.totalorder %s360, %s374
    %p376 = scmp.eq.s32.totalorder %s30, 0
    %p377 = por %p375, %p376
    %s379 = sadd.s32 %s378, 1
    %p382 = scmp.eq.s32.totalorder %s24, 1
    %p383 = scmp.ne.s32.totalorder %s378, %s380
    %p384 = scmp.eq.s32.totalorder %s24, 0
    %p385 = por %p383, %p384
    %p386 = scmp.ne.s32.totalorder %s378, %s380
    %p387 = scmp.eq.s32.totalorder %s29, 1
    %p388 = por %p386, %p387
    %p389 = scmp.ne.s32.totalorder %s380, %s381
    %p390 = scmp.eq.s32.totalorder %s29, 0
    %p391 = por %p389, %p390
    %p392 = scmp.ne.s32.totalorder %s380, %s381
    %p393 = scmp.eq.s32.totalorder %s30, 1
    %p394 = por %p392, %p393
    %p396 = scmp.ne.s32.totalorder %s381, %s395
    %p397 = scmp.eq.s32.totalorder %s30, 0
    %p398 = por %p396, %p397
    %s400 = sadd.s32 %s399, 1
    %p403 = scmp.eq.s32.totalorder %s24, 1
    %p404 = scmp.ne.s32.totalorder %s399, %s401
    %p405 = scmp.eq.s32.totalorder %s24, 0
    %p406 = por %p404, %p405
    %p407 = scmp.ne.s32.totalorder %s399, %s401
    %p408 = scmp.eq.s32.totalorder %s29, 1
    %p409 = por %p407, %p408
    %p410 = scmp.ne.s32.totalorder %s401, %s402
    %p411 = scmp.eq.s32.totalorder %s29, 0
    %p412 = por %p410, %p411
    %p413 = scmp.ne.s32.totalorder %s401, %s402
    %p414 = scmp.eq.s32.totalorder %s30, 1
    %p415 = por %p413, %p414
    %p417 = scmp.ne.s32.totalorder %s402, %s416
    %p418 = scmp.eq.s32.totalorder %s30, 0
    %p419 = por %p417, %p418
    %s420 = ssub.s32 %s24, %s31
    %p421 = scmp.eq.s32.totalorder %s420, 0
    %s423 = sadd.s32 %s422, 1
    %s424 = scalar_select %p421, %s422, %s423
    %p427 = pneg %p421
    %p428 = scmp.eq.s32.totalorder %s24, 1
    %p429 = por %p427, %p428
    %p430 = scmp.ne.s32.totalorder %s422, %s425
    %p431 = scmp.eq.s32.totalorder %s24, 0
    %p432 = por %p430, %p431
    %p433 = scmp.ne.s32.totalorder %s422, %s425
    %p434 = scmp.eq.s32.totalorder %s29, 1
    %p435 = por %p433, %p434
    %p436 = scmp.ne.s32.totalorder %s425, %s426
    %p437 = scmp.eq.s32.totalorder %s29, 0
    %p438 = por %p436, %p437
    %p439 = scmp.ne.s32.totalorder %s425, %s426
    %p440 = scmp.eq.s32.totalorder %s30, 1
    %p441 = por %p439, %p440
    %p443 = scmp.ne.s32.totalorder %s426, %s442
    %p444 = scmp.eq.s32.totalorder %s30, 0
    %p445 = por %p443, %p444
    %p446 = scmp.le.s32.totalorder 1, %s24
    %p447 = scmp.lt.s32.totalorder %s24, 3
    %p448 = pnand %p446, %p447
    %p449 = pneg %p448
    // Predicated region
    $region9: #{bert_model_forward.1} parent=5 // pred_check
      _
    $region10: #{bert_model_forward.1} parent=5 // pred_check_branch
      %451 = sbr.rel (%p448) target = $region12
    $region11: #{bert_model_forward.1} parent=5 // pred_region
      %s452 = ssub.s32 %s24, 1
      // Predicated region
      $region13: #{bert_model_forward.1} parent=11 // pred_check
        %p453 = pneg %p97
      $region14: #{bert_model_forward.1} parent=11 // pred_check_branch
        %455 = sbr.rel (%p453) target = $region16
      $region15: #{bert_model_forward.1} parent=11 // pred_region
        _
      $region16: #{bert_model_forward.1} parent=11 // pred_fallthru
        _
      // Predicated region
      $region17: #{bert_model_forward.1} parent=11 // pred_check
        %p456 = pneg %p118
      $region18: #{bert_model_forward.1} parent=11 // pred_check_branch
        %458 = sbr.rel (%p456) target = $region20
      $region19: #{bert_model_forward.1} parent=11 // pred_region
        _
      $region20: #{bert_model_forward.1} parent=11 // pred_fallthru
        _
      // Predicated region
      $region21: #{bert_model_forward.1} parent=11 // pred_check
        %p459 = pneg %p139
      $region22: #{bert_model_forward.1} parent=11 // pred_check_branch
        %461 = sbr.rel (%p459) target = $region24
      $region23: #{bert_model_forward.1} parent=11 // pred_region
        _
      $region24: #{bert_model_forward.1} parent=11 // pred_fallthru
        _
      // Predicated region
      $region25: #{bert_model_forward.1} parent=11 // pred_check
        %p462 = pneg %p160
      $region26: #{bert_model_forward.1} parent=11 // pred_check_branch
        %464 = sbr.rel (%p462) target = $region28
      $region27: #{bert_model_forward.1} parent=11 // pred_region
        _
      $region28: #{bert_model_forward.1} parent=11 // pred_fallthru
        _
      // Predicated region
      $region29: #{bert_model_forward.1} parent=11 // pred_check
        %p465 = pneg %p181
      $region30: #{bert_model_forward.1} parent=11 // pred_check_branch
        %467 = sbr.rel (%p465) target = $region32
      $region31: #{bert_model_forward.1} parent=11 // pred_region
        _
      $region32: #{bert_model_forward.1} parent=11 // pred_fallthru
        _
      // Predicated region
      $region33: #{bert_model_forward.1} parent=11 // pred_check
        %p468 = pneg %p202
      $region34: #{bert_model_forward.1} parent=11 // pred_check_branch
        %470 = sbr.rel (%p468) target = $region36
      $region35: #{bert_model_forward.1} parent=11 // pred_region
        _
      $region36: #{bert_model_forward.1} parent=11 // pred_fallthru
        _
      // Predicated region
      $region37: #{bert_model_forward.1} parent=11 // pred_check
        %p471 = pneg %p223
      $region38: #{bert_model_forward.1} parent=11 // pred_check_branch
        %473 = sbr.rel (%p471) target = $region40
      $region39: #{bert_model_forward.1} parent=11 // pred_region
        _
      $region40: #{bert_model_forward.1} parent=11 // pred_fallthru
        _
      // Predicated region
      $region41: #{bert_model_forward.1} parent=11 // pred_check
        %p474 = pneg %p244
      $region42: #{bert_model_forward.1} parent=11 // pred_check_branch
        %476 = sbr.rel (%p474) target = $region44
      $region43: #{bert_model_forward.1} parent=11 // pred_region
        _
      $region44: #{bert_model_forward.1} parent=11 // pred_fallthru
        _
      // Predicated region
      $region45: #{bert_model_forward.1} parent=11 // pred_check
        %p477 = pneg %p265
      $region46: #{bert_model_forward.1} parent=11 // pred_check_branch
        %479 = sbr.rel (%p477) target = $region48
      $region47: #{bert_model_forward.1} parent=11 // pred_region
        _
      $region48: #{bert_model_forward.1} parent=11 // pred_fallthru
        _
      // Predicated region
      $region49: #{bert_model_forward.1} parent=11 // pred_check
        %p480 = pneg %p286
      $region50: #{bert_model_forward.1} parent=11 // pred_check_branch
        %482 = sbr.rel (%p480) target = $region52
      $region51: #{bert_model_forward.1} parent=11 // pred_region
        _
      $region52: #{bert_model_forward.1} parent=11 // pred_fallthru
        _
      // Predicated region
      $region53: #{bert_model_forward.1} parent=11 // pred_check
        %p483 = pneg %p307
      $region54: #{bert_model_forward.1} parent=11 // pred_check_branch
        %485 = sbr.rel (%p483) target = $region56
      $region55: #{bert_model_forward.1} parent=11 // pred_region
        _
      $region56: #{bert_model_forward.1} parent=11 // pred_fallthru
        _
      // Predicated region
      $region57: #{bert_model_forward.1} parent=11 // pred_check
        %p486 = pneg %p328
      $region58: #{bert_model_forward.1} parent=11 // pred_check_branch
        %488 = sbr.rel (%p486) target = $region60
      $region59: #{bert_model_forward.1} parent=11 // pred_region
        _
      $region60: #{bert_model_forward.1} parent=11 // pred_fallthru
        _
      // Predicated region
      $region61: #{bert_model_forward.1} parent=11 // pred_check
        %p489 = pneg %p349
      $region62: #{bert_model_forward.1} parent=11 // pred_check_branch
        %491 = sbr.rel (%p489) target = $region64
      $region63: #{bert_model_forward.1} parent=11 // pred_region
        _
      $region64: #{bert_model_forward.1} parent=11 // pred_fallthru
        _
      // Predicated region
      $region65: #{bert_model_forward.1} parent=11 // pred_check
        %p492 = pneg %p370
      $region66: #{bert_model_forward.1} parent=11 // pred_check_branch
        %494 = sbr.rel (%p492) target = $region68
      $region67: #{bert_model_forward.1} parent=11 // pred_region
        _
      $region68: #{bert_model_forward.1} parent=11 // pred_fallthru
        _
      // Predicated region
      $region69: #{bert_model_forward.1} parent=11 // pred_check
        %p495 = pneg %p391
      $region70: #{bert_model_forward.1} parent=11 // pred_check_branch
        %497 = sbr.rel (%p495) target = $region72
      $region71: #{bert_model_forward.1} parent=11 // pred_region
        _
      $region72: #{bert_model_forward.1} parent=11 // pred_fallthru
        _
      // Predicated region
      $region73: #{bert_model_forward.1} parent=11 // pred_check
        %p498 = pneg %p412
      $region74: #{bert_model_forward.1} parent=11 // pred_check_branch
        %500 = sbr.rel (%p498) target = $region76
      $region75: #{bert_model_forward.1} parent=11 // pred_region
        _
      $region76: #{bert_model_forward.1} parent=11 // pred_fallthru
        _
    $region12: #{bert_model_forward.1} parent=5 // pred_fallthru
      _
    %p501 = scmp.lt.s32.totalorder %s24, 2
    // Predicated region
    $region77: #{bert_model_forward.1} parent=5 // pred_check
      %p502 = pneg %p501
    $region78: #{bert_model_forward.1} parent=5 // pred_check_branch
      %504 = sbr.rel (%p502) target = $region80
    $region79: #{bert_model_forward.1} parent=5 // pred_region
      // Predicated region
      $region81: #{bert_model_forward.1} parent=79 // pred_check
        %p505 = pneg %p44
      $region82: #{bert_model_forward.1} parent=79 // pred_check_branch
        %507 = sbr.rel (%p505) target = $region84
      $region83: #{bert_model_forward.1} parent=79 // pred_region
        %p508 = scmp.lt.s32.totalorder %s24, 1
        %s509 = scalar_select %p508, %s24, 1
        %s510 = smul.addr %s509, 8
        %s511 = scalar_lea.vmem %s0, %s510
      $region84: #{bert_model_forward.1} parent=79 // pred_fallthru
        _
      // Predicated region
      $region85: #{bert_model_forward.1} parent=79 // pred_check
        %p512 = pneg %p70
      $region86: #{bert_model_forward.1} parent=79 // pred_check_branch
        %514 = sbr.rel (%p512) target = $region88
      $region87: #{bert_model_forward.1} parent=79 // pred_region
        %p515 = scmp.lt.s32.totalorder %s24, 1
        %s516 = scalar_select %p515, %s24, 1
        %s517 = scalar_lea.vmem %s1, %s516
      $region88: #{bert_model_forward.1} parent=79 // pred_fallthru
        _
    $region80: #{bert_model_forward.1} parent=5 // pred_fallthru
      _
    %p518 = scmp.le.s32.totalorder 1, %s24
    %p519 = scmp.lt.s32.totalorder %s24, 3
    %p520 = pnand %p518, %p519
    %p521 = pneg %p520
    // Predicated region
    $region89: #{bert_model_forward.1} parent=5 // pred_check
      _
    $region90: #{bert_model_forward.1} parent=5 // pred_check_branch
      %523 = sbr.rel (%p520) target = $region92
    $region91: #{bert_model_forward.1} parent=5 // pred_region
      %s524 = ssub.s32 %s24, 1
      %p525 = scmp.lt.s32.totalorder %s29, 1
      %s526 = scalar_select %p525, %s29, 1
      %s527 = smul.addr %s526, 8
      %s528 = scalar_lea.vmem %s0, %s527
      %p529 = pneg %p50
      %p530 = pneg %p47
      %p531 = scmp.lt.s32.totalorder %s29, 1
      %s532 = scalar_select %p531, %s29, 1
      %s533 = scalar_lea.vmem %s1, %s532
      %p534 = pneg %p76
      %p535 = pneg %p73
      %p536 = pneg %p97
      %p537 = pneg %p94
      %p538 = pneg %p118
      %p539 = pneg %p115
      %p540 = pneg %p139
      %p541 = pneg %p136
      %p542 = pneg %p160
      %p543 = pneg %p157
      %p544 = pneg %p181
      %p545 = pneg %p178
      %p546 = pneg %p202
      %p547 = pneg %p199
      %p548 = pneg %p223
      %p549 = pneg %p220
      %p550 = pneg %p244
      %p551 = pneg %p241
      %p552 = pneg %p265
      %p553 = pneg %p262
      %p554 = pneg %p286
      %p555 = pneg %p283
      %p556 = pneg %p307
      %p557 = pneg %p304
      %p558 = pneg %p328
      %p559 = pneg %p325
      %p560 = pneg %p349
      %p561 = pneg %p346
      %p562 = pneg %p370
      %p563 = pneg %p367
      %p564 = pneg %p391
      %p565 = pneg %p388
      %p566 = pneg %p412
      %p567 = pneg %p409
      %p568 = pneg %p438
      %p569 = pneg %p435
      %p570 = scmp.lt.s32.totalorder %s29, 1
      %s571 = scalar_select %p570, %s29, 1
      %s572 = smul.addr %s571, 8
      %s573 = scalar_lea.vmem %s18, %s572
      %p574 = scmp.lt.s32.totalorder %s29, 1
      %s575 = scalar_select %p574, %s29, 1
      %s576 = smul.addr %s575, 8
      %s577 = scalar_lea.vmem %s0, %s576
      %p578 = scmp.lt.s32.totalorder %s29, 1
      %s579 = scalar_select %p578, %s29, 1
      %s580 = scalar_lea.vmem %s1, %s579
      %p581 = scmp.lt.s32.totalorder %s29, 1
      %s582 = scalar_select %p581, %s29, 1
      %s583 = smul.addr %s582, 8
      %s584 = scalar_lea.vmem %s18, %s583
      %v586 = vlaneseq
      %v587 = vand.u32 %v586, 127
      %vm588 = vcmp.lt.s32.totalorder %v587, 32
      %v589 = vsel %vm588, 1, 0
      %v590 = vcvt.s32.f32 %v589
      %vm591 = vcmp.ge.s32.totalorder %v587, 0
      %vm592 = vcmp.lt.s32.totalorder %v587, 16
      %vm593 = vmand %vm591, %vm592
      %v594 = vsel %vm593, 1, 0
      %v595 = vcvt.s32.f32 %v594
      %vm596 = vcmp.ge.s32.totalorder %v587, 16
      %vm597 = vmand %vm596, %vm588
      %v598 = vsel %vm597, 1, 0
      %v599 = vcvt.s32.f32 %v598
      %v600 = vld [vmem:[%s577] sm:$0xff]
      %v601 = vld [vmem:[%s580] sm:$0x1]
      %v602 = vpack.c.bf16 %v600, %v600
      %v603 = vld [vmem:[%s2] sm:$0xff]
      %v604 = vld [vmem:[%s2 + $0x8] sm:$0xf]
      %v605 = vld [vmem:[%s2 + $0xc] sm:$0xff]
      %v606 = vld [vmem:[%s2 + $0x14] sm:$0xf]
      %v607 = vld [vmem:[%s2 + $0x18] sm:$0xff]
      %v608 = vld [vmem:[%s2 + $0x20] sm:$0xf]
      %v609 = vld [vmem:[%s2 + $0x24] sm:$0xff]
      %v610 = vld [vmem:[%s2 + $0x2c] sm:$0xf]
      %v611 = vld [vmem:[%s2 + $0x30] sm:$0xff]
      %v612 = vld [vmem:[%s2 + $0x38] sm:$0xf]
      %v613 = vld [vmem:[%s2 + $0x3c] sm:$0xff]
      %v614 = vld [vmem:[%s2 + $0x44] sm:$0xf]
      %v615 = vld [vmem:[%s2 + $0x48] sm:$0xff]
      %v616 = vld [vmem:[%s2 + $0x50] sm:$0xf]
      %v617 = vld [vmem:[%s2 + $0x54] sm:$0xff]
      %v618 = vld [vmem:[%s2 + $0x5c] sm:$0xf]
      %v619 = vld [vmem:[%s2 + $0x60] sm:$0xff]
      %v620 = vld [vmem:[%s2 + $0x68] sm:$0xf]
      %v621 = vld [vmem:[%s2 + $0x6c] sm:$0xff]
      %v622 = vld [vmem:[%s2 + $0x74] sm:$0xf]
      %v623 = vld [vmem:[%s2 + $0x78] sm:$0xff]
      %v624 = vld [vmem:[%s2 + $0x80] sm:$0xf]
      %v625 = vld [vmem:[%s2 + $0x84] sm:$0xff]
      %v626 = vld [vmem:[%s2 + $0x8c] sm:$0xf]
      %v627 = vld [vmem:[%s2 + $0x90] sm:$0xff]
      %v628 = vld [vmem:[%s2 + $0x98] sm:$0xf]
      %v629 = vld [vmem:[%s2 + $0x9c] sm:$0xff]
      %v630 = vld [vmem:[%s2 + $0xa4] sm:$0xf]
      %v631 = vld [vmem:[%s2 + $0xa8] sm:$0xff]
      %v632 = vld [vmem:[%s2 + $0xb0] sm:$0xf]
      %v633 = vld [vmem:[%s2 + $0xb4] sm:$0xff]
      %v634 = vld [vmem:[%s2 + $0xbc] sm:$0xf]
      %v635 = vld [vmem:[%s3] sm:$0x7]
      %v637 = vlaneseq
      %v638 = vshrl.u32 %v637, 7
      %v639 = vsub.s32 0, %v638
      %v640 = vrot.slane %v635, %v639
      %v641 = vlaneseq
      %v642 = vshrl.u32 %v641, 7
      %v643 = vsub.s32 1, %v642
      %v644 = vrot.slane %v635, %v643
      %v645 = vlaneseq
      %v646 = vshrl.u32 %v645, 7
      %v647 = vsub.s32 2, %v646
      %v648 = vrot.slane %v635, %v647
      %v684 = vunpack.c.l.b16 %v603
      %v685 = vunpack.c.h.b16 %v603
      %v686 = vunpack.c.l.b16 %v604
      %v687 = vunpack.c.l.b16 %v605
      %v688 = vunpack.c.h.b16 %v605
      %v689 = vunpack.c.l.b16 %v606
      %v690 = vunpack.c.l.b16 %v607
      %v691 = vunpack.c.h.b16 %v607
      %v692 = vunpack.c.l.b16 %v608
      %v693 = vunpack.c.l.b16 %v609
      %v694 = vunpack.c.h.b16 %v609
      %v695 = vunpack.c.l.b16 %v610
      %v696 = vunpack.c.l.b16 %v611
      %v697 = vunpack.c.h.b16 %v611
      %v698 = vunpack.c.l.b16 %v612
      %v699 = vunpack.c.l.b16 %v613
      %v700 = vunpack.c.h.b16 %v613
      %v701 = vunpack.c.l.b16 %v614
      %v702 = vunpack.c.l.b16 %v615
      %v703 = vunpack.c.h.b16 %v615
      %v704 = vunpack.c.l.b16 %v616
      %v705 = vunpack.c.l.b16 %v617
      %v706 = vunpack.c.h.b16 %v617
      %v707 = vunpack.c.l.b16 %v618
      %v708 = vunpack.c.l.b16 %v619
      %v709 = vunpack.c.h.b16 %v619
      %v710 = vunpack.c.l.b16 %v620
      %v711 = vunpack.c.l.b16 %v621
      %v712 = vunpack.c.h.b16 %v621
      %v713 = vunpack.c.l.b16 %v622
      %v714 = vunpack.c.l.b16 %v623
      %v715 = vunpack.c.h.b16 %v623
      %v716 = vunpack.c.l.b16 %v624
      %v717 = vunpack.c.l.b16 %v625
      %v718 = vunpack.c.h.b16 %v625
      %v719 = vunpack.c.l.b16 %v626
      %v720 = vunpack.c.l.b16 %v627
      %v721 = vunpack.c.h.b16 %v627
      %v722 = vunpack.c.l.b16 %v628
      %v723 = vunpack.c.l.b16 %v629
      %v724 = vunpack.c.h.b16 %v629
      %v725 = vunpack.c.l.b16 %v630
      %v726 = vunpack.c.l.b16 %v631
      %v727 = vunpack.c.h.b16 %v631
      %v728 = vunpack.c.l.b16 %v632
      %v729 = vunpack.c.l.b16 %v633
      %v730 = vunpack.c.h.b16 %v633
      %v731 = vunpack.c.l.b16 %v634
      %v732 = vpack.c.b16 %v687, %v684
      %v733 = vpack.c.b16 %v688, %v685
      %v734 = vpack.c.b16 %v689, %v686
      %v735 = vpack.c.b16 %v693, %v690
      %v736 = vpack.c.b16 %v694, %v691
      %v737 = vpack.c.b16 %v695, %v692
      %v738 = vpack.c.b16 %v699, %v696
      %v739 = vpack.c.b16 %v700, %v697
      %v740 = vpack.c.b16 %v701, %v698
      %v741 = vpack.c.b16 %v705, %v702
      %v742 = vpack.c.b16 %v706, %v703
      %v743 = vpack.c.b16 %v707, %v704
      %v744 = vpack.c.b16 %v711, %v708
      %v745 = vpack.c.b16 %v712, %v709
      %v746 = vpack.c.b16 %v713, %v710
      %v747 = vpack.c.b16 %v717, %v714
      %v748 = vpack.c.b16 %v718, %v715
      %v749 = vpack.c.b16 %v719, %v716
      %v750 = vpack.c.b16 %v723, %v720
      %v751 = vpack.c.b16 %v724, %v721
      %v752 = vpack.c.b16 %v725, %v722
      %v753 = vpack.c.b16 %v729, %v726
      %v754 = vpack.c.b16 %v730, %v727
      %v755 = vpack.c.b16 %v731, %v728
      %780 = vmatprep.subr.bf16.mxu0 %v733
      %781 = vmatpush1.bf16.msra.mxu0 %v732
      %782 = vmatprep.subr.bf16.mxu0 %v736
      %783 = vmatpush1.bf16.msra.mxu0 %v735
      %784 = vmatprep.subr.bf16.mxu0 %v739
      %785 = vmatpush1.bf16.msra.mxu0 %v738
      %786 = vmatprep.subr.bf16.mxu0 %v742
      %787 = vmatpush1.bf16.msra.mxu0 %v741
      %788 = vmatprep.subr.bf16.mxu0 %v745
      %789 = vmatpush1.bf16.msra.mxu0 %v744
      %790 = vmatprep.subr.bf16.mxu0 %v748
      %791 = vmatpush1.bf16.msra.mxu0 %v747
      %792 = vmatprep.subr.bf16.mxu0 %v751
      %793 = vmatpush1.bf16.msra.mxu0 %v750
      %794 = vmatprep.subr.bf16.mxu0 %v754
      %795 = vmatpush1.bf16.msra.mxu0 %v753
      %796 = vmatprep.subr.bf16.mxu0 0
      %797 = vmatpush1.bf16.msra.mxu0 0
      %798 = vmatprep.subr.bf16.mxu0 0
      %799 = vmatpush1.bf16.msra.mxu0 0
      %800 = vmatprep.subr.bf16.mxu0 0
      %801 = vmatpush1.bf16.msra.mxu0 0
      %802 = vmatprep.subr.bf16.mxu0 0
      %803 = vmatpush1.bf16.msra.mxu0 0
      %804 = vmatprep.subr.bf16.mxu0 0
      %805 = vmatpush1.bf16.msra.mxu0 0
      %806 = vmatprep.subr.bf16.mxu0 0
      %807 = vmatpush1.bf16.msra.mxu0 0
      %808 = vmatprep.subr.bf16.mxu0 0
      %809 = vmatpush1.bf16.msra.mxu0 0
      %810 = vmatprep.subr.bf16.mxu0 0
      %811 = vmatpush1.bf16.msra.mxu0 0
      %812 = vmatprep.mubr.bf16.mxu0 0
      %813 = vmatmul.mubr.bf16.gmra.mrb[0].mxu0 %v602
      %v814 = vpop.f32.mrb[0].mxu0
      %v815 = vadd.f32 %v640, %v814
      %v816 = vpop.f32.mrb[0].mxu0
      %v817 = vadd.f32 %v644, %v816
      %v818 = vpop.f32.mrb[0].mxu0
      %v819 = vpop.f32.mrb[0].mxu0
      %820 = vdwg.mxu0
      %821 = vmatprep.subr.bf16.mxu0 0
      %822 = vmatpush1.bf16.msra.mxu0 %v734
      %823 = vmatprep.subr.bf16.mxu0 0
      %824 = vmatpush1.bf16.msra.mxu0 %v737
      %825 = vmatprep.subr.bf16.mxu0 0
      %826 = vmatpush1.bf16.msra.mxu0 %v740
      %827 = vmatprep.subr.bf16.mxu0 0
      %828 = vmatpush1.bf16.msra.mxu0 %v743
      %829 = vmatprep.subr.bf16.mxu0 0
      %830 = vmatpush1.bf16.msra.mxu0 %v746
      %831 = vmatprep.subr.bf16.mxu0 0
      %832 = vmatpush1.bf16.msra.mxu0 %v749
      %833 = vmatprep.subr.bf16.mxu0 0
      %834 = vmatpush1.bf16.msra.mxu0 %v752
      %835 = vmatprep.subr.bf16.mxu0 0
      %836 = vmatpush1.bf16.msra.mxu0 %v755
      %837 = vmatprep.subr.bf16.mxu0 0
      %838 = vmatpush1.bf16.msra.mxu0 0
      %839 = vmatprep.subr.bf16.mxu0 0
      %840 = vmatpush1.bf16.msra.mxu0 0
      %841 = vmatprep.subr.bf16.mxu0 0
      %842 = vmatpush1.bf16.msra.mxu0 0
      %843 = vmatprep.subr.bf16.mxu0 0
      %844 = vmatpush1.bf16.msra.mxu0 0
      %845 = vmatprep.subr.bf16.mxu0 0
      %846 = vmatpush1.bf16.msra.mxu0 0
      %847 = vmatprep.subr.bf16.mxu0 0
      %848 = vmatpush1.bf16.msra.mxu0 0
      %849 = vmatprep.subr.bf16.mxu0 0
      %850 = vmatpush1.bf16.msra.mxu0 0
      %851 = vmatprep.subr.bf16.mxu0 0
      %852 = vmatpush1.bf16.msra.mxu0 0
      %853 = vmatprep.mubr.bf16.mxu0 0
      %854 = vmatmul.mubr.bf16.gmra.mrb[0].mxu0 %v602
      %v855 = vpop.f32.mrb[0].mxu0
      %v856 = vadd.f32 %v648, %v855
      %v857 = vpop.f32.mrb[0].mxu0
      %v858 = vpop.f32.mrb[0].mxu0
      %v859 = vpop.f32.mrb[0].mxu0
      %860 = vdwg.mxu0
      %v861 = vpack.c.bf16 %v817, %v817
      %v862 = vpack.c.bf16 %v856, %v856
      %v863 = vmul.f32 %v815, %v595
      %v864 = vpack.c.bf16 %v863, %v863
      %v866 = vlaneseq
      %v867 = vshrl.u32 %v866, 7
      %v868 = vsub.s32 0, %v867
      %v869 = vrot.slane %v601, %v868
      %871 = vmatprep.subr.bf16.mxu0 0
      %872 = vmatpush1.bf16.xpose.msra.mxu0 %v861
      %873 = vmatprep.subr.bf16.mxu0 0
      %874 = vmatpush1.bf16.xpose.msra.mxu0 0
      %875 = vmatprep.subr.bf16.mxu0 0
      %876 = vmatpush1.bf16.xpose.msra.mxu0 0
      %877 = vmatprep.subr.bf16.mxu0 0
      %878 = vmatpush1.bf16.xpose.msra.mxu0 0
      %879 = vmatprep.subr.bf16.mxu0 0
      %880 = vmatpush1.bf16.xpose.msra.mxu0 0
      %881 = vmatprep.subr.bf16.mxu0 0
      %882 = vmatpush1.bf16.xpose.msra.mxu0 0
      %883 = vmatprep.subr.bf16.mxu0 0
      %884 = vmatpush1.bf16.xpose.msra.mxu0 0
      %885 = vmatprep.subr.bf16.mxu0 0
      %886 = vmatpush1.bf16.xpose.msra.mxu0 0
      %887 = vmatprep.subr.bf16.mxu0 0
      %888 = vmatpush1.bf16.xpose.msra.mxu0 0
      %889 = vmatprep.subr.bf16.mxu0 0
      %890 = vmatpush1.bf16.xpose.msra.mxu0 0
      %891 = vmatprep.subr.bf16.mxu0 0
      %892 = vmatpush1.bf16.xpose.msra.mxu0 0
      %893 = vmatprep.subr.bf16.mxu0 0
      %894 = vmatpush1.bf16.xpose.msra.mxu0 0
      %895 = vmatprep.subr.bf16.mxu0 0
      %896 = vmatpush1.bf16.xpose.msra.mxu0 0
      %897 = vmatprep.subr.bf16.mxu0 0
      %898 = vmatpush1.bf16.xpose.msra.mxu0 0
      %899 = vmatprep.subr.bf16.mxu0 0
      %900 = vmatpush1.bf16.xpose.msra.mxu0 0
      %901 = vmatprep.subr.bf16.mxu0 0
      %902 = vmatpush1.bf16.xpose.msra.mxu0 0
      %903 = vmatprep.mubr.bf16.mxu0 0
      %904 = vmatmul.mubr.bf16.gmra.mrb[0].mxu0 %v864
      %v905 = vpop.f32.mrb[0].mxu0
      %v906 = vadd.f32 %v869, %v905
      %v907 = vpop.f32.mrb[0].mxu0
      %v908 = vpop.f32.mrb[0].mxu0
      %v909 = vpop.f32.mrb[0].mxu0
      %910 = vdwg.mxu0
      %vm911 = vcmask 64512
      %v912 = vsel %vm911, %v906, -inf
      %913 = vmax.xlane.f32.xlu0 %v912
      %v914 = vpop.xlane.xlu0 %913
      %v915 = vsub.f32 %v906, %v914
      %v916 = vmul.f32 %v915, 1.442695
      %v917 = vpow.pop %v916
      %v918 = vsel %vm911, %v917, 0.0
      %919 = vadd.xlane.f32.xlu0 %v918
      %v920 = vpop.xlane.xlu0 %919
      %v921 = vrcp.pop %v920
      %v922 = vmul.f32 %v917, %v921
      %v923 = vpack.c.bf16 %v922, %v922
      %v925 = vsel %vm911, %v923, 0
      %vm927 = vcmask 1043456
      %v929 = vsel %vm927, %v862, 0
      %931 = vmatprep.subr.bf16.mxu0 0
      %932 = vmatpush1.bf16.msra.mxu0 %v929
      %933 = vmatprep.subr.bf16.mxu0 0
      %934 = vmatpush1.bf16.msra.mxu0 0
      %935 = vmatprep.subr.bf16.mxu0 0
      %936 = vmatpush1.bf16.msra.mxu0 0
      %937 = vmatprep.subr.bf16.mxu0 0
      %938 = vmatpush1.bf16.msra.mxu0 0
      %939 = vmatprep.subr.bf16.mxu0 0
      %940 = vmatpush1.bf16.msra.mxu0 0
      %941 = vmatprep.subr.bf16.mxu0 0
      %942 = vmatpush1.bf16.msra.mxu0 0
      %943 = vmatprep.subr.bf16.mxu0 0
      %944 = vmatpush1.bf16.msra.mxu0 0
      %945 = vmatprep.subr.bf16.mxu0 0
      %946 = vmatpush1.bf16.msra.mxu0 0
      %947 = vmatprep.subr.bf16.mxu0 0
      %948 = vmatpush1.bf16.msra.mxu0 0
      %949 = vmatprep.subr.bf16.mxu0 0
      %950 = vmatpush1.bf16.msra.mxu0 0
      %951 = vmatprep.subr.bf16.mxu0 0
      %952 = vmatpush1.bf16.msra.mxu0 0
      %953 = vmatprep.subr.bf16.mxu0 0
      %954 = vmatpush1.bf16.msra.mxu0 0
      %955 = vmatprep.subr.bf16.mxu0 0
      %956 = vmatpush1.bf16.msra.mxu0 0
      %957 = vmatprep.subr.bf16.mxu0 0
      %958 = vmatpush1.bf16.msra.mxu0 0
      %959 = vmatprep.subr.bf16.mxu0 0
      %960 = vmatpush1.bf16.msra.mxu0 0
      %961 = vmatprep.subr.bf16.mxu0 0
      %962 = vmatpush1.bf16.msra.mxu0 0
      %963 = vmatprep.mubr.bf16.mxu0 0
      %964 = vmatmul.mubr.bf16.gmra.mrb[0].mxu0 %v925
      %v965 = vpop.f32.mrb[0].mxu0
      %v966 = vadd.f32 0.0, %v965
      %v967 = vpop.f32.mrb[0].mxu0
      %v968 = vpop.f32.mrb[0].mxu0
      %v969 = vpop.f32.mrb[0].mxu0
      %970 = vdwg.mxu0
      %v971 = vmul.f32 %v595, %v966
      %v972 = vadd.f32 %v971, 0.0
      %v973 = vmul.f32 %v815, %v599
      %v974 = vpack.c.bf16 %v973, %v973
      %975 = vmatprep.subr.bf16.mxu0 0
      %976 = vmatpush1.bf16.xpose.msra.mxu0 %v861
      %977 = vmatprep.subr.bf16.mxu0 0
      %978 = vmatpush1.bf16.xpose.msra.mxu0 0
      %979 = vmatprep.subr.bf16.mxu0 0
      %980 = vmatpush1.bf16.xpose.msra.mxu0 0
      %981 = vmatprep.subr.bf16.mxu0 0
      %982 = vmatpush1.bf16.xpose.msra.mxu0 0
      %983 = vmatprep.subr.bf16.mxu0 0
      %984 = vmatpush1.bf16.xpose.msra.mxu0 0
      %985 = vmatprep.subr.bf16.mxu0 0
      %986 = vmatpush1.bf16.xpose.msra.mxu0 0
      %987 = vmatprep.subr.bf16.mxu0 0
      %988 = vmatpush1.bf16.xpose.msra.mxu0 0
      %989 = vmatprep.subr.bf16.mxu0 0
      %990 = vmatpush1.bf16.xpose.msra.mxu0 0
      %991 = vmatprep.subr.bf16.mxu0 0
      %992 = vmatpush1.bf16.xpose.msra.mxu0 0
      %993 = vmatprep.subr.bf16.mxu0 0
      %994 = vmatpush1.bf16.xpose.msra.mxu0 0
      %995 = vmatprep.subr.bf16.mxu0 0
      %996 = vmatpush1.bf16.xpose.msra.mxu0 0
      %997 = vmatprep.subr.bf16.mxu0 0
      %998 = vmatpush1.bf16.xpose.msra.mxu0 0
      %999 = vmatprep.subr.bf16.mxu0 0
      %1000 = vmatpush1.bf16.xpose.msra.mxu0 0
      %1001 = vmatprep.subr.bf16.mxu0 0
      %1002 = vmatpush1.bf16.xpose.msra.mxu0 0
      %1003 = vmatprep.subr.bf16.mxu0 0
      %1004 = vmatpush1.bf16.xpose.msra.mxu0 0
      %1005 = vmatprep.subr.bf16.mxu0 0
      %1006 = vmatpush1.bf16.xpose.msra.mxu0 0
      %1007 = vmatprep.mubr.bf16.mxu0 0
      %1008 = vmatmul.mubr.bf16.gmra.mrb[0].mxu0 %v974
      %v1009 = vpop.f32.mrb[0].mxu0
      %v1010 = vadd.f32 %v869, %v1009
      %v1011 = vpop.f32.mrb[0].mxu0
      %v1012 = vpop.f32.mrb[0].mxu0
      %v1013 = vpop.f32.mrb[0].mxu0
      %1014 = vdwg.mxu0
      %v1015 = vsel %vm911, %v1010, -inf
      %1016 = vmax.xlane.f32.xlu0 %v1015
      %v1017 = vpop.xlane.xlu0 %1016
      %v1018 = vsub.f32 %v1010, %v1017
      %v1019 = vmul.f32 %v1018, 1.442695
      %v1020 = vpow.pop %v1019
      %v1021 = vsel %vm911, %v1020, 0.0
      %1022 = vadd.xlane.f32.xlu0 %v1021
      %v1023 = vpop.xlane.xlu0 %1022
      %v1024 = vrcp.pop %v1023
      %v1025 = vmul.f32 %v1020, %v1024
      %v1026 = vpack.c.bf16 %v1025, %v1025
      %v1028 = vsel %vm911, %v1026, 0
      %1030 = vmatprep.subr.bf16.mxu0 0
      %1031 = vmatpush1.bf16.msra.mxu0 %v929
      %1032 = vmatprep.subr.bf16.mxu0 0
      %1033 = vmatpush1.bf16.msra.mxu0 0
      %1034 = vmatprep.subr.bf16.mxu0 0
      %1035 = vmatpush1.bf16.msra.mxu0 0
      %1036 = vmatprep.subr.bf16.mxu0 0
      %1037 = vmatpush1.bf16.msra.mxu0 0
      %1038 = vmatprep.subr.bf16.mxu0 0
      %1039 = vmatpush1.bf16.msra.mxu0 0
      %1040 = vmatprep.subr.bf16.mxu0 0
      %1041 = vmatpush1.bf16.msra.mxu0 0
      %1042 = vmatprep.subr.bf16.mxu0 0
      %1043 = vmatpush1.bf16.msra.mxu0 0
      %1044 = vmatprep.subr.bf16.mxu0 0
      %1045 = vmatpush1.bf16.msra.mxu0 0
      %1046 = vmatprep.subr.bf16.mxu0 0
      %1047 = vmatpush1.bf16.msra.mxu0 0
      %1048 = vmatprep.subr.bf16.mxu0 0
      %1049 = vmatpush1.bf16.msra.mxu0 0
      %1050 = vmatprep.subr.bf16.mxu0 0
      %1051 = vmatpush1.bf16.msra.mxu0 0
      %1052 = vmatprep.subr.bf16.mxu0 0
      %1053 = vmatpush1.bf16.msra.mxu0 0
      %1054 = vmatprep.subr.bf16.mxu0 0
      %1055 = vmatpush1.bf16.msra.mxu0 0
      %1056 = vmatprep.subr.bf16.mxu0 0
      %1057 = vmatpush1.bf16.msra.mxu0 0
      %1058 = vmatprep.subr.bf16.mxu0 0
      %1059 = vmatpush1.bf16.msra.mxu0 0
      %1060 = vmatprep.subr.bf16.mxu0 0
      %1061 = vmatpush1.bf16.msra.mxu0 0
      %1062 = vmatprep.mubr.bf16.mxu0 0
      %1063 = vmatmul.mubr.bf16.gmra.mrb[0].mxu0 %v1028
      %v1064 = vpop.f32.mrb[0].mxu0
      %v1065 = vadd.f32 0.0, %v1064
      %v1066 = vpop.f32.mrb[0].mxu0
      %v1067 = vpop.f32.mrb[0].mxu0
      %v1068 = vpop.f32.mrb[0].mxu0
      %1069 = vdwg.mxu0
      %v1070 = vmul.f32 %v599, %v1065
      %v1071 = vadd.f32 %v972, %v1070
      %v1072 = vpack.c.bf16 %v1071, %v1071
      %v1073 = vld [vmem:[%s4] sm:$0xf]
      %v1074 = vld [vmem:[%s4 + $0x4] sm:$0xf]
      %v1075 = vld [vmem:[%s4 + $0x8] sm:$0xf]
      %v1076 = vld [vmem:[%s4 + $0xc] sm:$0xf]
      %v1077 = vld [vmem:[%s4 + $0x10] sm:$0xf]
      %v1078 = vld [vmem:[%s4 + $0x14] sm:$0xf]
      %v1079 = vld [vmem:[%s4 + $0x18] sm:$0xf]
      %v1080 = vld [vmem:[%s4 + $0x1c] sm:$0xf]
      %v1081 = vld [vmem:[%s4 + $0x20] sm:$0xf]
      %v1082 = vld [vmem:[%s4 + $0x24] sm:$0xf]
      %v1083 = vld [vmem:[%s4 + $0x28] sm:$0xf]
      %v1084 = vld [vmem:[%s4 + $0x2c] sm:$0xf]
      %v1085 = vld [vmem:[%s4 + $0x30] sm:$0xf]
      %v1086 = vld [vmem:[%s4 + $0x34] sm:$0xf]
      %v1087 = vld [vmem:[%s4 + $0x38] sm:$0xf]
      %v1088 = vld [vmem:[%s4 + $0x3c] sm:$0xf]
      %v1089 = vld [vmem:[%s5] sm:$0x1]
      %v1091 = vlaneseq
      %v1092 = vshrl.u32 %v1091, 7
      %v1093 = vsub.s32 0, %v1092
      %v1094 = vrot.slane %v1089, %v1093
      %v1112 = vunpack.c.l.b16 %v1073
      %v1113 = vunpack.c.l.b16 %v1074
      %v1114 = vunpack.c.l.b16 %v1075
      %v1115 = vunpack.c.l.b16 %v1076
      %v1116 = vunpack.c.l.b16 %v1077
      %v1117 = vunpack.c.l.b16 %v1078
      %v1118 = vunpack.c.l.b16 %v1079
      %v1119 = vunpack.c.l.b16 %v1080
      %v1120 = vunpack.c.l.b16 %v1081
      %v1121 = vunpack.c.l.b16 %v1082
      %v1122 = vunpack.c.l.b16 %v1083
      %v1123 = vunpack.c.l.b16 %v1084
      %v1124 = vunpack.c.l.b16 %v1085
      %v1125 = vunpack.c.l.b16 %v1086
      %v1126 = vunpack.c.l.b16 %v1087
      %v1127 = vunpack.c.l.b16 %v1088
      %v1128 = vpack.c.b16 %v1113, %v1112
      %v1129 = vpack.c.b16 %v1115, %v1114
      %v1130 = vpack.c.b16 %v1117, %v1116
      %v1131 = vpack.c.b16 %v1119, %v1118
      %v1132 = vpack.c.b16 %v1121, %v1120
      %v1133 = vpack.c.b16 %v1123, %v1122
      %v1134 = vpack.c.b16 %v1125, %v1124
      %v1135 = vpack.c.b16 %v1127, %v1126
      %1144 = vmatprep.subr.bf16.mxu0 0
      %1145 = vmatpush1.bf16.msra.mxu0 %v1128
      %1146 = vmatprep.subr.bf16.mxu0 0
      %1147 = vmatpush1.bf16.msra.mxu0 %v1129
      %1148 = vmatprep.subr.bf16.mxu0 0
      %1149 = vmatpush1.bf16.msra.mxu0 %v1130
      %1150 = vmatprep.subr.bf16.mxu0 0
      %1151 = vmatpush1.bf16.msra.mxu0 %v1131
      %1152 = vmatprep.subr.bf16.mxu0 0
      %1153 = vmatpush1.bf16.msra.mxu0 %v1132
      %1154 = vmatprep.subr.bf16.mxu0 0
      %1155 = vmatpush1.bf16.msra.mxu0 %v1133
      %1156 = vmatprep.subr.bf16.mxu0 0
      %1157 = vmatpush1.bf16.msra.mxu0 %v1134
      %1158 = vmatprep.subr.bf16.mxu0 0
      %1159 = vmatpush1.bf16.msra.mxu0 %v1135
      %1160 = vmatprep.subr.bf16.mxu0 0
      %1161 = vmatpush1.bf16.msra.mxu0 0
      %1162 = vmatprep.subr.bf16.mxu0 0
      %1163 = vmatpush1.bf16.msra.mxu0 0
      %1164 = vmatprep.subr.bf16.mxu0 0
      %1165 = vmatpush1.bf16.msra.mxu0 0
      %1166 = vmatprep.subr.bf16.mxu0 0
      %1167 = vmatpush1.bf16.msra.mxu0 0
      %1168 = vmatprep.subr.bf16.mxu0 0
      %1169 = vmatpush1.bf16.msra.mxu0 0
      %1170 = vmatprep.subr.bf16.mxu0 0
      %1171 = vmatpush1.bf16.msra.mxu0 0
      %1172 = vmatprep.subr.bf16.mxu0 0
      %1173 = vmatpush1.bf16.msra.mxu0 0
      %1174 = vmatprep.subr.bf16.mxu0 0
      %1175 = vmatpush1.bf16.msra.mxu0 0
      %1176 = vmatprep.mubr.bf16.mxu0 0
      %1177 = vmatmul.mubr.bf16.gmra.mrb[0].mxu0 %v1072
      %v1178 = vpop.f32.mrb[0].mxu0
      %v1179 = vadd.f32 %v1094, %v1178
      %v1180 = vpop.f32.mrb[0].mxu0
      %v1181 = vpop.f32.mrb[0].mxu0
      %v1182 = vpop.f32.mrb[0].mxu0
      %1183 = vdwg.mxu0
      %v1184 = vadd.f32 %v600, %v1179
      %v1185 = vld [vmem:[%s6] sm:$0x1]
      %v1186 = vld [vmem:[%s7] sm:$0x1]
      %1187 = vadd.xlane.f32.xlu0 %v1184
      %v1188 = vpop.xlane.xlu0 %1187
      %v1189 = vmul.f32 %v1188, 0.03125
      %v1190 = vsub.f32 %v1184, %v1189
      %v1191 = vmul.f32 %v1190, %v590
      %v1192 = vmul.f32 %v1191, %v1191
      %1193 = vadd.xlane.f32.xlu0 %v1192
      %v1194 = vpop.xlane.xlu0 %1193
      %v1195 = vmul.f32 %v1194, 0.03125
      %v1196 = vadd.f32 %v1195, 1e-12
      %v1197 = vrsqrt.pop %v1196
      %v1198 = vmul.f32 %v1191, %v1197
      %v1200 = vlaneseq
      %v1201 = vshrl.u32 %v1200, 7
      %v1202 = vsub.s32 0, %v1201
      %v1203 = vrot.slane %v1185, %v1202
      %v1205 = vmul.f32 %v1198, %v1203
      %v1207 = vlaneseq
      %v1208 = vshrl.u32 %v1207, 7
      %v1209 = vsub.s32 0, %v1208
      %v1210 = vrot.slane %v1186, %v1209
      %v1212 = vadd.f32 %v1205, %v1210
      %v1213 = vpack.c.bf16 %v1212, %v1212
      %v1214 = vld [vmem:[%s8] sm:$0xf]
      %v1215 = vld [vmem:[%s8 + $0x4] sm:$0xf]
      %v1216 = vld [vmem:[%s8 + $0x8] sm:$0xf]
      %v1217 = vld [vmem:[%s8 + $0xc] sm:$0xf]
      %v1218 = vld [vmem:[%s8 + $0x10] sm:$0xf]
      %v1219 = vld [vmem:[%s8 + $0x14] sm:$0xf]
      %v1220 = vld [vmem:[%s8 + $0x18] sm:$0xf]
      %v1221 = vld [vmem:[%s8 + $0x1c] sm:$0xf]
      %v1222 = vld [vmem:[%s8 + $0x20] sm:$0xf]
      %v1223 = vld [vmem:[%s8 + $0x24] sm:$0xf]
      %v1224 = vld [vmem:[%s8 + $0x28] sm:$0xf]
      %v1225 = vld [vmem:[%s8 + $0x2c] sm:$0xf]
      %v1226 = vld [vmem:[%s8 + $0x30] sm:$0xf]
      %v1227 = vld [vmem:[%s8 + $0x34] sm:$0xf]
      %v1228 = vld [vmem:[%s8 + $0x38] sm:$0xf]
      %v1229 = vld [vmem:[%s8 + $0x3c] sm:$0xf]
      %v1230 = vld [vmem:[%s9] sm:$0x1]
      %v1232 = vlaneseq
      %v1233 = vshrl.u32 %v1232, 7
      %v1234 = vsub.s32 0, %v1233
      %v1235 = vrot.slane %v1230, %v1234
      %v1253 = vunpack.c.l.b16 %v1214
      %v1254 = vunpack.c.l.b16 %v1215
      %v1255 = vunpack.c.l.b16 %v1216
      %v1256 = vunpack.c.l.b16 %v1217
      %v1257 = vunpack.c.l.b16 %v1218
      %v1258 = vunpack.c.l.b16 %v1219
      %v1259 = vunpack.c.l.b16 %v1220
      %v1260 = vunpack.c.l.b16 %v1221
      %v1261 = vunpack.c.l.b16 %v1222
      %v1262 = vunpack.c.l.b16 %v1223
      %v1263 = vunpack.c.l.b16 %v1224
      %v1264 = vunpack.c.l.b16 %v1225
      %v1265 = vunpack.c.l.b16 %v1226
      %v1266 = vunpack.c.l.b16 %v1227
      %v1267 = vunpack.c.l.b16 %v1228
      %v1268 = vunpack.c.l.b16 %v1229
      %v1269 = vpack.c.b16 %v1254, %v1253
      %v1270 = vpack.c.b16 %v1256, %v1255
      %v1271 = vpack.c.b16 %v1258, %v1257
      %v1272 = vpack.c.b16 %v1260, %v1259
      %v1273 = vpack.c.b16 %v1262, %v1261
      %v1274 = vpack.c.b16 %v1264, %v1263
      %v1275 = vpack.c.b16 %v1266, %v1265
      %v1276 = vpack.c.b16 %v1268, %v1267
      %1285 = vmatprep.subr.bf16.mxu0 0
      %1286 = vmatpush1.bf16.msra.mxu0 %v1269
      %1287 = vmatprep.subr.bf16.mxu0 0
      %1288 = vmatpush1.bf16.msra.mxu0 %v1270
      %1289 = vmatprep.subr.bf16.mxu0 0
      %1290 = vmatpush1.bf16.msra.mxu0 %v1271
      %1291 = vmatprep.subr.bf16.mxu0 0
      %1292 = vmatpush1.bf16.msra.mxu0 %v1272
      %1293 = vmatprep.subr.bf16.mxu0 0
      %1294 = vmatpush1.bf16.msra.mxu0 %v1273
      %1295 = vmatprep.subr.bf16.mxu0 0
      %1296 = vmatpush1.bf16.msra.mxu0 %v1274
      %1297 = vmatprep.subr.bf16.mxu0 0
      %1298 = vmatpush1.bf16.msra.mxu0 %v1275
      %1299 = vmatprep.subr.bf16.mxu0 0
      %1300 = vmatpush1.bf16.msra.mxu0 %v1276
      %1301 = vmatprep.subr.bf16.mxu0 0
      %1302 = vmatpush1.bf16.msra.mxu0 0
      %1303 = vmatprep.subr.bf16.mxu0 0
      %1304 = vmatpush1.bf16.msra.mxu0 0
      %1305 = vmatprep.subr.bf16.mxu0 0
      %1306 = vmatpush1.bf16.msra.mxu0 0
      %1307 = vmatprep.subr.bf16.mxu0 0
      %1308 = vmatpush1.bf16.msra.mxu0 0
      %1309 = vmatprep.subr.bf16.mxu0 0
      %1310 = vmatpush1.bf16.msra.mxu0 0
      %1311 = vmatprep.subr.bf16.mxu0 0
      %1312 = vmatpush1.bf16.msra.mxu0 0
      %1313 = vmatprep.subr.bf16.mxu0 0
      %1314 = vmatpush1.bf16.msra.mxu0 0
      %1315 = vmatprep.subr.bf16.mxu0 0
      %1316 = vmatpush1.bf16.msra.mxu0 0
      %1317 = vmatprep.mubr.bf16.mxu0 0
      %1318 = vmatmul.mubr.bf16.gmra.mrb[0].mxu0 %v1213
      %v1319 = vpop.f32.mrb[0].mxu0
      %v1320 = vadd.f32 %v1235, %v1319
      %v1321 = vpop.f32.mrb[0].mxu0
      %v1322 = vpop.f32.mrb[0].mxu0
      %v1323 = vpop.f32.mrb[0].mxu0
      %1324 = vdwg.mxu0
      %v1325 = vmul.f32 %v1320, %v1320
      %v1326 = vmul.f32 %v1320, %v1325
      %v1327 = vmul.f32 %v1326, 0.044715
      %v1328 = vadd.f32 %v1320, %v1327
      %v1329 = vmul.f32 %v1328, 0.7978846
      %v1330 = vtanh.pop %v1329
      %v1331 = vadd.f32 %v1330, 1.0
      %v1332 = vmul.f32 %v1331, 0.5
      %v1333 = vmul.f32 %v1320, %v1332
      %v1334 = vpack.c.bf16 %v1333, %v1333
      %v1335 = vld [vmem:[%s10] sm:$0xf]
      %v1336 = vld [vmem:[%s10 + $0x4] sm:$0xf]
      %v1337 = vld [vmem:[%s10 + $0x8] sm:$0xf]
      %v1338 = vld [vmem:[%s10 + $0xc] sm:$0xf]
      %v1339 = vld [vmem:[%s10 + $0x10] sm:$0xf]
      %v1340 = vld [vmem:[%s10 + $0x14] sm:$0xf]
      %v1341 = vld [vmem:[%s10 + $0x18] sm:$0xf]
      %v1342 = vld [vmem:[%s10 + $0x1c] sm:$0xf]
      %v1343 = vld [vmem:[%s10 + $0x20] sm:$0xf]
      %v1344 = vld [vmem:[%s10 + $0x24] sm:$0xf]
      %v1345 = vld [vmem:[%s10 + $0x28] sm:$0xf]
      %v1346 = vld [vmem:[%s10 + $0x2c] sm:$0xf]
      %v1347 = vld [vmem:[%s10 + $0x30] sm:$0xf]
      %v1348 = vld [vmem:[%s10 + $0x34] sm:$0xf]
      %v1349 = vld [vmem:[%s10 + $0x38] sm:$0xf]
      %v1350 = vld [vmem:[%s10 + $0x3c] sm:$0xf]
      %v1351 = vld [vmem:[%s11] sm:$0x1]
      %v1353 = vlaneseq
      %v1354 = vshrl.u32 %v1353, 7
      %v1355 = vsub.s32 0, %v1354
      %v1356 = vrot.slane %v1351, %v1355
      %v1374 = vunpack.c.l.b16 %v1335
      %v1375 = vunpack.c.l.b16 %v1336
      %v1376 = vunpack.c.l.b16 %v1337
      %v1377 = vunpack.c.l.b16 %v1338
      %v1378 = vunpack.c.l.b16 %v1339
      %v1379 = vunpack.c.l.b16 %v1340
      %v1380 = vunpack.c.l.b16 %v1341
      %v1381 = vunpack.c.l.b16 %v1342
      %v1382 = vunpack.c.l.b16 %v1343
      %v1383 = vunpack.c.l.b16 %v1344
      %v1384 = vunpack.c.l.b16 %v1345
      %v1385 = vunpack.c.l.b16 %v1346
      %v1386 = vunpack.c.l.b16 %v1347
      %v1387 = vunpack.c.l.b16 %v1348
      %v1388 = vunpack.c.l.b16 %v1349
      %v1389 = vunpack.c.l.b16 %v1350
      %v1390 = vpack.c.b16 %v1375, %v1374
      %v1391 = vpack.c.b16 %v1377, %v1376
      %v1392 = vpack.c.b16 %v1379, %v1378
      %v1393 = vpack.c.b16 %v1381, %v1380
      %v1394 = vpack.c.b16 %v1383, %v1382
      %v1395 = vpack.c.b16 %v1385, %v1384
      %v1396 = vpack.c.b16 %v1387, %v1386
      %v1397 = vpack.c.b16 %v1389, %v1388
      %1406 = vmatprep.subr.bf16.mxu0 0
      %1407 = vmatpush1.bf16.msra.mxu0 %v1390
      %1408 = vmatprep.subr.bf16.mxu0 0
      %1409 = vmatpush1.bf16.msra.mxu0 %v1391
      %1410 = vmatprep.subr.bf16.mxu0 0
      %1411 = vmatpush1.bf16.msra.mxu0 %v1392
      %1412 = vmatprep.subr.bf16.mxu0 0
      %1413 = vmatpush1.bf16.msra.mxu0 %v1393
      %1414 = vmatprep.subr.bf16.mxu0 0
      %1415 = vmatpush1.bf16.msra.mxu0 %v1394
      %1416 = vmatprep.subr.bf16.mxu0 0
      %1417 = vmatpush1.bf16.msra.mxu0 %v1395
      %1418 = vmatprep.subr.bf16.mxu0 0
      %1419 = vmatpush1.bf16.msra.mxu0 %v1396
      %1420 = vmatprep.subr.bf16.mxu0 0
      %1421 = vmatpush1.bf16.msra.mxu0 %v1397
      %1422 = vmatprep.subr.bf16.mxu0 0
      %1423 = vmatpush1.bf16.msra.mxu0 0
      %1424 = vmatprep.subr.bf16.mxu0 0
      %1425 = vmatpush1.bf16.msra.mxu0 0
      %1426 = vmatprep.subr.bf16.mxu0 0
      %1427 = vmatpush1.bf16.msra.mxu0 0
      %1428 = vmatprep.subr.bf16.mxu0 0
      %1429 = vmatpush1.bf16.msra.mxu0 0
      %1430 = vmatprep.subr.bf16.mxu0 0
      %1431 = vmatpush1.bf16.msra.mxu0 0
      %1432 = vmatprep.subr.bf16.mxu0 0
      %1433 = vmatpush1.bf16.msra.mxu0 0
      %1434 = vmatprep.subr.bf16.mxu0 0
      %1435 = vmatpush1.bf16.msra.mxu0 0
      %1436 = vmatprep.subr.bf16.mxu0 0
      %1437 = vmatpush1.bf16.msra.mxu0 0
      %1438 = vmatprep.mubr.bf16.mxu0 0
      %1439 = vmatmul.mubr.bf16.gmra.mrb[0].mxu0 %v1334
      %v1440 = vpop.f32.mrb[0].mxu0
      %v1441 = vadd.f32 %v1356, %v1440
      %v1442 = vpop.f32.mrb[0].mxu0
      %v1443 = vpop.f32.mrb[0].mxu0
      %v1444 = vpop.f32.mrb[0].mxu0
      %1445 = vdwg.mxu0
      %v1446 = vadd.f32 %v1212, %v1441
      %v1447 = vld [vmem:[%s12] sm:$0x1]
      %v1448 = vld [vmem:[%s13] sm:$0x1]
      %1449 = vadd.xlane.f32.xlu0 %v1446
      %v1450 = vpop.xlane.xlu0 %1449
      %v1451 = vmul.f32 %v1450, 0.03125
      %v1452 = vsub.f32 %v1446, %v1451
      %v1453 = vmul.f32 %v1452, %v590
      %v1454 = vmul.f32 %v1453, %v1453
      %1455 = vadd.xlane.f32.xlu0 %v1454
      %v1456 = vpop.xlane.xlu0 %1455
      %v1457 = vmul.f32 %v1456, 0.03125
      %v1458 = vadd.f32 %v1457, 1e-12
      %v1459 = vrsqrt.pop %v1458
      %v1460 = vmul.f32 %v1453, %v1459
      %v1462 = vlaneseq
      %v1463 = vshrl.u32 %v1462, 7
      %v1464 = vsub.s32 0, %v1463
      %v1465 = vrot.slane %v1447, %v1464
      %v1467 = vmul.f32 %v1460, %v1465
      %v1469 = vlaneseq
      %v1470 = vshrl.u32 %v1469, 7
      %v1471 = vsub.s32 0, %v1470
      %v1472 = vrot.slane %v1448, %v1471
      %v1474 = vadd.f32 %v1467, %v1472
      %v1475 = vpack.c.bf16 %v1474, %v1474
      %s1476 = scalar_lea.vmem %s2, 192
      %v1477 = vld [vmem:[%s1476] sm:$0xff]
      %v1478 = vld [vmem:[%s1476 + $0x8] sm:$0xf]
      %v1479 = vld [vmem:[%s1476 + $0xc] sm:$0xff]
      %v1480 = vld [vmem:[%s1476 + $0x14] sm:$0xf]
      %v1481 = vld [vmem:[%s1476 + $0x18] sm:$0xff]
      %v1482 = vld [vmem:[%s1476 + $0x20] sm:$0xf]
      %v1483 = vld [vmem:[%s1476 + $0x24] sm:$0xff]
      %v1484 = vld [vmem:[%s1476 + $0x2c] sm:$0xf]
      %v1485 = vld [vmem:[%s1476 + $0x30] sm:$0xff]
      %v1486 = vld [vmem:[%s1476 + $0x38] sm:$0xf]
      %v1487 = vld [vmem:[%s1476 + $0x3c] sm:$0xff]
      %v1488 = vld [vmem:[%s1476 + $0x44] sm:$0xf]
      %v1489 = vld [vmem:[%s1476 + $0x48] sm:$0xff]
      %v1490 = vld [vmem:[%s1476 + $0x50] sm:$0xf]
      %v1491 = vld [vmem:[%s1476 + $0x54] sm:$0xff]
      %v1492 = vld [vmem:[%s1476 + $0x5c] sm:$0xf]
      %v1493 = vld [vmem:[%s1476 + $0x60] sm:$0xff]
      %v1494 = vld [vmem:[%s1476 + $0x68] sm:$0xf]
      %v1495 = vld [vmem:[%s1476 + $0x6c] sm:$0xff]
      %v1496 = vld [vmem:[%s1476 + $0x74] sm:$0xf]
      %v1497 = vld [vmem:[%s1476 + $0x78] sm:$0xff]
      %v1498 = vld [vmem:[%s1476 + $0x80] sm:$0xf]
      %v1499 = vld [vmem:[%s1476 + $0x84] sm:$0xff]
      %v1500 = vld [vmem:[%s1476 + $0x8c] sm:$0xf]
      %v1501 = vld [vmem:[%s1476 + $0x90] sm:$0xff]
      %v1502 = vld [vmem:[%s1476 + $0x98] sm:$0xf]
      %v1503 = vld [vmem:[%s1476 + $0x9c] sm:$0xff]
      %v1504 = vld [vmem:[%s1476 + $0xa4] sm:$0xf]
      %v1505 = vld [vmem:[%s1476 + $0xa8] sm:$0xff]
      %v1506 = vld [vmem:[%s1476 + $0xb0] sm:$0xf]
      %v1507 = vld [vmem:[%s1476 + $0xb4] sm:$0xff]
      %v1508 = vld [vmem:[%s1476 + $0xbc] sm:$0xf]
      %s1509 = scalar_lea.vmem %s3, 3
      %v1510 = vld [vmem:[%s1509] sm:$0x7]
      %v1512 = vlaneseq
      %v1513 = vshrl.u32 %v1512, 7
      %v1514 = vsub.s32 0, %v1513
      %v1515 = vrot.slane %v1510, %v1514
      %v1516 = vlaneseq
      %v1517 = vshrl.u32 %v1516, 7
      %v1518 = vsub.s32 1, %v1517
      %v1519 = vrot.slane %v1510, %v1518
      %v1520 = vlaneseq
      %v1521 = vshrl.u32 %v1520, 7
      %v1522 = vsub.s32 2, %v1521
      %v1523 = vrot.slane %v1510, %v1522
      %v1559 = vunpack.c.l.b16 %v1477
      %v1560 = vunpack.c.h.b16 %v1477
      %v1561 = vunpack.c.l.b16 %v1478
      %v1562 = vunpack.c.l.b16 %v1479
      %v1563 = vunpack.c.h.b16 %v1479
      %v1564 = vunpack.c.l.b16 %v1480
      %v1565 = vunpack.c.l.b16 %v1481
      %v1566 = vunpack.c.h.b16 %v1481
      %v1567 = vunpack.c.l.b16 %v1482
      %v1568 = vunpack.c.l.b16 %v1483
      %v1569 = vunpack.c.h.b16 %v1483
      %v1570 = vunpack.c.l.b16 %v1484
      %v1571 = vunpack.c.l.b16 %v1485
      %v1572 = vunpack.c.h.b16 %v1485
      %v1573 = vunpack.c.l.b16 %v1486
      %v1574 = vunpack.c.l.b16 %v1487
      %v1575 = vunpack.c.h.b16 %v1487
      %v1576 = vunpack.c.l.b16 %v1488
      %v1577 = vunpack.c.l.b16 %v1489
      %v1578 = vunpack.c.h.b16 %v1489
      %v1579 = vunpack.c.l.b16 %v1490
      %v1580 = vunpack.c.l.b16 %v1491
      %v1581 = vunpack.c.h.b16 %v1491
      %v1582 = vunpack.c.l.b16 %v1492
      %v1583 = vunpack.c.l.b16 %v1493
      %v1584 = vunpack.c.h.b16 %v1493
      %v1585 = vunpack.c.l.b16 %v1494
      %v1586 = vunpack.c.l.b16 %v1495
      %v1587 = vunpack.c.h.b16 %v1495
      %v1588 = vunpack.c.l.b16 %v1496
      %v1589 = vunpack.c.l.b16 %v1497
      %v1590 = vunpack.c.h.b16 %v1497
      %v1591 = vunpack.c.l.b16 %v1498
      %v1592 = vunpack.c.l.b16 %v1499
      %v1593 = vunpack.c.h.b16 %v1499
      %v1594 = vunpack.c.l.b16 %v1500
      %v1595 = vunpack.c.l.b16 %v1501
      %v1596 = vunpack.c.h.b16 %v1501
      %v1597 = vunpack.c.l.b16 %v1502
      %v1598 = vunpack.c.l.b16 %v1503
      %v1599 = vunpack.c.h.b16 %v1503
      %v1600 = vunpack.c.l.b16 %v1504
      %v1601 = vunpack.c.l.b16 %v1505
      %v1602 = vunpack.c.h.b16 %v1505
      %v1603 = vunpack.c.l.b16 %v1506
      %v1604 = vunpack.c.l.b16 %v1507
      %v1605 = vunpack.c.h.b16 %v1507
      %v1606 = vunpack.c.l.b16 %v1508
      %v1607 = vpack.c.b16 %v1562, %v1559
      %v1608 = vpack.c.b16 %v1563, %v1560
      %v1609 = vpack.c.b16 %v1564, %v1561
      %v1610 = vpack.c.b16 %v1568, %v1565
      %v1611 = vpack.c.b16 %v1569, %v1566
      %v1612 = vpack.c.b16 %v1570, %v1567
      %v1613 = vpack.c.b16 %v1574, %v1571
      %v1614 = vpack.c.b16 %v1575, %v1572
      %v1615 = vpack.c.b16 %v1576, %v1573
      %v1616 = vpack.c.b16 %v1580, %v1577
      %v1617 = vpack.c.b16 %v1581, %v1578
      %v1618 = vpack.c.b16 %v1582, %v1579
      %v1619 = vpack.c.b16 %v1586, %v1583
      %v1620 = vpack.c.b16 %v1587, %v1584
      %v1621 = vpack.c.b16 %v1588, %v1585
      %v1622 = vpack.c.b16 %v1592, %v1589
      %v1623 = vpack.c.b16 %v1593, %v1590
      %v1624 = vpack.c.b16 %v1594, %v1591
      %v1625 = vpack.c.b16 %v1598, %v1595
      %v1626 = vpack.c.b16 %v1599, %v1596
      %v1627 = vpack.c.b16 %v1600, %v1597
      %v1628 = vpack.c.b16 %v1604, %v1601
      %v1629 = vpack.c.b16 %v1605, %v1602
      %v1630 = vpack.c.b16 %v1606, %v1603
      %1655 = vmatprep.subr.bf16.mxu0 %v1608
      %1656 = vmatpush1.bf16.msra.mxu0 %v1607
      %1657 = vmatprep.subr.bf16.mxu0 %v1611
      %1658 = vmatpush1.bf16.msra.mxu0 %v1610
      %1659 = vmatprep.subr.bf16.mxu0 %v1614
      %1660 = vmatpush1.bf16.msra.mxu0 %v1613
      %1661 = vmatprep.subr.bf16.mxu0 %v1617
      %1662 = vmatpush1.bf16.msra.mxu0 %v1616
      %1663 = vmatprep.subr.bf16.mxu0 %v1620
      %1664 = vmatpush1.bf16.msra.mxu0 %v1619
      %1665 = vmatprep.subr.bf16.mxu0 %v1623
      %1666 = vmatpush1.bf16.msra.mxu0 %v1622
      %1667 = vmatprep.subr.bf16.mxu0 %v1626
      %1668 = vmatpush1.bf16.msra.mxu0 %v1625
      %1669 = vmatprep.subr.bf16.mxu0 %v1629
      %1670 = vmatpush1.bf16.msra.mxu0 %v1628
      %1671 = vmatprep.subr.bf16.mxu0 0
      %1672 = vmatpush1.bf16.msra.mxu0 0
      %1673 = vmatprep.subr.bf16.mxu0 0
      %1674 = vmatpush1.bf16.msra.mxu0 0
      %1675 = vmatprep.subr.bf16.mxu0 0
      %1676 = vmatpush1.bf16.msra.mxu0 0
      %1677 = vmatprep.subr.bf16.mxu0 0
      %1678 = vmatpush1.bf16.msra.mxu0 0
      %1679 = vmatprep.subr.bf16.mxu0 0
      %1680 = vmatpush1.bf16.msra.mxu0 0
      %1681 = vmatprep.subr.bf16.mxu0 0
      %1682 = vmatpush1.bf16.msra.mxu0 0
      %1683 = vmatprep.subr.bf16.mxu0 0
      %1684 = vmatpush1.bf16.msra.mxu0 0
      %1685 = vmatprep.subr.bf16.mxu0 0
      %1686 = vmatpush1.bf16.msra.mxu0 0
      %1687 = vmatprep.mubr.bf16.mxu0 0
      %1688 = vmatmul.mubr.bf16.gmra.mrb[0].mxu0 %v1475
      %v1689 = vpop.f32.mrb[0].mxu0
      %v1690 = vadd.f32 %v1515, %v1689
      %v1691 = vpop.f32.mrb[0].mxu0
      %v1692 = vadd.f32 %v1519, %v1691
      %v1693 = vpop.f32.mrb[0].mxu0
      %v1694 = vpop.f32.mrb[0].mxu0
      %1695 = vdwg.mxu0
      %1696 = vmatprep.subr.bf16.mxu0 0
      %1697 = vmatpush1.bf16.msra.mxu0 %v1609
      %1698 = vmatprep.subr.bf16.mxu0 0
      %1699 = vmatpush1.bf16.msra.mxu0 %v1612
      %1700 = vmatprep.subr.bf16.mxu0 0
      %1701 = vmatpush1.bf16.msra.mxu0 %v1615
      %1702 = vmatprep.subr.bf16.mxu0 0
      %1703 = vmatpush1.bf16.msra.mxu0 %v1618
      %1704 = vmatprep.subr.bf16.mxu0 0
      %1705 = vmatpush1.bf16.msra.mxu0 %v1621
      %1706 = vmatprep.subr.bf16.mxu0 0
      %1707 = vmatpush1.bf16.msra.mxu0 %v1624
      %1708 = vmatprep.subr.bf16.mxu0 0
      %1709 = vmatpush1.bf16.msra.mxu0 %v1627
      %1710 = vmatprep.subr.bf16.mxu0 0
      %1711 = vmatpush1.bf16.msra.mxu0 %v1630
      %1712 = vmatprep.subr.bf16.mxu0 0
      %1713 = vmatpush1.bf16.msra.mxu0 0
      %1714 = vmatprep.subr.bf16.mxu0 0
      %1715 = vmatpush1.bf16.msra.mxu0 0
      %1716 = vmatprep.subr.bf16.mxu0 0
      %1717 = vmatpush1.bf16.msra.mxu0 0
      %1718 = vmatprep.subr.bf16.mxu0 0
      %1719 = vmatpush1.bf16.msra.mxu0 0
      %1720 = vmatprep.subr.bf16.mxu0 0
      %1721 = vmatpush1.bf16.msra.mxu0 0
      %1722 = vmatprep.subr.bf16.mxu0 0
      %1723 = vmatpush1.bf16.msra.mxu0 0
      %1724 = vmatprep.subr.bf16.mxu0 0
      %1725 = vmatpush1.bf16.msra.mxu0 0
      %1726 = vmatprep.subr.bf16.mxu0 0
      %1727 = vmatpush1.bf16.msra.mxu0 0
      %1728 = vmatprep.mubr.bf16.mxu0 0
      %1729 = vmatmul.mubr.bf16.gmra.mrb[0].mxu0 %v1475
      %v1730 = vpop.f32.mrb[0].mxu0
      %v1731 = vadd.f32 %v1523, %v1730
      %v1732 = vpop.f32.mrb[0].mxu0
      %v1733 = vpop.f32.mrb[0].mxu0
      %v1734 = vpop.f32.mrb[0].mxu0
      %1735 = vdwg.mxu0
      %v1736 = vpack.c.bf16 %v1692, %v1692
      %v1737 = vpack.c.bf16 %v1731, %v1731
      %v1738 = vmul.f32 %v1690, %v595
      %v1739 = vpack.c.bf16 %v1738, %v1738
      %1740 = vmatprep.subr.bf16.mxu0 0
      %1741 = vmatpush1.bf16.xpose.msra.mxu0 %v1736
      %1742 = vmatprep.subr.bf16.mxu0 0
      %1743 = vmatpush1.bf16.xpose.msra.mxu0 0
      %1744 = vmatprep.subr.bf16.mxu0 0
      %1745 = vmatpush1.bf16.xpose.msra.mxu0 0
      %1746 = vmatprep.subr.bf16.mxu0 0
      %1747 = vmatpush1.bf16.xpose.msra.mxu0 0
      %1748 = vmatprep.subr.bf16.mxu0 0
      %1749 = vmatpush1.bf16.xpose.msra.mxu0 0
      %1750 = vmatprep.subr.bf16.mxu0 0
      %1751 = vmatpush1.bf16.xpose.msra.mxu0 0
      %1752 = vmatprep.subr.bf16.mxu0 0
      %1753 = vmatpush1.bf16.xpose.msra.mxu0 0
      %1754 = vmatprep.subr.bf16.mxu0 0
      %1755 = vmatpush1.bf16.xpose.msra.mxu0 0
      %1756 = vmatprep.subr.bf16.mxu0 0
      %1757 = vmatpush1.bf16.xpose.msra.mxu0 0
      %1758 = vmatprep.subr.bf16.mxu0 0
      %1759 = vmatpush1.bf16.xpose.msra.mxu0 0
      %1760 = vmatprep.subr.bf16.mxu0 0
      %1761 = vmatpush1.bf16.xpose.msra.mxu0 0
      %1762 = vmatprep.subr.bf16.mxu0 0
      %1763 = vmatpush1.bf16.xpose.msra.mxu0 0
      %1764 = vmatprep.subr.bf16.mxu0 0
      %1765 = vmatpush1.bf16.xpose.msra.mxu0 0
      %1766 = vmatprep.subr.bf16.mxu0 0
      %1767 = vmatpush1.bf16.xpose.msra.mxu0 0
      %1768 = vmatprep.subr.bf16.mxu0 0
      %1769 = vmatpush1.bf16.xpose.msra.mxu0 0
      %1770 = vmatprep.subr.bf16.mxu0 0
      %1771 = vmatpush1.bf16.xpose.msra.mxu0 0
      %1772 = vmatprep.mubr.bf16.mxu0 0
      %1773 = vmatmul.mubr.bf16.gmra.mrb[0].mxu0 %v1739
      %v1774 = vpop.f32.mrb[0].mxu0
      %v1775 = vadd.f32 %v869, %v1774
      %v1776 = vpop.f32.mrb[0].mxu0
      %v1777 = vpop.f32.mrb[0].mxu0
      %v1778 = vpop.f32.mrb[0].mxu0
      %1779 = vdwg.mxu0
      %v1780 = vsel %vm911, %v1775, -inf
      %1781 = vmax.xlane.f32.xlu0 %v1780
      %v1782 = vpop.xlane.xlu0 %1781
      %v1783 = vsub.f32 %v1775, %v1782
      %v1784 = vmul.f32 %v1783, 1.442695
      %v1785 = vpow.pop %v1784
      %v1786 = vsel %vm911, %v1785, 0.0
      %1787 = vadd.xlane.f32.xlu0 %v1786
      %v1788 = vpop.xlane.xlu0 %1787
      %v1789 = vrcp.pop %v1788
      %v1790 = vmul.f32 %v1785, %v1789
      %v1791 = vpack.c.bf16 %v1790, %v1790
      %v1793 = vsel %vm911, %v1791, 0
      %v1796 = vsel %vm927, %v1737, 0
      %1798 = vmatprep.subr.bf16.mxu0 0
      %1799 = vmatpush1.bf16.msra.mxu0 %v1796
      %1800 = vmatprep.subr.bf16.mxu0 0
      %1801 = vmatpush1.bf16.msra.mxu0 0
      %1802 = vmatprep.subr.bf16.mxu0 0
      %1803 = vmatpush1.bf16.msra.mxu0 0
      %1804 = vmatprep.subr.bf16.mxu0 0
      %1805 = vmatpush1.bf16.msra.mxu0 0
      %1806 = vmatprep.subr.bf16.mxu0 0
      %1807 = vmatpush1.bf16.msra.mxu0 0
      %1808 = vmatprep.subr.bf16.mxu0 0
      %1809 = vmatpush1.bf16.msra.mxu0 0
      %1810 = vmatprep.subr.bf16.mxu0 0
      %1811 = vmatpush1.bf16.msra.mxu0 0
      %1812 = vmatprep.subr.bf16.mxu0 0
      %1813 = vmatpush1.bf16.msra.mxu0 0
      %1814 = vmatprep.subr.bf16.mxu0 0
      %1815 = vmatpush1.bf16.msra.mxu0 0
      %1816 = vmatprep.subr.bf16.mxu0 0
      %1817 = vmatpush1.bf16.msra.mxu0 0
      %1818 = vmatprep.subr.bf16.mxu0 0
      %1819 = vmatpush1.bf16.msra.mxu0 0
      %1820 = vmatprep.subr.bf16.mxu0 0
      %1821 = vmatpush1.bf16.msra.mxu0 0
      %1822 = vmatprep.subr.bf16.mxu0 0
      %1823 = vmatpush1.bf16.msra.mxu0 0
      %1824 = vmatprep.subr.bf16.mxu0 0
      %1825 = vmatpush1.bf16.msra.mxu0 0
      %1826 = vmatprep.subr.bf16.mxu0 0
      %1827 = vmatpush1.bf16.msra.mxu0 0
      %1828 = vmatprep.subr.bf16.mxu0 0
      %1829 = vmatpush1.bf16.msra.mxu0 0
      %1830 = vmatprep.mubr.bf16.mxu0 0
      %1831 = vmatmul.mubr.bf16.gmra.mrb[0].mxu0 %v1793
      %v1832 = vpop.f32.mrb[0].mxu0
      %v1833 = vadd.f32 0.0, %v1832
      %v1834 = vpop.f32.mrb[0].mxu0
      %v1835 = vpop.f32.mrb[0].mxu0
      %v1836 = vpop.f32.mrb[0].mxu0
      %1837 = vdwg.mxu0
      %v1838 = vmul.f32 %v595, %v1833
      %v1839 = vadd.f32 %v1838, 0.0
      %v1840 = vmul.f32 %v1690, %v599
      %v1841 = vpack.c.bf16 %v1840, %v1840
      %1842 = vmatprep.subr.bf16.mxu0 0
      %1843 = vmatpush1.bf16.xpose.msra.mxu0 %v1736
      %1844 = vmatprep.subr.bf16.mxu0 0
      %1845 = vmatpush1.bf16.xpose.msra.mxu0 0
      %1846 = vmatprep.subr.bf16.mxu0 0
      %1847 = vmatpush1.bf16.xpose.msra.mxu0 0
      %1848 = vmatprep.subr.bf16.mxu0 0
      %1849 = vmatpush1.bf16.xpose.msra.mxu0 0
      %1850 = vmatprep.subr.bf16.mxu0 0
      %1851 = vmatpush1.bf16.xpose.msra.mxu0 0
      %1852 = vmatprep.subr.bf16.mxu0 0
      %1853 = vmatpush1.bf16.xpose.msra.mxu0 0
      %1854 = vmatprep.subr.bf16.mxu0 0
      %1855 = vmatpush1.bf16.xpose.msra.mxu0 0
      %1856 = vmatprep.subr.bf16.mxu0 0
      %1857 = vmatpush1.bf16.xpose.msra.mxu0 0
      %1858 = vmatprep.subr.bf16.mxu0 0
      %1859 = vmatpush1.bf16.xpose.msra.mxu0 0
      %1860 = vmatprep.subr.bf16.mxu0 0
      %1861 = vmatpush1.bf16.xpose.msra.mxu0 0
      %1862 = vmatprep.subr.bf16.mxu0 0
      %1863 = vmatpush1.bf16.xpose.msra.mxu0 0
      %1864 = vmatprep.subr.bf16.mxu0 0
      %1865 = vmatpush1.bf16.xpose.msra.mxu0 0
      %1866 = vmatprep.subr.bf16.mxu0 0
      %1867 = vmatpush1.bf16.xpose.msra.mxu0 0
      %1868 = vmatprep.subr.bf16.mxu0 0
      %1869 = vmatpush1.bf16.xpose.msra.mxu0 0
      %1870 = vmatprep.subr.bf16.mxu0 0
      %1871 = vmatpush1.bf16.xpose.msra.mxu0 0
      %1872 = vmatprep.subr.bf16.mxu0 0
      %1873 = vmatpush1.bf16.xpose.msra.mxu0 0
      %1874 = vmatprep.mubr.bf16.mxu0 0
      %1875 = vmatmul.mubr.bf16.gmra.mrb[0].mxu0 %v1841
      %v1876 = vpop.f32.mrb[0].mxu0
      %v1877 = vadd.f32 %v869, %v1876
      %v1878 = vpop.f32.mrb[0].mxu0
      %v1879 = vpop.f32.mrb[0].mxu0
      %v1880 = vpop.f32.mrb[0].mxu0
      %1881 = vdwg.mxu0
      %v1882 = vsel %vm911, %v1877, -inf
      %1883 = vmax.xlane.f32.xlu0 %v1882
      %v1884 = vpop.xlane.xlu0 %1883
      %v1885 = vsub.f32 %v1877, %v1884
      %v1886 = vmul.f32 %v1885, 1.442695
      %v1887 = vpow.pop %v1886
      %v1888 = vsel %vm911, %v1887, 0.0
      %1889 = vadd.xlane.f32.xlu0 %v1888
      %v1890 = vpop.xlane.xlu0 %1889
      %v1891 = vrcp.pop %v1890
      %v1892 = vmul.f32 %v1887, %v1891
      %v1893 = vpack.c.bf16 %v1892, %v1892
      %v1895 = vsel %vm911, %v1893, 0
      %1897 = vmatprep.subr.bf16.mxu0 0
      %1898 = vmatpush1.bf16.msra.mxu0 %v1796
      %1899 = vmatprep.subr.bf16.mxu0 0
      %1900 = vmatpush1.bf16.msra.mxu0 0
      %1901 = vmatprep.subr.bf16.mxu0 0
      %1902 = vmatpush1.bf16.msra.mxu0 0
      %1903 = vmatprep.subr.bf16.mxu0 0
      %1904 = vmatpush1.bf16.msra.mxu0 0
      %1905 = vmatprep.subr.bf16.mxu0 0
      %1906 = vmatpush1.bf16.msra.mxu0 0
      %1907 = vmatprep.subr.bf16.mxu0 0
      %1908 = vmatpush1.bf16.msra.mxu0 0
      %1909 = vmatprep.subr.bf16.mxu0 0
      %1910 = vmatpush1.bf16.msra.mxu0 0
      %1911 = vmatprep.subr.bf16.mxu0 0
      %1912 = vmatpush1.bf16.msra.mxu0 0
      %1913 = vmatprep.subr.bf16.mxu0 0
      %1914 = vmatpush1.bf16.msra.mxu0 0
      %1915 = vmatprep.subr.bf16.mxu0 0
      %1916 = vmatpush1.bf16.msra.mxu0 0
      %1917 = vmatprep.subr.bf16.mxu0 0
      %1918 = vmatpush1.bf16.msra.mxu0 0
      %1919 = vmatprep.subr.bf16.mxu0 0
      %1920 = vmatpush1.bf16.msra.mxu0 0
      %1921 = vmatprep.subr.bf16.mxu0 0
      %1922 = vmatpush1.bf16.msra.mxu0 0
      %1923 = vmatprep.subr.bf16.mxu0 0
      %1924 = vmatpush1.bf16.msra.mxu0 0
      %1925 = vmatprep.subr.bf16.mxu0 0
      %1926 = vmatpush1.bf16.msra.mxu0 0
      %1927 = vmatprep.subr.bf16.mxu0 0
      %1928 = vmatpush1.bf16.msra.mxu0 0
      %1929 = vmatprep.mubr.bf16.mxu0 0
      %1930 = vmatmul.mubr.bf16.gmra.mrb[0].mxu0 %v1895
      %v1931 = vpop.f32.mrb[0].mxu0
      %v1932 = vadd.f32 0.0, %v1931
      %v1933 = vpop.f32.mrb[0].mxu0
      %v1934 = vpop.f32.mrb[0].mxu0
      %v1935 = vpop.f32.mrb[0].mxu0
      %1936 = vdwg.mxu0
      %v1937 = vmul.f32 %v599, %v1932
      %v1938 = vadd.f32 %v1839, %v1937
      %v1939 = vpack.c.bf16 %v1938, %v1938
      %s1940 = scalar_lea.vmem %s4, 64
      %v1941 = vld [vmem:[%s1940] sm:$0xf]
      %v1942 = vld [vmem:[%s1940 + $0x4] sm:$0xf]
      %v1943 = vld [vmem:[%s1940 + $0x8] sm:$0xf]
      %v1944 = vld [vmem:[%s1940 + $0xc] sm:$0xf]
      %v1945 = vld [vmem:[%s1940 + $0x10] sm:$0xf]
      %v1946 = vld [vmem:[%s1940 + $0x14] sm:$0xf]
      %v1947 = vld [vmem:[%s1940 + $0x18] sm:$0xf]
      %v1948 = vld [vmem:[%s1940 + $0x1c] sm:$0xf]
      %v1949 = vld [vmem:[%s1940 + $0x20] sm:$0xf]
      %v1950 = vld [vmem:[%s1940 + $0x24] sm:$0xf]
      %v1951 = vld [vmem:[%s1940 + $0x28] sm:$0xf]
      %v1952 = vld [vmem:[%s1940 + $0x2c] sm:$0xf]
      %v1953 = vld [vmem:[%s1940 + $0x30] sm:$0xf]
      %v1954 = vld [vmem:[%s1940 + $0x34] sm:$0xf]
      %v1955 = vld [vmem:[%s1940 + $0x38] sm:$0xf]
      %v1956 = vld [vmem:[%s1940 + $0x3c] sm:$0xf]
      %s1957 = scalar_lea.vmem %s5, 1
      %v1958 = vld [vmem:[%s1957] sm:$0x1]
      %v1960 = vlaneseq
      %v1961 = vshrl.u32 %v1960, 7
      %v1962 = vsub.s32 0, %v1961
      %v1963 = vrot.slane %v1958, %v1962
      %v1981 = vunpack.c.l.b16 %v1941
      %v1982 = vunpack.c.l.b16 %v1942
      %v1983 = vunpack.c.l.b16 %v1943
      %v1984 = vunpack.c.l.b16 %v1944
      %v1985 = vunpack.c.l.b16 %v1945
      %v1986 = vunpack.c.l.b16 %v1946
      %v1987 = vunpack.c.l.b16 %v1947
      %v1988 = vunpack.c.l.b16 %v1948
      %v1989 = vunpack.c.l.b16 %v1949
      %v1990 = vunpack.c.l.b16 %v1950
      %v1991 = vunpack.c.l.b16 %v1951
      %v1992 = vunpack.c.l.b16 %v1952
      %v1993 = vunpack.c.l.b16 %v1953
      %v1994 = vunpack.c.l.b16 %v1954
      %v1995 = vunpack.c.l.b16 %v1955
      %v1996 = vunpack.c.l.b16 %v1956
      %v1997 = vpack.c.b16 %v1982, %v1981
      %v1998 = vpack.c.b16 %v1984, %v1983
      %v1999 = vpack.c.b16 %v1986, %v1985
      %v2000 = vpack.c.b16 %v1988, %v1987
      %v2001 = vpack.c.b16 %v1990, %v1989
      %v2002 = vpack.c.b16 %v1992, %v1991
      %v2003 = vpack.c.b16 %v1994, %v1993
      %v2004 = vpack.c.b16 %v1996, %v1995
      %2013 = vmatprep.subr.bf16.mxu0 0
      %2014 = vmatpush1.bf16.msra.mxu0 %v1997
      %2015 = vmatprep.subr.bf16.mxu0 0
      %2016 = vmatpush1.bf16.msra.mxu0 %v1998
      %2017 = vmatprep.subr.bf16.mxu0 0
      %2018 = vmatpush1.bf16.msra.mxu0 %v1999
      %2019 = vmatprep.subr.bf16.mxu0 0
      %2020 = vmatpush1.bf16.msra.mxu0 %v2000
      %2021 = vmatprep.subr.bf16.mxu0 0
      %2022 = vmatpush1.bf16.msra.mxu0 %v2001
      %2023 = vmatprep.subr.bf16.mxu0 0
      %2024 = vmatpush1.bf16.msra.mxu0 %v2002
      %2025 = vmatprep.subr.bf16.mxu0 0
      %2026 = vmatpush1.bf16.msra.mxu0 %v2003
      %2027 = vmatprep.subr.bf16.mxu0 0
      %2028 = vmatpush1.bf16.msra.mxu0 %v2004
      %2029 = vmatprep.subr.bf16.mxu0 0
      %2030 = vmatpush1.bf16.msra.mxu0 0
      %2031 = vmatprep.subr.bf16.mxu0 0
      %2032 = vmatpush1.bf16.msra.mxu0 0
      %2033 = vmatprep.subr.bf16.mxu0 0
      %2034 = vmatpush1.bf16.msra.mxu0 0
      %2035 = vmatprep.subr.bf16.mxu0 0
      %2036 = vmatpush1.bf16.msra.mxu0 0
      %2037 = vmatprep.subr.bf16.mxu0 0
      %2038 = vmatpush1.bf16.msra.mxu0 0
      %2039 = vmatprep.subr.bf16.mxu0 0
      %2040 = vmatpush1.bf16.msra.mxu0 0
      %2041 = vmatprep.subr.bf16.mxu0 0
      %2042 = vmatpush1.bf16.msra.mxu0 0
      %2043 = vmatprep.subr.bf16.mxu0 0
      %2044 = vmatpush1.bf16.msra.mxu0 0
      %2045 = vmatprep.mubr.bf16.mxu0 0
      %2046 = vmatmul.mubr.bf16.gmra.mrb[0].mxu0 %v1939
      %v2047 = vpop.f32.mrb[0].mxu0
      %v2048 = vadd.f32 %v1963, %v2047
      %v2049 = vpop.f32.mrb[0].mxu0
      %v2050 = vpop.f32.mrb[0].mxu0
      %v2051 = vpop.f32.mrb[0].mxu0
      %2052 = vdwg.mxu0
      %v2053 = vadd.f32 %v1474, %v2048
      %s2054 = scalar_lea.vmem %s6, 1
      %v2055 = vld [vmem:[%s2054] sm:$0x1]
      %s2056 = scalar_lea.vmem %s7, 1
      %v2057 = vld [vmem:[%s2056] sm:$0x1]
      %2058 = vadd.xlane.f32.xlu0 %v2053
      %v2059 = vpop.xlane.xlu0 %2058
      %v2060 = vmul.f32 %v2059, 0.03125
      %v2061 = vsub.f32 %v2053, %v2060
      %v2062 = vmul.f32 %v2061, %v590
      %v2063 = vmul.f32 %v2062, %v2062
      %2064 = vadd.xlane.f32.xlu0 %v2063
      %v2065 = vpop.xlane.xlu0 %2064
      %v2066 = vmul.f32 %v2065, 0.03125
      %v2067 = vadd.f32 %v2066, 1e-12
      %v2068 = vrsqrt.pop %v2067
      %v2069 = vmul.f32 %v2062, %v2068
      %v2071 = vlaneseq
      %v2072 = vshrl.u32 %v2071, 7
      %v2073 = vsub.s32 0, %v2072
      %v2074 = vrot.slane %v2055, %v2073
      %v2076 = vmul.f32 %v2069, %v2074
      %v2078 = vlaneseq
      %v2079 = vshrl.u32 %v2078, 7
      %v2080 = vsub.s32 0, %v2079
      %v2081 = vrot.slane %v2057, %v2080
      %v2083 = vadd.f32 %v2076, %v2081
      %v2084 = vpack.c.bf16 %v2083, %v2083
      %s2085 = scalar_lea.vmem %s8, 64
      %v2086 = vld [vmem:[%s2085] sm:$0xf]
      %v2087 = vld [vmem:[%s2085 + $0x4] sm:$0xf]
      %v2088 = vld [vmem:[%s2085 + $0x8] sm:$0xf]
      %v2089 = vld [vmem:[%s2085 + $0xc] sm:$0xf]
      %v2090 = vld [vmem:[%s2085 + $0x10] sm:$0xf]
      %v2091 = vld [vmem:[%s2085 + $0x14] sm:$0xf]
      %v2092 = vld [vmem:[%s2085 + $0x18] sm:$0xf]
      %v2093 = vld [vmem:[%s2085 + $0x1c] sm:$0xf]
      %v2094 = vld [vmem:[%s2085 + $0x20] sm:$0xf]
      %v2095 = vld [vmem:[%s2085 + $0x24] sm:$0xf]
      %v2096 = vld [vmem:[%s2085 + $0x28] sm:$0xf]
      %v2097 = vld [vmem:[%s2085 + $0x2c] sm:$0xf]
      %v2098 = vld [vmem:[%s2085 + $0x30] sm:$0xf]
      %v2099 = vld [vmem:[%s2085 + $0x34] sm:$0xf]
      %v2100 = vld [vmem:[%s2085 + $0x38] sm:$0xf]
      %v2101 = vld [vmem:[%s2085 + $0x3c] sm:$0xf]
      %s2102 = scalar_lea.vmem %s9, 1
      %v2103 = vld [vmem:[%s2102] sm:$0x1]
      %v2105 = vlaneseq
      %v2106 = vshrl.u32 %v2105, 7
      %v2107 = vsub.s32 0, %v2106
      %v2108 = vrot.slane %v2103, %v2107
      %v2126 = vunpack.c.l.b16 %v2086
      %v2127 = vunpack.c.l.b16 %v2087
      %v2128 = vunpack.c.l.b16 %v2088
      %v2129 = vunpack.c.l.b16 %v2089
      %v2130 = vunpack.c.l.b16 %v2090
      %v2131 = vunpack.c.l.b16 %v2091
      %v2132 = vunpack.c.l.b16 %v2092
      %v2133 = vunpack.c.l.b16 %v2093
      %v2134 = vunpack.c.l.b16 %v2094
      %v2135 = vunpack.c.l.b16 %v2095
      %v2136 = vunpack.c.l.b16 %v2096
      %v2137 = vunpack.c.l.b16 %v2097
      %v2138 = vunpack.c.l.b16 %v2098
      %v2139 = vunpack.c.l.b16 %v2099
      %v2140 = vunpack.c.l.b16 %v2100
      %v2141 = vunpack.c.l.b16 %v2101
      %v2142 = vpack.c.b16 %v2127, %v2126
      %v2143 = vpack.c.b16 %v2129, %v2128
      %v2144 = vpack.c.b16 %v2131, %v2130
      %v2145 = vpack.c.b16 %v2133, %v2132
      %v2146 = vpack.c.b16 %v2135, %v2134
      %v2147 = vpack.c.b16 %v2137, %v2136
      %v2148 = vpack.c.b16 %v2139, %v2138
      %v2149 = vpack.c.b16 %v2141, %v2140
      %2158 = vmatprep.subr.bf16.mxu0 0
      %2159 = vmatpush1.bf16.msra.mxu0 %v2142
      %2160 = vmatprep.subr.bf16.mxu0 0
      %2161 = vmatpush1.bf16.msra.mxu0 %v2143
      %2162 = vmatprep.subr.bf16.mxu0 0
      %2163 = vmatpush1.bf16.msra.mxu0 %v2144
      %2164 = vmatprep.subr.bf16.mxu0 0
      %2165 = vmatpush1.bf16.msra.mxu0 %v2145
      %2166 = vmatprep.subr.bf16.mxu0 0
      %2167 = vmatpush1.bf16.msra.mxu0 %v2146
      %2168 = vmatprep.subr.bf16.mxu0 0
      %2169 = vmatpush1.bf16.msra.mxu0 %v2147
      %2170 = vmatprep.subr.bf16.mxu0 0
      %2171 = vmatpush1.bf16.msra.mxu0 %v2148
      %2172 = vmatprep.subr.bf16.mxu0 0
      %2173 = vmatpush1.bf16.msra.mxu0 %v2149
      %2174 = vmatprep.subr.bf16.mxu0 0
      %2175 = vmatpush1.bf16.msra.mxu0 0
      %2176 = vmatprep.subr.bf16.mxu0 0
      %2177 = vmatpush1.bf16.msra.mxu0 0
      %2178 = vmatprep.subr.bf16.mxu0 0
      %2179 = vmatpush1.bf16.msra.mxu0 0
      %2180 = vmatprep.subr.bf16.mxu0 0
      %2181 = vmatpush1.bf16.msra.mxu0 0
      %2182 = vmatprep.subr.bf16.mxu0 0
      %2183 = vmatpush1.bf16.msra.mxu0 0
      %2184 = vmatprep.subr.bf16.mxu0 0
      %2185 = vmatpush1.bf16.msra.mxu0 0
      %2186 = vmatprep.subr.bf16.mxu0 0
      %2187 = vmatpush1.bf16.msra.mxu0 0
      %2188 = vmatprep.subr.bf16.mxu0 0
      %2189 = vmatpush1.bf16.msra.mxu0 0
      %2190 = vmatprep.mubr.bf16.mxu0 0
      %2191 = vmatmul.mubr.bf16.gmra.mrb[0].mxu0 %v2084
      %v2192 = vpop.f32.mrb[0].mxu0
      %v2193 = vadd.f32 %v2108, %v2192
      %v2194 = vpop.f32.mrb[0].mxu0
      %v2195 = vpop.f32.mrb[0].mxu0
      %v2196 = vpop.f32.mrb[0].mxu0
      %2197 = vdwg.mxu0
      %v2198 = vmul.f32 %v2193, %v2193
      %v2199 = vmul.f32 %v2193, %v2198
      %v2200 = vmul.f32 %v2199, 0.044715
      %v2201 = vadd.f32 %v2193, %v2200
      %v2202 = vmul.f32 %v2201, 0.7978846
      %v2203 = vtanh.pop %v2202
      %v2204 = vadd.f32 %v2203, 1.0
      %v2205 = vmul.f32 %v2204, 0.5
      %v2206 = vmul.f32 %v2193, %v2205
      %v2207 = vpack.c.bf16 %v2206, %v2206
      %s2208 = scalar_lea.vmem %s10, 64
      %v2209 = vld [vmem:[%s2208] sm:$0xf]
      %v2210 = vld [vmem:[%s2208 + $0x4] sm:$0xf]
      %v2211 = vld [vmem:[%s2208 + $0x8] sm:$0xf]
      %v2212 = vld [vmem:[%s2208 + $0xc] sm:$0xf]
      %v2213 = vld [vmem:[%s2208 + $0x10] sm:$0xf]
      %v2214 = vld [vmem:[%s2208 + $0x14] sm:$0xf]
      %v2215 = vld [vmem:[%s2208 + $0x18] sm:$0xf]
      %v2216 = vld [vmem:[%s2208 + $0x1c] sm:$0xf]
      %v2217 = vld [vmem:[%s2208 + $0x20] sm:$0xf]
      %v2218 = vld [vmem:[%s2208 + $0x24] sm:$0xf]
      %v2219 = vld [vmem:[%s2208 + $0x28] sm:$0xf]
      %v2220 = vld [vmem:[%s2208 + $0x2c] sm:$0xf]
      %v2221 = vld [vmem:[%s2208 + $0x30] sm:$0xf]
      %v2222 = vld [vmem:[%s2208 + $0x34] sm:$0xf]
      %v2223 = vld [vmem:[%s2208 + $0x38] sm:$0xf]
      %v2224 = vld [vmem:[%s2208 + $0x3c] sm:$0xf]
      %s2225 = scalar_lea.vmem %s11, 1
      %v2226 = vld [vmem:[%s2225] sm:$0x1]
      %v2228 = vlaneseq
      %v2229 = vshrl.u32 %v2228, 7
      %v2230 = vsub.s32 0, %v2229
      %v2231 = vrot.slane %v2226, %v2230
      %v2249 = vunpack.c.l.b16 %v2209
      %v2250 = vunpack.c.l.b16 %v2210
      %v2251 = vunpack.c.l.b16 %v2211
      %v2252 = vunpack.c.l.b16 %v2212
      %v2253 = vunpack.c.l.b16 %v2213
      %v2254 = vunpack.c.l.b16 %v2214
      %v2255 = vunpack.c.l.b16 %v2215
      %v2256 = vunpack.c.l.b16 %v2216
      %v2257 = vunpack.c.l.b16 %v2217
      %v2258 = vunpack.c.l.b16 %v2218
      %v2259 = vunpack.c.l.b16 %v2219
      %v2260 = vunpack.c.l.b16 %v2220
      %v2261 = vunpack.c.l.b16 %v2221
      %v2262 = vunpack.c.l.b16 %v2222
      %v2263 = vunpack.c.l.b16 %v2223
      %v2264 = vunpack.c.l.b16 %v2224
      %v2265 = vpack.c.b16 %v2250, %v2249
      %v2266 = vpack.c.b16 %v2252, %v2251
      %v2267 = vpack.c.b16 %v2254, %v2253
      %v2268 = vpack.c.b16 %v2256, %v2255
      %v2269 = vpack.c.b16 %v2258, %v2257
      %v2270 = vpack.c.b16 %v2260, %v2259
      %v2271 = vpack.c.b16 %v2262, %v2261
      %v2272 = vpack.c.b16 %v2264, %v2263
      %2281 = vmatprep.subr.bf16.mxu0 0
      %2282 = vmatpush1.bf16.msra.mxu0 %v2265
      %2283 = vmatprep.subr.bf16.mxu0 0
      %2284 = vmatpush1.bf16.msra.mxu0 %v2266
      %2285 = vmatprep.subr.bf16.mxu0 0
      %2286 = vmatpush1.bf16.msra.mxu0 %v2267
      %2287 = vmatprep.subr.bf16.mxu0 0
      %2288 = vmatpush1.bf16.msra.mxu0 %v2268
      %2289 = vmatprep.subr.bf16.mxu0 0
      %2290 = vmatpush1.bf16.msra.mxu0 %v2269
      %2291 = vmatprep.subr.bf16.mxu0 0
      %2292 = vmatpush1.bf16.msra.mxu0 %v2270
      %2293 = vmatprep.subr.bf16.mxu0 0
      %2294 = vmatpush1.bf16.msra.mxu0 %v2271
      %2295 = vmatprep.subr.bf16.mxu0 0
      %2296 = vmatpush1.bf16.msra.mxu0 %v2272
      %2297 = vmatprep.subr.bf16.mxu0 0
      %2298 = vmatpush1.bf16.msra.mxu0 0
      %2299 = vmatprep.subr.bf16.mxu0 0
      %2300 = vmatpush1.bf16.msra.mxu0 0
      %2301 = vmatprep.subr.bf16.mxu0 0
      %2302 = vmatpush1.bf16.msra.mxu0 0
      %2303 = vmatprep.subr.bf16.mxu0 0
      %2304 = vmatpush1.bf16.msra.mxu0 0
      %2305 = vmatprep.subr.bf16.mxu0 0
      %2306 = vmatpush1.bf16.msra.mxu0 0
      %2307 = vmatprep.subr.bf16.mxu0 0
      %2308 = vmatpush1.bf16.msra.mxu0 0
      %2309 = vmatprep.subr.bf16.mxu0 0
      %2310 = vmatpush1.bf16.msra.mxu0 0
      %2311 = vmatprep.subr.bf16.mxu0 0
      %2312 = vmatpush1.bf16.msra.mxu0 0
      %2313 = vmatprep.mubr.bf16.mxu0 0
      %2314 = vmatmul.mubr.bf16.gmra.mrb[0].mxu0 %v2207
      %v2315 = vpop.f32.mrb[0].mxu0
      %v2316 = vadd.f32 %v2231, %v2315
      %v2317 = vpop.f32.mrb[0].mxu0
      %v2318 = vpop.f32.mrb[0].mxu0
      %v2319 = vpop.f32.mrb[0].mxu0
      %2320 = vdwg.mxu0
      %v2321 = vadd.f32 %v2083, %v2316
      %s2322 = scalar_lea.vmem %s12, 1
      %v2323 = vld [vmem:[%s2322] sm:$0x1]
      %s2324 = scalar_lea.vmem %s13, 1
      %v2325 = vld [vmem:[%s2324] sm:$0x1]
      %2326 = vadd.xlane.f32.xlu0 %v2321
      %v2327 = vpop.xlane.xlu0 %2326
      %v2328 = vmul.f32 %v2327, 0.03125
      %v2329 = vsub.f32 %v2321, %v2328
      %v2330 = vmul.f32 %v2329, %v590
      %v2331 = vmul.f32 %v2330, %v2330
      %2332 = vadd.xlane.f32.xlu0 %v2331
      %v2333 = vpop.xlane.xlu0 %2332
      %v2334 = vmul.f32 %v2333, 0.03125
      %v2335 = vadd.f32 %v2334, 1e-12
      %v2336 = vrsqrt.pop %v2335
      %v2337 = vmul.f32 %v2330, %v2336
      %v2339 = vlaneseq
      %v2340 = vshrl.u32 %v2339, 7
      %v2341 = vsub.s32 0, %v2340
      %v2342 = vrot.slane %v2323, %v2341
      %v2344 = vmul.f32 %v2337, %v2342
      %v2346 = vlaneseq
      %v2347 = vshrl.u32 %v2346, 7
      %v2348 = vsub.s32 0, %v2347
      %v2349 = vrot.slane %v2325, %v2348
      %v2351 = vadd.f32 %v2344, %v2349
      %v2352 = vpack.c.bf16 %v2351, %v2351
      %v2353 = vld [vmem:[%s14] sm:$0xf]
      %v2354 = vld [vmem:[%s14 + $0x4] sm:$0xf]
      %v2355 = vld [vmem:[%s14 + $0x8] sm:$0xf]
      %v2356 = vld [vmem:[%s14 + $0xc] sm:$0xf]
      %v2357 = vld [vmem:[%s14 + $0x10] sm:$0xf]
      %v2358 = vld [vmem:[%s14 + $0x14] sm:$0xf]
      %v2359 = vld [vmem:[%s14 + $0x18] sm:$0xf]
      %v2360 = vld [vmem:[%s14 + $0x1c] sm:$0xf]
      %v2361 = vld [vmem:[%s14 + $0x20] sm:$0xf]
      %v2362 = vld [vmem:[%s14 + $0x24] sm:$0xf]
      %v2363 = vld [vmem:[%s14 + $0x28] sm:$0xf]
      %v2364 = vld [vmem:[%s14 + $0x2c] sm:$0xf]
      %v2365 = vld [vmem:[%s14 + $0x30] sm:$0xf]
      %v2366 = vld [vmem:[%s14 + $0x34] sm:$0xf]
      %v2367 = vld [vmem:[%s14 + $0x38] sm:$0xf]
      %v2368 = vld [vmem:[%s14 + $0x3c] sm:$0xf]
      %v2369 = vld [vmem:[%s15] sm:$0x1]
      %v2386 = vunpack.c.l.b16 %v2353
      %v2387 = vunpack.c.l.b16 %v2354
      %v2388 = vunpack.c.l.b16 %v2355
      %v2389 = vunpack.c.l.b16 %v2356
      %v2390 = vunpack.c.l.b16 %v2357
      %v2391 = vunpack.c.l.b16 %v2358
      %v2392 = vunpack.c.l.b16 %v2359
      %v2393 = vunpack.c.l.b16 %v2360
      %v2394 = vunpack.c.l.b16 %v2361
      %v2395 = vunpack.c.l.b16 %v2362
      %v2396 = vunpack.c.l.b16 %v2363
      %v2397 = vunpack.c.l.b16 %v2364
      %v2398 = vunpack.c.l.b16 %v2365
      %v2399 = vunpack.c.l.b16 %v2366
      %v2400 = vunpack.c.l.b16 %v2367
      %v2401 = vunpack.c.l.b16 %v2368
      %v2402 = vpack.c.b16 %v2387, %v2386
      %v2403 = vpack.c.b16 %v2389, %v2388
      %v2404 = vpack.c.b16 %v2391, %v2390
      %v2405 = vpack.c.b16 %v2393, %v2392
      %v2406 = vpack.c.b16 %v2395, %v2394
      %v2407 = vpack.c.b16 %v2397, %v2396
      %v2408 = vpack.c.b16 %v2399, %v2398
      %v2409 = vpack.c.b16 %v2401, %v2400
      %2418 = vmatprep.subr.bf16.mxu0 0
      %2419 = vmatpush1.bf16.msra.mxu0 %v2402
      %2420 = vmatprep.subr.bf16.mxu0 0
      %2421 = vmatpush1.bf16.msra.mxu0 %v2403
      %2422 = vmatprep.subr.bf16.mxu0 0
      %2423 = vmatpush1.bf16.msra.mxu0 %v2404
      %2424 = vmatprep.subr.bf16.mxu0 0
      %2425 = vmatpush1.bf16.msra.mxu0 %v2405
      %2426 = vmatprep.subr.bf16.mxu0 0
      %2427 = vmatpush1.bf16.msra.mxu0 %v2406
      %2428 = vmatprep.subr.bf16.mxu0 0
      %2429 = vmatpush1.bf16.msra.mxu0 %v2407
      %2430 = vmatprep.subr.bf16.mxu0 0
      %2431 = vmatpush1.bf16.msra.mxu0 %v2408
      %2432 = vmatprep.subr.bf16.mxu0 0
      %2433 = vmatpush1.bf16.msra.mxu0 %v2409
      %2434 = vmatprep.subr.bf16.mxu0 0
      %2435 = vmatpush1.bf16.msra.mxu0 0
      %2436 = vmatprep.subr.bf16.mxu0 0
      %2437 = vmatpush1.bf16.msra.mxu0 0
      %2438 = vmatprep.subr.bf16.mxu0 0
      %2439 = vmatpush1.bf16.msra.mxu0 0
      %2440 = vmatprep.subr.bf16.mxu0 0
      %2441 = vmatpush1.bf16.msra.mxu0 0
      %2442 = vmatprep.subr.bf16.mxu0 0
      %2443 = vmatpush1.bf16.msra.mxu0 0
      %2444 = vmatprep.subr.bf16.mxu0 0
      %2445 = vmatpush1.bf16.msra.mxu0 0
      %2446 = vmatprep.subr.bf16.mxu0 0
      %2447 = vmatpush1.bf16.msra.mxu0 0
      %2448 = vmatprep.subr.bf16.mxu0 0
      %2449 = vmatpush1.bf16.msra.mxu0 0
      %2450 = vmatprep.mubr.bf16.mxu0 0
      %2451 = vmatmul.mubr.bf16.gmra.mrb[0].mxu0 %v2352
      %v2452 = vpop.f32.mrb[0].mxu0
      %v2453 = vadd.f32 %v2369, %v2452
      %v2454 = vpop.f32.mrb[0].mxu0
      %v2455 = vpop.f32.mrb[0].mxu0
      %v2456 = vpop.f32.mrb[0].mxu0
      %2457 = vdwg.mxu0
      %v2458 = vtanh.pop %v2453
      %v2459 = vpack.c.bf16 %v2458, %v2458
      %v2460 = vld [vmem:[%s16] sm:$0xf]
      %v2461 = vld [vmem:[%s16 + $0x4] sm:$0xf]
      %v2462 = vld [vmem:[%s16 + $0x8] sm:$0xf]
      %v2463 = vld [vmem:[%s16 + $0xc] sm:$0xf]
      %v2464 = vld [vmem:[%s16 + $0x10] sm:$0xf]
      %v2465 = vld [vmem:[%s16 + $0x14] sm:$0xf]
      %v2466 = vld [vmem:[%s16 + $0x18] sm:$0xf]
      %v2467 = vld [vmem:[%s16 + $0x1c] sm:$0xf]
      %v2468 = vld [vmem:[%s16 + $0x20] sm:$0xf]
      %v2469 = vld [vmem:[%s16 + $0x24] sm:$0xf]
      %v2470 = vld [vmem:[%s16 + $0x28] sm:$0xf]
      %v2471 = vld [vmem:[%s16 + $0x2c] sm:$0xf]
      %v2472 = vld [vmem:[%s16 + $0x30] sm:$0xf]
      %v2473 = vld [vmem:[%s16 + $0x34] sm:$0xf]
      %v2474 = vld [vmem:[%s16 + $0x38] sm:$0xf]
      %v2475 = vld [vmem:[%s16 + $0x3c] sm:$0xf]
      %v2476 = vld [vmem:[%s17] sm:$0x1]
      %v2493 = vunpack.c.l.b16 %v2460
      %v2494 = vunpack.c.l.b16 %v2461
      %v2495 = vunpack.c.l.b16 %v2462
      %v2496 = vunpack.c.l.b16 %v2463
      %v2497 = vunpack.c.l.b16 %v2464
      %v2498 = vunpack.c.l.b16 %v2465
      %v2499 = vunpack.c.l.b16 %v2466
      %v2500 = vunpack.c.l.b16 %v2467
      %v2501 = vunpack.c.l.b16 %v2468
      %v2502 = vunpack.c.l.b16 %v2469
      %v2503 = vunpack.c.l.b16 %v2470
      %v2504 = vunpack.c.l.b16 %v2471
      %v2505 = vunpack.c.l.b16 %v2472
      %v2506 = vunpack.c.l.b16 %v2473
      %v2507 = vunpack.c.l.b16 %v2474
      %v2508 = vunpack.c.l.b16 %v2475
      %v2509 = vpack.c.b16 %v2494, %v2493
      %v2510 = vpack.c.b16 %v2496, %v2495
      %v2511 = vpack.c.b16 %v2498, %v2497
      %v2512 = vpack.c.b16 %v2500, %v2499
      %v2513 = vpack.c.b16 %v2502, %v2501
      %v2514 = vpack.c.b16 %v2504, %v2503
      %v2515 = vpack.c.b16 %v2506, %v2505
      %v2516 = vpack.c.b16 %v2508, %v2507
      %2525 = vmatprep.subr.bf16.mxu0 0
      %2526 = vmatpush1.bf16.msra.mxu0 %v2509
      %2527 = vmatprep.subr.bf16.mxu0 0
      %2528 = vmatpush1.bf16.msra.mxu0 %v2510
      %2529 = vmatprep.subr.bf16.mxu0 0
      %2530 = vmatpush1.bf16.msra.mxu0 %v2511
      %2531 = vmatprep.subr.bf16.mxu0 0
      %2532 = vmatpush1.bf16.msra.mxu0 %v2512
      %2533 = vmatprep.subr.bf16.mxu0 0
      %2534 = vmatpush1.bf16.msra.mxu0 %v2513
      %2535 = vmatprep.subr.bf16.mxu0 0
      %2536 = vmatpush1.bf16.msra.mxu0 %v2514
      %2537 = vmatprep.subr.bf16.mxu0 0
      %2538 = vmatpush1.bf16.msra.mxu0 %v2515
      %2539 = vmatprep.subr.bf16.mxu0 0
      %2540 = vmatpush1.bf16.msra.mxu0 %v2516
      %2541 = vmatprep.subr.bf16.mxu0 0
      %2542 = vmatpush1.bf16.msra.mxu0 0
      %2543 = vmatprep.subr.bf16.mxu0 0
      %2544 = vmatpush1.bf16.msra.mxu0 0
      %2545 = vmatprep.subr.bf16.mxu0 0
      %2546 = vmatpush1.bf16.msra.mxu0 0
      %2547 = vmatprep.subr.bf16.mxu0 0
      %2548 = vmatpush1.bf16.msra.mxu0 0
      %2549 = vmatprep.subr.bf16.mxu0 0
      %2550 = vmatpush1.bf16.msra.mxu0 0
      %2551 = vmatprep.subr.bf16.mxu0 0
      %2552 = vmatpush1.bf16.msra.mxu0 0
      %2553 = vmatprep.subr.bf16.mxu0 0
      %2554 = vmatpush1.bf16.msra.mxu0 0
      %2555 = vmatprep.subr.bf16.mxu0 0
      %2556 = vmatpush1.bf16.msra.mxu0 0
      %2557 = vmatprep.mubr.bf16.mxu0 0
      %2558 = vmatmul.mubr.bf16.gmra.mrb[0].mxu0 %v2459
      %v2559 = vpop.f32.mrb[0].mxu0
      %v2560 = vadd.f32 %v2476, %v2559
      %v2561 = vpop.f32.mrb[0].mxu0
      %v2562 = vpop.f32.mrb[0].mxu0
      %v2563 = vpop.f32.mrb[0].mxu0
      %2564 = vdwg.mxu0
      %v2565 = vlaneseq
      %v2566 = vshrl.u32 %v2565, 7
      %v2567 = vsub.s32 0, %v2566
      %v2568 = vrot.slane %v2560, %v2567
      %2569 = vst [vmem:[%s584] sm:$0xff] %v2568
      %p2570 = scmp.lt.s32.totalorder %s29, 1
      %s2571 = scalar_select %p2570, %s29, 1
      %s2572 = smul.addr %s2571, 8
      %s2573 = scalar_lea.vmem %s18, %s2572
      // Predicated region
      $region93: #{bert_model_forward.1} parent=91 // pred_check
        %p2574 = pneg %p435
      $region94: #{bert_model_forward.1} parent=91 // pred_check_branch
        %2576 = sbr.rel (%p2574) target = $region96
      $region95: #{bert_model_forward.1} parent=91 // pred_region
        _
      $region96: #{bert_model_forward.1} parent=91 // pred_fallthru
        _
    $region92: #{bert_model_forward.1} parent=5 // pred_fallthru
      _
    %p2577 = scmp.le.s32.totalorder 2, %s24
    // Predicated region
    $region97: #{bert_model_forward.1} parent=5 // pred_check
      %p2578 = pneg %p2577
    $region98: #{bert_model_forward.1} parent=5 // pred_check_branch
      %2580 = sbr.rel (%p2578) target = $region100
    $region99: #{bert_model_forward.1} parent=5 // pred_region
      %s2581 = ssub.s32 %s24, 2
      // Predicated region
      $region101: #{bert_model_forward.1} parent=99 // pred_check
        %p2582 = pneg %p441
      $region102: #{bert_model_forward.1} parent=99 // pred_check_branch
        %2584 = sbr.rel (%p2582) target = $region104
      $region103: #{bert_model_forward.1} parent=99 // pred_region
        %p2585 = scmp.lt.s32.totalorder %s30, 1
        %s2586 = scalar_select %p2585, %s30, 1
        %s2587 = smul.addr %s2586, 8
        %s2588 = scalar_lea.vmem %s18, %s2587
      $region104: #{bert_model_forward.1} parent=99 // pred_fallthru
        _
    $region100: #{bert_model_forward.1} parent=5 // pred_fallthru
      _
  $region6: #{bert_model_forward.1} parent=0 // loop_footer
    %s28 = sadd.s32 1, %s24
  $region7: #{bert_model_forward.1} parent=0 // loop_footer_branch
    %23 = sbr.rel target = $region3
  $region8: #{bert_model_forward.1} parent=0 // loop_exit
    _

</llo_original>
